<compile_context>
chip_gen: v6e
topology: v6e:2x2x1
jax: 0.10.0
libtpu: 0.0.40
codegen_flags: <defaults>
</compile_context>

<pallas_src>
import functools

import jax
import jax.numpy as jnp
from jax.experimental import pallas as pl
from jax.experimental.pallas import tpu as pltpu


def _disc_res3_kernel(tgt_ref, x_ref, w1_ref, w2_ref, w3_ref, out_ref, acc_ref,
                      *, hw, tile_hw, mask_needed):
    t = pl.program_id(1)

    @pl.when(t == 0)
    def _init():
        acc_ref[...] = jnp.zeros_like(acc_ref)

    # ---- reducer body on one spatial tile (channel-mixing matmuls) --------
    # Cast the f32 tile to bf16 in-VMEM (full-rate MXU feed); the f32 input
    # never takes a second trip through HBM.
    x_t = x_ref[0].astype(jnp.bfloat16)                        # (Cin, tile_hw)
    # Conv2d(512,512,1x1,bias=False) + ReLU   (MXU, f32 accumulation)
    h1 = jnp.dot(w1_ref[...], x_t, preferred_element_type=jnp.float32)
    h1 = jnp.maximum(h1, 0.0).astype(jnp.bfloat16)
    # Conv2d(512,256,1x1,bias=False) + ReLU
    h2 = jnp.dot(w2_ref[...], h1, preferred_element_type=jnp.float32)
    h2 = jnp.maximum(h2, 0.0)                                  # (Cmid, tile_hw) f32

    if mask_needed:
        # Zero the out-of-range spatial columns of the ragged last tile.
        # Columns are independent under 1x1 convs, so padding garbage never
        # contaminates valid columns and masking h2 is sufficient.
        col = jax.lax.broadcasted_iota(jnp.int32, h2.shape, 1) + t * tile_hw
        h2 = jnp.where(col < hw, h2, 0.0)

    # Per-channel spatial sum (AdaptiveAvgPool2d numerator).  XLU lane-reduce:
    # off the critical MXU / DMA paths.
    acc_ref[...] += jnp.sum(h2, axis=-1, keepdims=True)        # (Cmid, 1) f32

    # ---- head + sigmoid focal loss, once per sample (last spatial tile) ---
    @pl.when(t == pl.num_programs(1) - 1)
    def _finalize():
        pooled = acc_ref[...] * jnp.float32(1.0 / hw)          # AdaptiveAvgPool2d((1,1))
        # Conv2d(256,1,1x1,bias=False): weight . pooled  (tiny sublane reduce)
        logit = jnp.sum(w3_ref[...] * pooled, keepdims=True)   # (1, 1) f32

        tgt = tgt_ref[0].astype(jnp.float32)                   # 0.0 source / 1.0 target
        p = jax.nn.sigmoid(logit)
        # numerically stable BCE-with-logits: max(x,0) - x*t + log1p(exp(-|x|))
        ce = (jnp.maximum(logit, 0.0) - logit * tgt
              + jnp.log1p(jnp.exp(-jnp.abs(logit))))
        p_t = p * tgt + (1.0 - p) * (1.0 - tgt)
        alpha_t = 0.25 * tgt + 0.75 * (1.0 - tgt)
        one_minus_pt = 1.0 - p_t
        out_ref[0] = alpha_t * ce * one_minus_pt * one_minus_pt  # focal, gamma=2


def init_params(key):
    """Conv weights with normal(0, 0.01) init, matching the module __init__."""
    k1, k2, k3 = jax.random.split(key, 3)
    w1 = 0.01 * jax.random.normal(k1, (512, 512), jnp.float32)   # Conv2d(512,512,1,1)
    w2 = 0.01 * jax.random.normal(k2, (256, 512), jnp.float32)   # Conv2d(512,256,1,1)
    w3 = 0.01 * jax.random.normal(k3, (1, 256), jnp.float32)     # Conv2d(256,1,1,1)
    return dict(w_conv1=w1, w_conv2=w2, w_conv3=w3)


def discriminator_res3_loss(x, params, target_domain=False, alpha=1.0):
    """Forward pass of DiscriminatorRes3 -> scalar focal loss."""
    del alpha  # GradReverse is identity in the forward pass; alpha only scales grads.
    n, c_in, h, w = x.shape
    assert c_in == 512, "DiscriminatorRes3 is hard-wired to 512 input channels"
    c_mid = 256
    hw = h * w
    lane = 128

    # Free reshape of contiguous NCHW: channels on sublanes, H*W on lanes.
    x_rows = x.reshape(n, c_in, hw)                              # stays f32 in HBM
    # Weights are tiny; pre-cast once in the wrapper so the kernel never
    # re-casts them per grid step.
    w1 = params["w_conv1"].astype(jnp.bfloat16)                  # (512, 512)
    w2 = params["w_conv2"].astype(jnp.bfloat16)                  # (256, 512)
    w3 = params["w_conv3"].reshape(c_mid, 1).astype(jnp.float32)  # (256, 1)

    # Spatial tiling: largest 128-lane-aligned tile up to 2048 (amortizes the
    # ~0.35us per-grid-step overhead while staying well inside scoped VMEM);
    # ragged last tiles are masked so pipelining survives odd H*W.
    if hw >= lane:
        tile_hw = min(2048, (hw // lane) * lane)
    else:
        tile_hw = hw                                             # full-extent block
    num_t = pl.cdiv(hw, tile_hw)
    mask_needed = (num_t * tile_hw != hw)

    # SMEM scalar: one compilation serves both source and target domains.
    target = jnp.full((1,), 1 if target_domain else 0, dtype=jnp.int32)

    kernel = functools.partial(_disc_res3_kernel, hw=hw, tile_hw=tile_hw,
                               mask_needed=mask_needed)

    flops = n * hw * (2 * c_in * c_in + 2 * c_in * c_mid) + n * 2 * c_mid
    bytes_accessed = (n * c_in * hw * 4                          # f32 activations
                      + c_in * c_in * 2 + c_mid * c_in * 2 + c_mid * 4
                      + n * 4)

    per_sample = pl.pallas_call(
        kernel,
        out_shape=jax.ShapeDtypeStruct((n, 1, 1), jnp.float32),
        grid_spec=pltpu.PrefetchScalarGridSpec(
            num_scalar_prefetch=1,
            grid=(n, num_t),
            in_specs=[
                pl.BlockSpec((1, c_in, tile_hw), lambda i, s, tgt: (i, 0, s)),
                pl.BlockSpec((c_in, c_in), lambda i, s, tgt: (0, 0)),
                pl.BlockSpec((c_mid, c_in), lambda i, s, tgt: (0, 0)),
                pl.BlockSpec((c_mid, 1), lambda i, s, tgt: (0, 0)),
            ],
            out_specs=pl.BlockSpec((1, 1, 1), lambda i, s, tgt: (i, 0, 0)),
            scratch_shapes=[pltpu.VMEM((c_mid, 1), jnp.float32)],
        ),
        compiler_params=pltpu.CompilerParams(
            dimension_semantics=("parallel", "arbitrary"),
            vmem_limit_bytes=32 * 1024 * 1024,
        ),
        cost_estimate=pl.CostEstimate(
            flops=flops, transcendentals=8 * n, bytes_accessed=bytes_accessed),
    )(target, x_rows, w1, w2, w3)

    # reduction='mean' over the flattened (N, 1) logits' losses == mean over N.
    return jnp.mean(per_sample)


if __name__ == "__main__":
    key = jax.random.PRNGKey(0)
    pkey, xkey = jax.random.split(key)

    params = init_params(pkey)

    # Small input consistent with the module: NCHW, N=2, C=512 (fixed by the
    # Conv2d(512, ...) layers), H=W=16.
    x = jax.random.normal(xkey, (2, 512, 16, 16), jnp.float32)

    loss_src = discriminator_res3_loss(x, params, target_domain=False)
    loss_tgt = discriminator_res3_loss(x, params, target_domain=True)
    jax.block_until_ready((loss_src, loss_tgt))

    print("KERNEL_OK")
</pallas_src>

<mosaic_0001>
module attributes {stable_mosaic.version = 11 : i64} {
  func.func @_disc_res3_kernel(%arg0: i32, %arg1: i32, %arg2: memref<1xi32, #tpu.memory_space<smem>>, %arg3: memref<1x512x256xf32, #tpu.memory_space<vmem>>, %arg4: memref<512x512xbf16, #tpu.memory_space<vmem>>, %arg5: memref<256x512xbf16, #tpu.memory_space<vmem>>, %arg6: memref<256x1xf32, #tpu.memory_space<vmem>>, %arg7: memref<1x1x1xf32, #tpu.memory_space<vmem>>, %arg8: memref<256x1xf32, #tpu.memory_space<vmem>>) attributes {dimension_semantics = [#tpu.dimension_semantics<parallel>, #tpu.dimension_semantics<arbitrary>], iteration_bounds = array<i64: 2, 1>, scalar_prefetch = 1 : i64, scratch_operands = 1 : i64, tpu.core_type = #tpu.core_type<tc>, window_params = [{transform_indices = @transform_0, window_bounds = array<i64: 1, 512, 256>}, {pipeline_mode = #tpu.pipeline_mode<synchronous>, transform_indices = @transform_1, window_bounds = array<i64: 512, 512>}, {pipeline_mode = #tpu.pipeline_mode<synchronous>, transform_indices = @transform_2, window_bounds = array<i64: 256, 512>}, {pipeline_mode = #tpu.pipeline_mode<synchronous>, transform_indices = @transform_3, window_bounds = array<i64: 256, 1>}, {transform_indices = @transform_4, window_bounds = array<i64: 1, 1, 1>}]} {
    %c0_i32 = arith.constant 0 : i32
    %0 = arith.cmpi eq, %arg1, %c0_i32 : i32
    %1 = arith.extui %0 : i1 to i32
    %c0_i32_0 = arith.constant 0 : i32
    %2 = arith.cmpi ne, %1, %c0_i32_0 : i32
    scf.if %2 {
      %cst_17 = arith.constant 0.000000e+00 : f32
      %23 = vector.broadcast %cst_17 : f32 to vector<256x1xf32>
      %c0_18 = arith.constant 0 : index
      %c0_19 = arith.constant 0 : index
      %24 = vector.load %arg8[%c0_18, %c0_19] : memref<256x1xf32, #tpu.memory_space<vmem>>, vector<256x1xf32>
      tpu.vector_store %arg8[%c0_18, %c0_19], %23 {strides = array<i32>} : memref<256x1xf32, #tpu.memory_space<vmem>>, vector<256x1xf32>,
    } else {
    }
    %c0 = arith.constant 0 : index
    %c0_1 = arith.constant 0 : index
    %c0_2 = arith.constant 0 : index
    %3 = vector.load %arg3[%c0, %c0_1, %c0_2] : memref<1x512x256xf32, #tpu.memory_space<vmem>>, vector<1x512x256xf32>
    %4 = vector.shape_cast %3 : vector<1x512x256xf32> to vector<512x256xf32>
    %5 = arith.truncf %4 : vector<512x256xf32> to vector<512x256xbf16>
    %c0_3 = arith.constant 0 : index
    %c0_4 = arith.constant 0 : index
    %6 = vector.load %arg4[%c0_3, %c0_4] : memref<512x512xbf16, #tpu.memory_space<vmem>>, vector<512x512xbf16>
    %cst = arith.constant dense<0.000000e+00> : vector<512x256xf32>
    %7 = tpu.matmul %6, %5, %cst {dimension_numbers = #tpu.dot_dimension_numbers<[1], [0], [0], [1], [0, 0, 1, 1], [], []>} : vector<512x512xbf16>, vector<512x256xbf16>, vector<512x256xf32> -> vector<512x256xf32>
    %cst_5 = arith.constant 0.000000e+00 : f32
    %8 = vector.broadcast %cst_5 : f32 to vector<512x256xf32>
    %9 = arith.maximumf %7, %8 : vector<512x256xf32>
    %10 = arith.truncf %9 : vector<512x256xf32> to vector<512x256xbf16>
    %c0_6 = arith.constant 0 : index
    %c0_7 = arith.constant 0 : index
    %11 = vector.load %arg5[%c0_6, %c0_7] : memref<256x512xbf16, #tpu.memory_space<vmem>>, vector<256x512xbf16>
    %cst_8 = arith.constant dense<0.000000e+00> : vector<256x256xf32>
    %12 = tpu.matmul %11, %10, %cst_8 {dimension_numbers = #tpu.dot_dimension_numbers<[1], [0], [0], [1], [0, 0, 1, 1], [], []>} : vector<256x512xbf16>, vector<512x256xbf16>, vector<256x256xf32> -> vector<256x256xf32>
    %cst_9 = arith.constant 0.000000e+00 : f32
    %13 = vector.broadcast %cst_9 : f32 to vector<256x256xf32>
    %14 = arith.maximumf %12, %13 : vector<256x256xf32>
    %c0_10 = arith.constant 0 : index
    %c0_11 = arith.constant 0 : index
    %15 = vector.load %arg8[%c0_10, %c0_11] : memref<256x1xf32, #tpu.memory_space<vmem>>, vector<256x1xf32>
    %cst_12 = arith.constant dense<0.000000e+00> : vector<256xf32>
    %16 = vector.multi_reduction <add>, %14, %cst_12 [1] : vector<256x256xf32> to vector<256xf32>
    %17 = vector.shape_cast %16 : vector<256xf32> to vector<256x1xf32>
    %18 = arith.addf %15, %17 : vector<256x1xf32>
    %c0_13 = arith.constant 0 : index
    %c0_14 = arith.constant 0 : index
    %19 = vector.load %arg8[%c0_13, %c0_14] : memref<256x1xf32, #tpu.memory_space<vmem>>, vector<256x1xf32>
    tpu.vector_store %arg8[%c0_13, %c0_14], %18 {strides = array<i32>} : memref<256x1xf32, #tpu.memory_space<vmem>>, vector<256x1xf32>,
    %c0_i32_15 = arith.constant 0 : i32
    %20 = arith.cmpi eq, %arg1, %c0_i32_15 : i32
    %21 = arith.extui %20 : i1 to i32
    %c0_i32_16 = arith.constant 0 : i32
    %22 = arith.cmpi ne, %21, %c0_i32_16 : i32
    scf.if %22 {
      %c0_17 = arith.constant 0 : index
      %c0_18 = arith.constant 0 : index
      %23 = vector.load %arg8[%c0_17, %c0_18] : memref<256x1xf32, #tpu.memory_space<vmem>>, vector<256x1xf32>
      %cst_19 = arith.constant 3.906250e-03 : f32
      %24 = vector.broadcast %cst_19 : f32 to vector<256x1xf32>
      %25 = arith.mulf %23, %24 : vector<256x1xf32>
      %c0_20 = arith.constant 0 : index
      %c0_21 = arith.constant 0 : index
      %26 = vector.load %arg6[%c0_20, %c0_21] : memref<256x1xf32, #tpu.memory_space<vmem>>, vector<256x1xf32>
      %27 = arith.mulf %26, %25 : vector<256x1xf32>
      %28 = vector.shape_cast %27 : vector<256x1xf32> to vector<1x256x1xf32>
      %cst_22 = arith.constant dense<0.000000e+00> : vector<1xf32>
      %29 = vector.multi_reduction <add>, %28, %cst_22 [1, 2] : vector<1x256x1xf32> to vector<1xf32>
      %30 = vector.shape_cast %29 : vector<1xf32> to vector<1x1x1xf32>
      %31 = vector.extract %30[0, 0, 0] : f32 from vector<1x1x1xf32>
      %32 = vector.broadcast %31 : f32 to vector<1x1xf32>
      %c0_23 = arith.constant 0 : index
      %33 = memref.load %arg2[%c0_23] : memref<1xi32, #tpu.memory_space<smem>>
      %34 = arith.sitofp %33 : i32 to f32
      %35 = arith.negf %32 : vector<1x1xf32>
      %36 = math.exp %35 : vector<1x1xf32>
      %cst_24 = arith.constant 1.000000e+00 : f32
      %37 = vector.broadcast %cst_24 : f32 to vector<1x1xf32>
      %38 = arith.addf %37, %36 : vector<1x1xf32>
      %39 = arith.divf %37, %38 : vector<1x1xf32>
      %cst_25 = arith.constant 0.000000e+00 : f32
      %40 = vector.broadcast %cst_25 : f32 to vector<1x1xf32>
      %41 = arith.maximumf %32, %40 : vector<1x1xf32>
      %42 = vector.broadcast %34 : f32 to vector<1x1xf32>
      %43 = arith.mulf %32, %42 : vector<1x1xf32>
      %44 = arith.subf %41, %43 : vector<1x1xf32>
      %45 = math.absf %32 : vector<1x1xf32>
      %cst_26 = arith.constant 0.000000e+00 : f32
      %46 = vector.broadcast %cst_26 : f32 to vector<1x1xf32>
      %47 = arith.subf %46, %45 : vector<1x1xf32>
      %48 = math.exp %47 : vector<1x1xf32>
      %49 = math.log1p %48 : vector<1x1xf32>
      %50 = arith.addf %44, %49 : vector<1x1xf32>
      %51 = vector.broadcast %34 : f32 to vector<1x1xf32>
      %52 = arith.mulf %39, %51 : vector<1x1xf32>
      %cst_27 = arith.constant 1.000000e+00 : f32
      %53 = vector.broadcast %cst_27 : f32 to vector<1x1xf32>
      %54 = arith.subf %53, %39 : vector<1x1xf32>
      %cst_28 = arith.constant 1.000000e+00 : f32
      %55 = arith.subf %cst_28, %34 : f32
      %56 = vector.broadcast %55 : f32 to vector<1x1xf32>
      %57 = arith.mulf %54, %56 : vector<1x1xf32>
      %58 = arith.addf %52, %57 : vector<1x1xf32>
      %cst_29 = arith.constant 2.500000e-01 : f32
      %59 = arith.mulf %cst_29, %34 : f32
      %cst_30 = arith.constant 1.000000e+00 : f32
      %60 = arith.subf %cst_30, %34 : f32
      %cst_31 = arith.constant 7.500000e-01 : f32
      %61 = arith.mulf %cst_31, %60 : f32
      %62 = arith.addf %59, %61 : f32
      %cst_32 = arith.constant 1.000000e+00 : f32
      %63 = vector.broadcast %cst_32 : f32 to vector<1x1xf32>
      %64 = arith.subf %63, %58 : vector<1x1xf32>
      %65 = vector.broadcast %62 : f32 to vector<1x1xf32>
      %66 = arith.mulf %65, %50 : vector<1x1xf32>
      %67 = arith.mulf %66, %64 : vector<1x1xf32>
      %68 = arith.mulf %67, %64 : vector<1x1xf32>
      %c0_33 = arith.constant 0 : index
      %c0_34 = arith.constant 0 : index
      %c0_35 = arith.constant 0 : index
      %69 = vector.load %arg7[%c0_33, %c0_34, %c0_35] : memref<1x1x1xf32, #tpu.memory_space<vmem>>, vector<1x1x1xf32>
      %70 = vector.shape_cast %69 : vector<1x1x1xf32> to vector<1x1xf32>
      %71 = vector.shape_cast %68 : vector<1x1xf32> to vector<1x1x1xf32>
      tpu.vector_store %arg7[%c0_33, %c0_34, %c0_35], %71 {strides = array<i32>} : memref<1x1x1xf32, #tpu.memory_space<vmem>>, vector<1x1x1xf32>,
    } else {
    }
    return
  }
  func.func @transform_0(%arg0: i32, %arg1: i32, %arg2: memref<1xi32, #tpu.memory_space<smem>>) -> (i32, i32, i32) {
    %c0_i32 = arith.constant 0 : i32
    %c0_i32_0 = arith.constant 0 : i32
    return %arg0, %c0_i32, %arg1 : i32, i32, i32
  }
  func.func @transform_1(%arg0: i32, %arg1: i32, %arg2: memref<1xi32, #tpu.memory_space<smem>>) -> (i32, i32) {
    %c0_i32 = arith.constant 0 : i32
    %c0_i32_0 = arith.constant 0 : i32
    %c0_i32_1 = arith.constant 0 : i32
    return %c0_i32, %c0_i32_0 : i32, i32
  }
  func.func @transform_2(%arg0: i32, %arg1: i32, %arg2: memref<1xi32, #tpu.memory_space<smem>>) -> (i32, i32) {
    %c0_i32 = arith.constant 0 : i32
    %c0_i32_0 = arith.constant 0 : i32
    %c0_i32_1 = arith.constant 0 : i32
    return %c0_i32, %c0_i32_0 : i32, i32
  }
  func.func @transform_3(%arg0: i32, %arg1: i32, %arg2: memref<1xi32, #tpu.memory_space<smem>>) -> (i32, i32) {
    %c0_i32 = arith.constant 0 : i32
    %c0_i32_0 = arith.constant 0 : i32
    %c0_i32_1 = arith.constant 0 : i32
    return %c0_i32, %c0_i32_0 : i32, i32
  }
  func.func @transform_4(%arg0: i32, %arg1: i32, %arg2: memref<1xi32, #tpu.memory_space<smem>>) -> (i32, i32, i32) {
    %c0_i32 = arith.constant 0 : i32
    %c0_i32_0 = arith.constant 0 : i32
    %c0_i32_1 = arith.constant 0 : i32
    return %arg0, %c0_i32, %c0_i32_0 : i32, i32, i32
  }
}

</mosaic_0001>

<llo_original>
// kernel: tpu_custom_call.1
$region0: #{tpu_custom_call.1}
  #allocation0 [shape = 'u32[]', space=smem, size = 0x4, offset = 0x4, fixed_abs, tag = 'smem constant byte address 0x4 - core index']
  #allocation1 [shape = 'u32[144,128]{1,0:T(1,128)}', space=vmem, size = 0x12000, scoped, tag = 'internal scratch']
  #allocation2 [shape = 'f32[256,1]{1,0:T(8,128)}', space=vmem, size = 0x20000, scoped, tag = 'scratch operand']
  #allocation3 [shape = 's32[1]{0}', space=sflag, size = 0x4, scoped, tag = 'scoped memory for tpu_custom_call.1']
  #allocation4 [shape = 's32[1]{0:T(128)S(6)}', space=smem, size = 0x200, scoped, tag = 'prefetched SMEM operand 0']
  %s0 = inlined_call_operand.<no memory space> [shape: s32[1], index: 0, kind: input, shape index: {}]
  %s1 = inlined_call_operand.hbm [shape: f32[2,512,256], index: 1, kind: input, shape index: {}]
  %s2 = inlined_call_operand.hbm [shape: bf16[512,512], index: 2, kind: input, shape index: {}]
  %s3 = inlined_call_operand.hbm [shape: bf16[256,512], index: 3, kind: input, shape index: {}]
  %s4 = inlined_call_operand.vmem [shape: f32[256,1], index: 4, kind: input, shape index: {}]
  %s5 = inlined_call_operand.vmem [shape: f32[2,1,1], index: 5, kind: output, shape index: {}]
  %s6 = sld [smem:[#allocation0]]
  $region69: #{tpu_custom_call.1} parent=0
    _
  %s8 = ssub.s32 1, %s6
  %s9 = scalar_select 0, %s8, %s6
  %10 = sst [smem:[#allocation4]] %s0
  $region1: #{tpu_custom_call.1} parent=0
    #allocation5 [shape = 'u8[1048576]{0}', space=vmem, size = 0x100000, scoped, tag = 'input window, operand 1']
    #allocation6 [shape = 's32[2]{0}', space=sflag, size = 0x8, scoped, tag = 'scoped memory for tpu_custom_call.1']
    #allocation7 [shape = 'u8[524288]{0}', space=vmem, size = 0x80000, scoped, tag = 'input window, operand 2, single buffered']
    #allocation8 [shape = 's32[1]{0}', space=sflag, size = 0x4, scoped, tag = 'scoped memory for tpu_custom_call.1']
    #allocation9 [shape = 'u8[262144]{0}', space=vmem, size = 0x40000, scoped, tag = 'input window, operand 3, single buffered']
    %11 = vsyncpa [#allocation6], 0
    %s12 = scalar_lea.sflag [#allocation6], 1
    %13 = vsyncpa %s12, 0
    %14 = vsyncpa [#allocation8], 0
    loop: start=0, step=1, limit=4
    $region2: #{tpu_custom_call.1} parent=1 // loop_pre_header
      _
    $region3: #{tpu_custom_call.1} parent=1 // loop_header
      %s16 = sphi 0, %s20
      %p17 = scmp.ge.s32.totalorder %s16, 4
      %s23 = sphi 0, %s35
      %s24 = sphi 0, %s31
      %s25 = sphi 0, %s23
      %s26 = sphi 0, %s24
      %s27 = sphi 0, %s25
      %s28 = sphi 0, %s26
      %s40 = sphi 0, %s42
      %s43 = sphi 0, %s40
      %s44 = sphi 0, %s43
      %s60 = sphi 0, %s44
      %s64 = sphi 0, %s64
      %s66 = sphi 0, %s64
      %s67 = sphi 0, %s66
      %s81 = sphi 0, %s67
      %s85 = sphi 0, %s85
      %s87 = sphi 0, %s85
      %s88 = sphi 0, %s87
      %s102 = sphi 0, %s88
      %s106 = sphi 0, %s106
      %s108 = sphi 0, %s106
      %s109 = sphi 0, %s108
      %s123 = sphi 0, %s109
      %s129 = sphi 0, %s131
      %s132 = sphi 0, %s129
      %s133 = sphi 0, %s132
      %s149 = sphi 0, %s133
    $region4: #{tpu_custom_call.1} parent=1 // loop_header_branch
      %19 = sbr.rel (%p17) target = $region8
    $region5: #{tpu_custom_call.1} parent=1 // loop_body
      %s21 = ssub.s32 %s16, 1
      %s22 = ssub.s32 %s16, 2
      %s29 = sadd.s32 1, %s24
      %p30 = scmp.ge.s32.totalorder %s29, 1
      %s31 = scalar_select %p30, 0, %s29
      %s32 = sadd.s32 1, %s23
      %s33 = scalar_select %p30, %s32, %s23
      %p34 = scmp.ge.s32.totalorder %s33, 2
      %s35 = scalar_select %p34, 0, %s33
      %s36 = ssub.s32 %s23, %s35
      %s37 = ssub.s32 %s24, %s31
      %s38 = sor.u32 %s36, %s37
      %p39 = scmp.eq.s32.totalorder %s38, 0
      %s41 = sadd.s32 %s40, 1
      %s42 = scalar_select %p39, %s40, %s41
      %p45 = pneg %p39
      %p46 = scmp.eq.s32.totalorder %s16, 1
      %p47 = por %p45, %p46
      %p48 = scmp.ne.s32.totalorder %s40, %s43
      %p49 = scmp.eq.s32.totalorder %s16, 0
      %p50 = por %p48, %p49
      %p51 = scmp.ne.s32.totalorder %s40, %s43
      %p52 = scmp.eq.s32.totalorder %s21, 1
      %p53 = por %p51, %p52
      %p54 = scmp.ne.s32.totalorder %s43, %s44
      %p55 = scmp.eq.s32.totalorder %s21, 0
      %p56 = por %p54, %p55
      %p57 = scmp.ne.s32.totalorder %s43, %s44
      %p58 = scmp.eq.s32.totalorder %s22, 1
      %p59 = por %p57, %p58
      %p61 = scmp.ne.s32.totalorder %s44, %s60
      %p62 = scmp.eq.s32.totalorder %s22, 0
      %p63 = por %p61, %p62
      %s65 = sadd.s32 %s64, 1
      %p68 = scmp.eq.s32.totalorder %s16, 1
      %p69 = scmp.ne.s32.totalorder %s64, %s66
      %p70 = scmp.eq.s32.totalorder %s16, 0
      %p71 = por %p69, %p70
      %p72 = scmp.ne.s32.totalorder %s64, %s66
      %p73 = scmp.eq.s32.totalorder %s21, 1
      %p74 = por %p72, %p73
      %p75 = scmp.ne.s32.totalorder %s66, %s67
      %p76 = scmp.eq.s32.totalorder %s21, 0
      %p77 = por %p75, %p76
      %p78 = scmp.ne.s32.totalorder %s66, %s67
      %p79 = scmp.eq.s32.totalorder %s22, 1
      %p80 = por %p78, %p79
      %p82 = scmp.ne.s32.totalorder %s67, %s81
      %p83 = scmp.eq.s32.totalorder %s22, 0
      %p84 = por %p82, %p83
      %s86 = sadd.s32 %s85, 1
      %p89 = scmp.eq.s32.totalorder %s16, 1
      %p90 = scmp.ne.s32.totalorder %s85, %s87
      %p91 = scmp.eq.s32.totalorder %s16, 0
      %p92 = por %p90, %p91
      %p93 = scmp.ne.s32.totalorder %s85, %s87
      %p94 = scmp.eq.s32.totalorder %s21, 1
      %p95 = por %p93, %p94
      %p96 = scmp.ne.s32.totalorder %s87, %s88
      %p97 = scmp.eq.s32.totalorder %s21, 0
      %p98 = por %p96, %p97
      %p99 = scmp.ne.s32.totalorder %s87, %s88
      %p100 = scmp.eq.s32.totalorder %s22, 1
      %p101 = por %p99, %p100
      %p103 = scmp.ne.s32.totalorder %s88, %s102
      %p104 = scmp.eq.s32.totalorder %s22, 0
      %p105 = por %p103, %p104
      %s107 = sadd.s32 %s106, 1
      %p110 = scmp.eq.s32.totalorder %s16, 1
      %p111 = scmp.ne.s32.totalorder %s106, %s108
      %p112 = scmp.eq.s32.totalorder %s16, 0
      %p113 = por %p111, %p112
      %p114 = scmp.ne.s32.totalorder %s106, %s108
      %p115 = scmp.eq.s32.totalorder %s21, 1
      %p116 = por %p114, %p115
      %p117 = scmp.ne.s32.totalorder %s108, %s109
      %p118 = scmp.eq.s32.totalorder %s21, 0
      %p119 = por %p117, %p118
      %p120 = scmp.ne.s32.totalorder %s108, %s109
      %p121 = scmp.eq.s32.totalorder %s22, 1
      %p122 = por %p120, %p121
      %p124 = scmp.ne.s32.totalorder %s109, %s123
      %p125 = scmp.eq.s32.totalorder %s22, 0
      %p126 = por %p124, %p125
      %s127 = ssub.s32 %s23, %s35
      %p128 = scmp.eq.s32.totalorder %s127, 0
      %s130 = sadd.s32 %s129, 1
      %s131 = scalar_select %p128, %s129, %s130
      %p134 = pneg %p128
      %p135 = scmp.eq.s32.totalorder %s16, 1
      %p136 = por %p134, %p135
      %p137 = scmp.ne.s32.totalorder %s129, %s132
      %p138 = scmp.eq.s32.totalorder %s16, 0
      %p139 = por %p137, %p138
      %p140 = scmp.ne.s32.totalorder %s129, %s132
      %p141 = scmp.eq.s32.totalorder %s21, 1
      %p142 = por %p140, %p141
      %p143 = scmp.ne.s32.totalorder %s132, %s133
      %p144 = scmp.eq.s32.totalorder %s21, 0
      %p145 = por %p143, %p144
      %p146 = scmp.ne.s32.totalorder %s132, %s133
      %p147 = scmp.eq.s32.totalorder %s22, 1
      %p148 = por %p146, %p147
      %p150 = scmp.ne.s32.totalorder %s133, %s149
      %p151 = scmp.eq.s32.totalorder %s22, 0
      %p152 = por %p150, %p151
      %p153 = scmp.le.s32.totalorder 1, %s16
      %p154 = scmp.lt.s32.totalorder %s16, 3
      %p155 = pnand %p153, %p154
      %p156 = pneg %p155
      // Predicated region
      $region9: #{tpu_custom_call.1} parent=5 // pred_check
        _
      $region10: #{tpu_custom_call.1} parent=5 // pred_check_branch
        %158 = sbr.rel (%p155) target = $region12
      $region11: #{tpu_custom_call.1} parent=5 // pred_region
        %s159 = ssub.s32 %s16, 1
        // Predicated region
        $region13: #{tpu_custom_call.1} parent=11 // pred_check
          %p160 = pneg %p77
        $region14: #{tpu_custom_call.1} parent=11 // pred_check_branch
          %162 = sbr.rel (%p160) target = $region16
        $region15: #{tpu_custom_call.1} parent=11 // pred_region
          %s164 = ssub.s32 16384, 16384
          %165 = vsyncadd [#allocation8], %s164
          %s166 = sshll.u32 [#allocation7], 4
          %s167 = int_to_ptr.vmem [resolvable:$true] %s166
          %172 = dma.hbm_to_vmem [thread:$0]  %s2, 16384, %s167, [#allocation8], 256, 256, 16
        $region16: #{tpu_custom_call.1} parent=11 // pred_fallthru
          _
        // Predicated region
        $region17: #{tpu_custom_call.1} parent=11 // pred_check
          %p173 = pneg %p98
        $region18: #{tpu_custom_call.1} parent=11 // pred_check_branch
          %175 = sbr.rel (%p173) target = $region20
        $region19: #{tpu_custom_call.1} parent=11 // pred_region
          %s177 = ssub.s32 8192, 8192
          %178 = vsyncadd [#allocation8], %s177
          %s179 = sshll.u32 [#allocation9], 4
          %s180 = int_to_ptr.vmem [resolvable:$true] %s179
          %185 = dma.hbm_to_vmem [thread:$0]  %s3, 8192, %s180, [#allocation8], 256, 256, 16
        $region20: #{tpu_custom_call.1} parent=11 // pred_fallthru
          _
        // Predicated region
        $region21: #{tpu_custom_call.1} parent=11 // pred_check
          %p186 = pneg %p119
        $region22: #{tpu_custom_call.1} parent=11 // pred_check_branch
          %188 = sbr.rel (%p186) target = $region24
        $region23: #{tpu_custom_call.1} parent=11 // pred_region
          _
        $region24: #{tpu_custom_call.1} parent=11 // pred_fallthru
          _
      $region12: #{tpu_custom_call.1} parent=5 // pred_fallthru
        _
      %p189 = scmp.lt.s32.totalorder %s16, 2
      // Predicated region
      $region25: #{tpu_custom_call.1} parent=5 // pred_check
        %p190 = pneg %p189
      $region26: #{tpu_custom_call.1} parent=5 // pred_check_branch
        %192 = sbr.rel (%p190) target = $region28
      $region27: #{tpu_custom_call.1} parent=5 // pred_region
        // Predicated region
        $region29: #{tpu_custom_call.1} parent=27 // pred_check
          %p193 = pneg %p50
        $region30: #{tpu_custom_call.1} parent=27 // pred_check_branch
          %195 = sbr.rel (%p193) target = $region32
        $region31: #{tpu_custom_call.1} parent=27 // pred_region
          %s196 = sand.u32 %s40, 1
          %s197 = scalar_lea.sflag [#allocation6], %s196
          %s198 = sand.u32 %s40, 1
          %s199 = smul.addr %s198, 1024
          %s200 = scalar_lea.vmem [#allocation5], %s199
          %s201 = smul.u32 2, %s24
          %s203 = ssub.s32 16384, 16384
          %204 = vsyncadd %s197, %s203
          %s205 = smul.addr %s23, 128
          %s206 = sadd.s32 %s201, %s205
          %s207 = smul.addr %s206, 128
          %s208 = scalar_lea.hbm %s1, %s207
          %s209 = sshll.u32 %s200, 4
          %s210 = int_to_ptr.vmem [resolvable:$true] %s209
          %215 = dma.hbm_to_vmem [thread:$0]  %s208, 16384, %s210, %s197, 256, 256, 16
        $region32: #{tpu_custom_call.1} parent=27 // pred_fallthru
          _
      $region28: #{tpu_custom_call.1} parent=5 // pred_fallthru
        _
      %p216 = scmp.le.s32.totalorder 1, %s16
      %p217 = scmp.lt.s32.totalorder %s16, 3
      %p218 = pnand %p216, %p217
      %p219 = pneg %p218
      // Predicated region
      $region33: #{tpu_custom_call.1} parent=5 // pred_check
        _
      $region34: #{tpu_custom_call.1} parent=5 // pred_check_branch
        %221 = sbr.rel (%p218) target = $region36
      $region35: #{tpu_custom_call.1} parent=5 // pred_region
        %s222 = ssub.s32 %s16, 1
        %s223 = sand.u32 %s43, 1
        %s224 = scalar_lea.sflag [#allocation6], %s223
        %s225 = sand.u32 %s43, 1
        %s226 = smul.addr %s225, 1024
        %s227 = scalar_lea.vmem [#allocation5], %s226
        // Predicated region
        $region37: #{tpu_custom_call.1} parent=35 // pred_check
          %p228 = pneg %p56
        $region38: #{tpu_custom_call.1} parent=35 // pred_check_branch
          %230 = sbr.rel (%p228) target = $region40
        $region39: #{tpu_custom_call.1} parent=35 // pred_region
          %231 = dma.done %s224, 16384
        $region40: #{tpu_custom_call.1} parent=35 // pred_fallthru
          _
        // Predicated region
        $region41: #{tpu_custom_call.1} parent=35 // pred_check
          %p232 = pneg %p77
        $region42: #{tpu_custom_call.1} parent=35 // pred_check_branch
          %234 = sbr.rel (%p232) target = $region44
        $region43: #{tpu_custom_call.1} parent=35 // pred_region
          %235 = dma.done [#allocation8], 16384
        $region44: #{tpu_custom_call.1} parent=35 // pred_fallthru
          _
        // Predicated region
        $region45: #{tpu_custom_call.1} parent=35 // pred_check
          %p236 = pneg %p98
        $region46: #{tpu_custom_call.1} parent=35 // pred_check_branch
          %238 = sbr.rel (%p236) target = $region48
        $region47: #{tpu_custom_call.1} parent=35 // pred_region
          %239 = dma.done [#allocation8], 8192
        $region48: #{tpu_custom_call.1} parent=35 // pred_fallthru
          _
        %s240 = sand.u32 %s43, 1
        %s241 = scalar_lea.sflag [#allocation6], %s240
        %s242 = sand.u32 %s43, 1
        %s243 = smul.addr %s242, 1024
        %s244 = scalar_lea.vmem [#allocation5], %s243
        %p245 = pneg %p56
        %p246 = pneg %p53
        %p247 = pneg %p77
        %p248 = pneg %p74
        %p249 = pneg %p98
        %p250 = pneg %p95
        %p251 = pneg %p119
        %p252 = pneg %p116
        %p253 = pneg %p145
        %p254 = pneg %p142
        %p255 = scmp.lt.s32.totalorder %s25, 1
        %s256 = scalar_select %p255, %s25, 1
        %s257 = scalar_lea.vmem %s5, %s256
        %s258 = smul.u32 2, %s26
        %p259 = scmp.lt.s32.totalorder %s25, 1
        %s260 = scalar_select %p259, %s25, 1
        %s261 = scalar_lea.vmem %s5, %s260
        %p262 = scmp.eq.s32.totalorder %s26, 0
        // Predicated region
        $region49: #{tpu_custom_call.1} parent=35 // pred_check
          %p263 = pneg %p262
        $region50: #{tpu_custom_call.1} parent=35 // pred_check_branch
          %265 = sbr.rel (%p263) target = $region52
        $region51: #{tpu_custom_call.1} parent=35 // pred_region
          %vm266 = vcmask 7168
          %267 = vst.msk [vmem:[#allocation2] sm:$0xff] %vm266, 0.0
          %268 = vst.msk [vmem:[#allocation2 + $0x8] sm:$0xff] %vm266, 0.0
          %269 = vst.msk [vmem:[#allocation2 + $0x10] sm:$0xff] %vm266, 0.0
          %270 = vst.msk [vmem:[#allocation2 + $0x18] sm:$0xff] %vm266, 0.0
          %271 = vst.msk [vmem:[#allocation2 + $0x20] sm:$0xff] %vm266, 0.0
          %272 = vst.msk [vmem:[#allocation2 + $0x28] sm:$0xff] %vm266, 0.0
          %273 = vst.msk [vmem:[#allocation2 + $0x30] sm:$0xff] %vm266, 0.0
          %274 = vst.msk [vmem:[#allocation2 + $0x38] sm:$0xff] %vm266, 0.0
          %275 = vst.msk [vmem:[#allocation2 + $0x40] sm:$0xff] %vm266, 0.0
          %276 = vst.msk [vmem:[#allocation2 + $0x48] sm:$0xff] %vm266, 0.0
          %277 = vst.msk [vmem:[#allocation2 + $0x50] sm:$0xff] %vm266, 0.0
          %278 = vst.msk [vmem:[#allocation2 + $0x58] sm:$0xff] %vm266, 0.0
          %279 = vst.msk [vmem:[#allocation2 + $0x60] sm:$0xff] %vm266, 0.0
          %280 = vst.msk [vmem:[#allocation2 + $0x68] sm:$0xff] %vm266, 0.0
          %281 = vst.msk [vmem:[#allocation2 + $0x70] sm:$0xff] %vm266, 0.0
          %282 = vst.msk [vmem:[#allocation2 + $0x78] sm:$0xff] %vm266, 0.0
          %283 = vst.msk [vmem:[#allocation2 + $0x80] sm:$0xff] %vm266, 0.0
          %284 = vst.msk [vmem:[#allocation2 + $0x88] sm:$0xff] %vm266, 0.0
          %285 = vst.msk [vmem:[#allocation2 + $0x90] sm:$0xff] %vm266, 0.0
          %286 = vst.msk [vmem:[#allocation2 + $0x98] sm:$0xff] %vm266, 0.0
          %287 = vst.msk [vmem:[#allocation2 + $0xa0] sm:$0xff] %vm266, 0.0
          %288 = vst.msk [vmem:[#allocation2 + $0xa8] sm:$0xff] %vm266, 0.0
          %289 = vst.msk [vmem:[#allocation2 + $0xb0] sm:$0xff] %vm266, 0.0
          %290 = vst.msk [vmem:[#allocation2 + $0xb8] sm:$0xff] %vm266, 0.0
          %291 = vst.msk [vmem:[#allocation2 + $0xc0] sm:$0xff] %vm266, 0.0
          %292 = vst.msk [vmem:[#allocation2 + $0xc8] sm:$0xff] %vm266, 0.0
          %293 = vst.msk [vmem:[#allocation2 + $0xd0] sm:$0xff] %vm266, 0.0
          %294 = vst.msk [vmem:[#allocation2 + $0xd8] sm:$0xff] %vm266, 0.0
          %295 = vst.msk [vmem:[#allocation2 + $0xe0] sm:$0xff] %vm266, 0.0
          %296 = vst.msk [vmem:[#allocation2 + $0xe8] sm:$0xff] %vm266, 0.0
          %297 = vst.msk [vmem:[#allocation2 + $0xf0] sm:$0xff] %vm266, 0.0
          %298 = vst.msk [vmem:[#allocation2 + $0xf8] sm:$0xff] %vm266, 0.0
        $region52: #{tpu_custom_call.1} parent=35 // pred_fallthru
          _
        %v299 = vld [vmem:[%s227] sm:$0xff]
        %v300 = vld [vmem:[%s227 + $0x8] sm:$0xff]
        %v301 = vld [vmem:[%s227 + $0x10] sm:$0xff]
        %v302 = vld [vmem:[%s227 + $0x18] sm:$0xff]
        %v303 = vld [vmem:[%s227 + $0x20] sm:$0xff]
        %v304 = vld [vmem:[%s227 + $0x28] sm:$0xff]
        %v305 = vld [vmem:[%s227 + $0x30] sm:$0xff]
        %v306 = vld [vmem:[%s227 + $0x38] sm:$0xff]
        %v307 = vld [vmem:[%s227 + $0x40] sm:$0xff]
        %v308 = vld [vmem:[%s227 + $0x48] sm:$0xff]
        %v309 = vld [vmem:[%s227 + $0x50] sm:$0xff]
        %v310 = vld [vmem:[%s227 + $0x58] sm:$0xff]
        %v311 = vld [vmem:[%s227 + $0x60] sm:$0xff]
        %v312 = vld [vmem:[%s227 + $0x68] sm:$0xff]
        %v313 = vld [vmem:[%s227 + $0x70] sm:$0xff]
        %v314 = vld [vmem:[%s227 + $0x78] sm:$0xff]
        %v315 = vld [vmem:[%s227 + $0x80] sm:$0xff]
        %v316 = vld [vmem:[%s227 + $0x88] sm:$0xff]
        %v317 = vld [vmem:[%s227 + $0x90] sm:$0xff]
        %v318 = vld [vmem:[%s227 + $0x98] sm:$0xff]
        %v319 = vld [vmem:[%s227 + $0xa0] sm:$0xff]
        %v320 = vld [vmem:[%s227 + $0xa8] sm:$0xff]
        %v321 = vld [vmem:[%s227 + $0xb0] sm:$0xff]
        %v322 = vld [vmem:[%s227 + $0xb8] sm:$0xff]
        %v323 = vld [vmem:[%s227 + $0xc0] sm:$0xff]
        %v324 = vld [vmem:[%s227 + $0xc8] sm:$0xff]
        %v325 = vld [vmem:[%s227 + $0xd0] sm:$0xff]
        %v326 = vld [vmem:[%s227 + $0xd8] sm:$0xff]
        %v327 = vld [vmem:[%s227 + $0xe0] sm:$0xff]
        %v328 = vld [vmem:[%s227 + $0xe8] sm:$0xff]
        %v329 = vld [vmem:[%s227 + $0xf0] sm:$0xff]
        %v330 = vld [vmem:[%s227 + $0xf8] sm:$0xff]
        %v331 = vld [vmem:[%s227 + $0x100] sm:$0xff]
        %v332 = vld [vmem:[%s227 + $0x108] sm:$0xff]
        %v333 = vld [vmem:[%s227 + $0x110] sm:$0xff]
        %v334 = vld [vmem:[%s227 + $0x118] sm:$0xff]
        %v335 = vld [vmem:[%s227 + $0x120] sm:$0xff]
        %v336 = vld [vmem:[%s227 + $0x128] sm:$0xff]
        %v337 = vld [vmem:[%s227 + $0x130] sm:$0xff]
        %v338 = vld [vmem:[%s227 + $0x138] sm:$0xff]
        %v339 = vld [vmem:[%s227 + $0x140] sm:$0xff]
        %v340 = vld [vmem:[%s227 + $0x148] sm:$0xff]
        %v341 = vld [vmem:[%s227 + $0x150] sm:$0xff]
        %v342 = vld [vmem:[%s227 + $0x158] sm:$0xff]
        %v343 = vld [vmem:[%s227 + $0x160] sm:$0xff]
        %v344 = vld [vmem:[%s227 + $0x168] sm:$0xff]
        %v345 = vld [vmem:[%s227 + $0x170] sm:$0xff]
        %v346 = vld [vmem:[%s227 + $0x178] sm:$0xff]
        %v347 = vld [vmem:[%s227 + $0x180] sm:$0xff]
        %v348 = vld [vmem:[%s227 + $0x188] sm:$0xff]
        %v349 = vld [vmem:[%s227 + $0x190] sm:$0xff]
        %v350 = vld [vmem:[%s227 + $0x198] sm:$0xff]
        %v351 = vld [vmem:[%s227 + $0x1a0] sm:$0xff]
        %v352 = vld [vmem:[%s227 + $0x1a8] sm:$0xff]
        %v353 = vld [vmem:[%s227 + $0x1b0] sm:$0xff]
        %v354 = vld [vmem:[%s227 + $0x1b8] sm:$0xff]
        %v355 = vld [vmem:[%s227 + $0x1c0] sm:$0xff]
        %v356 = vld [vmem:[%s227 + $0x1c8] sm:$0xff]
        %v357 = vld [vmem:[%s227 + $0x1d0] sm:$0xff]
        %v358 = vld [vmem:[%s227 + $0x1d8] sm:$0xff]
        %v359 = vld [vmem:[%s227 + $0x1e0] sm:$0xff]
        %v360 = vld [vmem:[%s227 + $0x1e8] sm:$0xff]
        %v361 = vld [vmem:[%s227 + $0x1f0] sm:$0xff]
        %v362 = vld [vmem:[%s227 + $0x1f8] sm:$0xff]
        %v363 = vld [vmem:[%s227 + $0x200] sm:$0xff]
        %v364 = vld [vmem:[%s227 + $0x208] sm:$0xff]
        %v365 = vld [vmem:[%s227 + $0x210] sm:$0xff]
        %v366 = vld [vmem:[%s227 + $0x218] sm:$0xff]
        %v367 = vld [vmem:[%s227 + $0x220] sm:$0xff]
        %v368 = vld [vmem:[%s227 + $0x228] sm:$0xff]
        %v369 = vld [vmem:[%s227 + $0x230] sm:$0xff]
        %v370 = vld [vmem:[%s227 + $0x238] sm:$0xff]
        %v371 = vld [vmem:[%s227 + $0x240] sm:$0xff]
        %v372 = vld [vmem:[%s227 + $0x248] sm:$0xff]
        %v373 = vld [vmem:[%s227 + $0x250] sm:$0xff]
        %v374 = vld [vmem:[%s227 + $0x258] sm:$0xff]
        %v375 = vld [vmem:[%s227 + $0x260] sm:$0xff]
        %v376 = vld [vmem:[%s227 + $0x268] sm:$0xff]
        %v377 = vld [vmem:[%s227 + $0x270] sm:$0xff]
        %v378 = vld [vmem:[%s227 + $0x278] sm:$0xff]
        %v379 = vld [vmem:[%s227 + $0x280] sm:$0xff]
        %v380 = vld [vmem:[%s227 + $0x288] sm:$0xff]
        %v381 = vld [vmem:[%s227 + $0x290] sm:$0xff]
        %v382 = vld [vmem:[%s227 + $0x298] sm:$0xff]
        %v383 = vld [vmem:[%s227 + $0x2a0] sm:$0xff]
        %v384 = vld [vmem:[%s227 + $0x2a8] sm:$0xff]
        %v385 = vld [vmem:[%s227 + $0x2b0] sm:$0xff]
        %v386 = vld [vmem:[%s227 + $0x2b8] sm:$0xff]
        %v387 = vld [vmem:[%s227 + $0x2c0] sm:$0xff]
        %v388 = vld [vmem:[%s227 + $0x2c8] sm:$0xff]
        %v389 = vld [vmem:[%s227 + $0x2d0] sm:$0xff]
        %v390 = vld [vmem:[%s227 + $0x2d8] sm:$0xff]
        %v391 = vld [vmem:[%s227 + $0x2e0] sm:$0xff]
        %v392 = vld [vmem:[%s227 + $0x2e8] sm:$0xff]
        %v393 = vld [vmem:[%s227 + $0x2f0] sm:$0xff]
        %v394 = vld [vmem:[%s227 + $0x2f8] sm:$0xff]
        %v395 = vld [vmem:[%s227 + $0x300] sm:$0xff]
        %v396 = vld [vmem:[%s227 + $0x308] sm:$0xff]
        %v397 = vld [vmem:[%s227 + $0x310] sm:$0xff]
        %v398 = vld [vmem:[%s227 + $0x318] sm:$0xff]
        %v399 = vld [vmem:[%s227 + $0x320] sm:$0xff]
        %v400 = vld [vmem:[%s227 + $0x328] sm:$0xff]
        %v401 = vld [vmem:[%s227 + $0x330] sm:$0xff]
        %v402 = vld [vmem:[%s227 + $0x338] sm:$0xff]
        %v403 = vld [vmem:[%s227 + $0x340] sm:$0xff]
        %v404 = vld [vmem:[%s227 + $0x348] sm:$0xff]
        %v405 = vld [vmem:[%s227 + $0x350] sm:$0xff]
        %v406 = vld [vmem:[%s227 + $0x358] sm:$0xff]
        %v407 = vld [vmem:[%s227 + $0x360] sm:$0xff]
        %v408 = vld [vmem:[%s227 + $0x368] sm:$0xff]
        %v409 = vld [vmem:[%s227 + $0x370] sm:$0xff]
        %v410 = vld [vmem:[%s227 + $0x378] sm:$0xff]
        %v411 = vld [vmem:[%s227 + $0x380] sm:$0xff]
        %v412 = vld [vmem:[%s227 + $0x388] sm:$0xff]
        %v413 = vld [vmem:[%s227 + $0x390] sm:$0xff]
        %v414 = vld [vmem:[%s227 + $0x398] sm:$0xff]
        %v415 = vld [vmem:[%s227 + $0x3a0] sm:$0xff]
        %v416 = vld [vmem:[%s227 + $0x3a8] sm:$0xff]
        %v417 = vld [vmem:[%s227 + $0x3b0] sm:$0xff]
        %v418 = vld [vmem:[%s227 + $0x3b8] sm:$0xff]
        %v419 = vld [vmem:[%s227 + $0x3c0] sm:$0xff]
        %v420 = vld [vmem:[%s227 + $0x3c8] sm:$0xff]
        %v421 = vld [vmem:[%s227 + $0x3d0] sm:$0xff]
        %v422 = vld [vmem:[%s227 + $0x3d8] sm:$0xff]
        %v423 = vld [vmem:[%s227 + $0x3e0] sm:$0xff]
        %v424 = vld [vmem:[%s227 + $0x3e8] sm:$0xff]
        %v425 = vld [vmem:[%s227 + $0x3f0] sm:$0xff]
        %v426 = vld [vmem:[%s227 + $0x3f8] sm:$0xff]
        %v427 = vpack.c.bf16 %v301, %v299
        %v428 = vpack.c.bf16 %v302, %v300
        %v429 = vpack.c.bf16 %v305, %v303
        %v430 = vpack.c.bf16 %v306, %v304
        %v431 = vpack.c.bf16 %v309, %v307
        %v432 = vpack.c.bf16 %v310, %v308
        %v433 = vpack.c.bf16 %v313, %v311
        %v434 = vpack.c.bf16 %v314, %v312
        %v435 = vpack.c.bf16 %v317, %v315
        %v436 = vpack.c.bf16 %v318, %v316
        %v437 = vpack.c.bf16 %v321, %v319
        %v438 = vpack.c.bf16 %v322, %v320
        %v439 = vpack.c.bf16 %v325, %v323
        %v440 = vpack.c.bf16 %v326, %v324
        %v441 = vpack.c.bf16 %v329, %v327
        %v442 = vpack.c.bf16 %v330, %v328
        %v443 = vpack.c.bf16 %v333, %v331
        %v444 = vpack.c.bf16 %v334, %v332
        %v445 = vpack.c.bf16 %v337, %v335
        %v446 = vpack.c.bf16 %v338, %v336
        %v447 = vpack.c.bf16 %v341, %v339
        %v448 = vpack.c.bf16 %v342, %v340
        %v449 = vpack.c.bf16 %v345, %v343
        %v450 = vpack.c.bf16 %v346, %v344
        %v451 = vpack.c.bf16 %v349, %v347
        %v452 = vpack.c.bf16 %v350, %v348
        %v453 = vpack.c.bf16 %v353, %v351
        %v454 = vpack.c.bf16 %v354, %v352
        %v455 = vpack.c.bf16 %v357, %v355
        %v456 = vpack.c.bf16 %v358, %v356
        %v457 = vpack.c.bf16 %v361, %v359
        %v458 = vpack.c.bf16 %v362, %v360
        %v459 = vpack.c.bf16 %v365, %v363
        %v460 = vpack.c.bf16 %v366, %v364
        %v461 = vpack.c.bf16 %v369, %v367
        %v462 = vpack.c.bf16 %v370, %v368
        %v463 = vpack.c.bf16 %v373, %v371
        %v464 = vpack.c.bf16 %v374, %v372
        %v465 = vpack.c.bf16 %v377, %v375
        %v466 = vpack.c.bf16 %v378, %v376
        %v467 = vpack.c.bf16 %v381, %v379
        %v468 = vpack.c.bf16 %v382, %v380
        %v469 = vpack.c.bf16 %v385, %v383
        %v470 = vpack.c.bf16 %v386, %v384
        %v471 = vpack.c.bf16 %v389, %v387
        %v472 = vpack.c.bf16 %v390, %v388
        %v473 = vpack.c.bf16 %v393, %v391
        %v474 = vpack.c.bf16 %v394, %v392
        %v475 = vpack.c.bf16 %v397, %v395
        %v476 = vpack.c.bf16 %v398, %v396
        %v477 = vpack.c.bf16 %v401, %v399
        %v478 = vpack.c.bf16 %v402, %v400
        %v479 = vpack.c.bf16 %v405, %v403
        %v480 = vpack.c.bf16 %v406, %v404
        %v481 = vpack.c.bf16 %v409, %v407
        %v482 = vpack.c.bf16 %v410, %v408
        %v483 = vpack.c.bf16 %v413, %v411
        %v484 = vpack.c.bf16 %v414, %v412
        %v485 = vpack.c.bf16 %v417, %v415
        %v486 = vpack.c.bf16 %v418, %v416
        %v487 = vpack.c.bf16 %v421, %v419
        %v488 = vpack.c.bf16 %v422, %v420
        %v489 = vpack.c.bf16 %v425, %v423
        %v490 = vpack.c.bf16 %v426, %v424
        %v491 = vld [vmem:[#allocation7] sm:$0xff]
        %v492 = vld [vmem:[#allocation7 + $0x8] sm:$0xff]
        %v493 = vld [vmem:[#allocation7 + $0x10] sm:$0xff]
        %v494 = vld [vmem:[#allocation7 + $0x18] sm:$0xff]
        %v495 = vld [vmem:[#allocation7 + $0x20] sm:$0xff]
        %v496 = vld [vmem:[#allocation7 + $0x28] sm:$0xff]
        %v497 = vld [vmem:[#allocation7 + $0x30] sm:$0xff]
        %v498 = vld [vmem:[#allocation7 + $0x38] sm:$0xff]
        %v499 = vld [vmem:[#allocation7 + $0x40] sm:$0xff]
        %v500 = vld [vmem:[#allocation7 + $0x48] sm:$0xff]
        %v501 = vld [vmem:[#allocation7 + $0x50] sm:$0xff]
        %v502 = vld [vmem:[#allocation7 + $0x58] sm:$0xff]
        %v503 = vld [vmem:[#allocation7 + $0x60] sm:$0xff]
        %v504 = vld [vmem:[#allocation7 + $0x68] sm:$0xff]
        %v505 = vld [vmem:[#allocation7 + $0x70] sm:$0xff]
        %v506 = vld [vmem:[#allocation7 + $0x78] sm:$0xff]
        %v507 = vld [vmem:[#allocation7 + $0x80] sm:$0xff]
        %v508 = vld [vmem:[#allocation7 + $0x88] sm:$0xff]
        %v509 = vld [vmem:[#allocation7 + $0x90] sm:$0xff]
        %v510 = vld [vmem:[#allocation7 + $0x98] sm:$0xff]
        %v511 = vld [vmem:[#allocation7 + $0xa0] sm:$0xff]
        %v512 = vld [vmem:[#allocation7 + $0xa8] sm:$0xff]
        %v513 = vld [vmem:[#allocation7 + $0xb0] sm:$0xff]
        %v514 = vld [vmem:[#allocation7 + $0xb8] sm:$0xff]
        %v515 = vld [vmem:[#allocation7 + $0xc0] sm:$0xff]
        %v516 = vld [vmem:[#allocation7 + $0xc8] sm:$0xff]
        %v517 = vld [vmem:[#allocation7 + $0xd0] sm:$0xff]
        %v518 = vld [vmem:[#allocation7 + $0xd8] sm:$0xff]
        %v519 = vld [vmem:[#allocation7 + $0xe0] sm:$0xff]
        %v520 = vld [vmem:[#allocation7 + $0xe8] sm:$0xff]
        %v521 = vld [vmem:[#allocation7 + $0xf0] sm:$0xff]
        %v522 = vld [vmem:[#allocation7 + $0xf8] sm:$0xff]
        %v523 = vld [vmem:[#allocation7 + $0x100] sm:$0xff]
        %v524 = vld [vmem:[#allocation7 + $0x108] sm:$0xff]
        %v525 = vld [vmem:[#allocation7 + $0x110] sm:$0xff]
        %v526 = vld [vmem:[#allocation7 + $0x118] sm:$0xff]
        %v527 = vld [vmem:[#allocation7 + $0x120] sm:$0xff]
        %v528 = vld [vmem:[#allocation7 + $0x128] sm:$0xff]
        %v529 = vld [vmem:[#allocation7 + $0x130] sm:$0xff]
        %v530 = vld [vmem:[#allocation7 + $0x138] sm:$0xff]
        %v531 = vld [vmem:[#allocation7 + $0x140] sm:$0xff]
        %v532 = vld [vmem:[#allocation7 + $0x148] sm:$0xff]
        %v533 = vld [vmem:[#allocation7 + $0x150] sm:$0xff]
        %v534 = vld [vmem:[#allocation7 + $0x158] sm:$0xff]
        %v535 = vld [vmem:[#allocation7 + $0x160] sm:$0xff]
        %v536 = vld [vmem:[#allocation7 + $0x168] sm:$0xff]
        %v537 = vld [vmem:[#allocation7 + $0x170] sm:$0xff]
        %v538 = vld [vmem:[#allocation7 + $0x178] sm:$0xff]
        %v539 = vld [vmem:[#allocation7 + $0x180] sm:$0xff]
        %v540 = vld [vmem:[#allocation7 + $0x188] sm:$0xff]
        %v541 = vld [vmem:[#allocation7 + $0x190] sm:$0xff]
        %v542 = vld [vmem:[#allocation7 + $0x198] sm:$0xff]
        %v543 = vld [vmem:[#allocation7 + $0x1a0] sm:$0xff]
        %v544 = vld [vmem:[#allocation7 + $0x1a8] sm:$0xff]
        %v545 = vld [vmem:[#allocation7 + $0x1b0] sm:$0xff]
        %v546 = vld [vmem:[#allocation7 + $0x1b8] sm:$0xff]
        %v547 = vld [vmem:[#allocation7 + $0x1c0] sm:$0xff]
        %v548 = vld [vmem:[#allocation7 + $0x1c8] sm:$0xff]
        %v549 = vld [vmem:[#allocation7 + $0x1d0] sm:$0xff]
        %v550 = vld [vmem:[#allocation7 + $0x1d8] sm:$0xff]
        %v551 = vld [vmem:[#allocation7 + $0x1e0] sm:$0xff]
        %v552 = vld [vmem:[#allocation7 + $0x1e8] sm:$0xff]
        %v553 = vld [vmem:[#allocation7 + $0x1f0] sm:$0xff]
        %v554 = vld [vmem:[#allocation7 + $0x1f8] sm:$0xff]
        %v555 = vld [vmem:[#allocation7 + $0x200] sm:$0xff]
        %v556 = vld [vmem:[#allocation7 + $0x208] sm:$0xff]
        %v557 = vld [vmem:[#allocation7 + $0x210] sm:$0xff]
        %v558 = vld [vmem:[#allocation7 + $0x218] sm:$0xff]
        %v559 = vld [vmem:[#allocation7 + $0x220] sm:$0xff]
        %v560 = vld [vmem:[#allocation7 + $0x228] sm:$0xff]
        %v561 = vld [vmem:[#allocation7 + $0x230] sm:$0xff]
        %v562 = vld [vmem:[#allocation7 + $0x238] sm:$0xff]
        %v563 = vld [vmem:[#allocation7 + $0x240] sm:$0xff]
        %v564 = vld [vmem:[#allocation7 + $0x248] sm:$0xff]
        %v565 = vld [vmem:[#allocation7 + $0x250] sm:$0xff]
        %v566 = vld [vmem:[#allocation7 + $0x258] sm:$0xff]
        %v567 = vld [vmem:[#allocation7 + $0x260] sm:$0xff]
        %v568 = vld [vmem:[#allocation7 + $0x268] sm:$0xff]
        %v569 = vld [vmem:[#allocation7 + $0x270] sm:$0xff]
        %v570 = vld [vmem:[#allocation7 + $0x278] sm:$0xff]
        %v571 = vld [vmem:[#allocation7 + $0x280] sm:$0xff]
        %v572 = vld [vmem:[#allocation7 + $0x288] sm:$0xff]
        %v573 = vld [vmem:[#allocation7 + $0x290] sm:$0xff]
        %v574 = vld [vmem:[#allocation7 + $0x298] sm:$0xff]
        %v575 = vld [vmem:[#allocation7 + $0x2a0] sm:$0xff]
        %v576 = vld [vmem:[#allocation7 + $0x2a8] sm:$0xff]
        %v577 = vld [vmem:[#allocation7 + $0x2b0] sm:$0xff]
        %v578 = vld [vmem:[#allocation7 + $0x2b8] sm:$0xff]
        %v579 = vld [vmem:[#allocation7 + $0x2c0] sm:$0xff]
        %v580 = vld [vmem:[#allocation7 + $0x2c8] sm:$0xff]
        %v581 = vld [vmem:[#allocation7 + $0x2d0] sm:$0xff]
        %v582 = vld [vmem:[#allocation7 + $0x2d8] sm:$0xff]
        %v583 = vld [vmem:[#allocation7 + $0x2e0] sm:$0xff]
        %v584 = vld [vmem:[#allocation7 + $0x2e8] sm:$0xff]
        %v585 = vld [vmem:[#allocation7 + $0x2f0] sm:$0xff]
        %v586 = vld [vmem:[#allocation7 + $0x2f8] sm:$0xff]
        %v587 = vld [vmem:[#allocation7 + $0x300] sm:$0xff]
        %v588 = vld [vmem:[#allocation7 + $0x308] sm:$0xff]
        %v589 = vld [vmem:[#allocation7 + $0x310] sm:$0xff]
        %v590 = vld [vmem:[#allocation7 + $0x318] sm:$0xff]
        %v591 = vld [vmem:[#allocation7 + $0x320] sm:$0xff]
        %v592 = vld [vmem:[#allocation7 + $0x328] sm:$0xff]
        %v593 = vld [vmem:[#allocation7 + $0x330] sm:$0xff]
        %v594 = vld [vmem:[#allocation7 + $0x338] sm:$0xff]
        %v595 = vld [vmem:[#allocation7 + $0x340] sm:$0xff]
        %v596 = vld [vmem:[#allocation7 + $0x348] sm:$0xff]
        %v597 = vld [vmem:[#allocation7 + $0x350] sm:$0xff]
        %v598 = vld [vmem:[#allocation7 + $0x358] sm:$0xff]
        %v599 = vld [vmem:[#allocation7 + $0x360] sm:$0xff]
        %v600 = vld [vmem:[#allocation7 + $0x368] sm:$0xff]
        %v601 = vld [vmem:[#allocation7 + $0x370] sm:$0xff]
        %v602 = vld [vmem:[#allocation7 + $0x378] sm:$0xff]
        %v603 = vld [vmem:[#allocation7 + $0x380] sm:$0xff]
        %v604 = vld [vmem:[#allocation7 + $0x388] sm:$0xff]
        %v605 = vld [vmem:[#allocation7 + $0x390] sm:$0xff]
        %v606 = vld [vmem:[#allocation7 + $0x398] sm:$0xff]
        %v607 = vld [vmem:[#allocation7 + $0x3a0] sm:$0xff]
        %v608 = vld [vmem:[#allocation7 + $0x3a8] sm:$0xff]
        %v609 = vld [vmem:[#allocation7 + $0x3b0] sm:$0xff]
        %v610 = vld [vmem:[#allocation7 + $0x3b8] sm:$0xff]
        %v611 = vld [vmem:[#allocation7 + $0x3c0] sm:$0xff]
        %v612 = vld [vmem:[#allocation7 + $0x3c8] sm:$0xff]
        %v613 = vld [vmem:[#allocation7 + $0x3d0] sm:$0xff]
        %v614 = vld [vmem:[#allocation7 + $0x3d8] sm:$0xff]
        %v615 = vld [vmem:[#allocation7 + $0x3e0] sm:$0xff]
        %v616 = vld [vmem:[#allocation7 + $0x3e8] sm:$0xff]
        %v617 = vld [vmem:[#allocation7 + $0x3f0] sm:$0xff]
        %v618 = vld [vmem:[#allocation7 + $0x3f8] sm:$0xff]
        %v747 = vunpack.c.l.b16 %v491
        %v748 = vunpack.c.h.b16 %v491
        %v749 = vunpack.c.l.b16 %v492
        %v750 = vunpack.c.h.b16 %v492
        %v751 = vunpack.c.l.b16 %v493
        %v752 = vunpack.c.h.b16 %v493
        %v753 = vunpack.c.l.b16 %v494
        %v754 = vunpack.c.h.b16 %v494
        %v755 = vunpack.c.l.b16 %v495
        %v756 = vunpack.c.h.b16 %v495
        %v757 = vunpack.c.l.b16 %v496
        %v758 = vunpack.c.h.b16 %v496
        %v759 = vunpack.c.l.b16 %v497
        %v760 = vunpack.c.h.b16 %v497
        %v761 = vunpack.c.l.b16 %v498
        %v762 = vunpack.c.h.b16 %v498
        %v763 = vunpack.c.l.b16 %v499
        %v764 = vunpack.c.h.b16 %v499
        %v765 = vunpack.c.l.b16 %v500
        %v766 = vunpack.c.h.b16 %v500
        %v767 = vunpack.c.l.b16 %v501
        %v768 = vunpack.c.h.b16 %v501
        %v769 = vunpack.c.l.b16 %v502
        %v770 = vunpack.c.h.b16 %v502
        %v771 = vunpack.c.l.b16 %v503
        %v772 = vunpack.c.h.b16 %v503
        %v773 = vunpack.c.l.b16 %v504
        %v774 = vunpack.c.h.b16 %v504
        %v775 = vunpack.c.l.b16 %v505
        %v776 = vunpack.c.h.b16 %v505
        %v777 = vunpack.c.l.b16 %v506
        %v778 = vunpack.c.h.b16 %v506
        %v779 = vunpack.c.l.b16 %v507
        %v780 = vunpack.c.h.b16 %v507
        %v781 = vunpack.c.l.b16 %v508
        %v782 = vunpack.c.h.b16 %v508
        %v783 = vunpack.c.l.b16 %v509
        %v784 = vunpack.c.h.b16 %v509
        %v785 = vunpack.c.l.b16 %v510
        %v786 = vunpack.c.h.b16 %v510
        %v787 = vunpack.c.l.b16 %v511
        %v788 = vunpack.c.h.b16 %v511
        %v789 = vunpack.c.l.b16 %v512
        %v790 = vunpack.c.h.b16 %v512
        %v791 = vunpack.c.l.b16 %v513
        %v792 = vunpack.c.h.b16 %v513
        %v793 = vunpack.c.l.b16 %v514
        %v794 = vunpack.c.h.b16 %v514
        %v795 = vunpack.c.l.b16 %v515
        %v796 = vunpack.c.h.b16 %v515
        %v797 = vunpack.c.l.b16 %v516
        %v798 = vunpack.c.h.b16 %v516
        %v799 = vunpack.c.l.b16 %v517
        %v800 = vunpack.c.h.b16 %v517
        %v801 = vunpack.c.l.b16 %v518
        %v802 = vunpack.c.h.b16 %v518
        %v803 = vunpack.c.l.b16 %v519
        %v804 = vunpack.c.h.b16 %v519
        %v805 = vunpack.c.l.b16 %v520
        %v806 = vunpack.c.h.b16 %v520
        %v807 = vunpack.c.l.b16 %v521
        %v808 = vunpack.c.h.b16 %v521
        %v809 = vunpack.c.l.b16 %v522
        %v810 = vunpack.c.h.b16 %v522
        %v811 = vunpack.c.l.b16 %v523
        %v812 = vunpack.c.h.b16 %v523
        %v813 = vunpack.c.l.b16 %v524
        %v814 = vunpack.c.h.b16 %v524
        %v815 = vunpack.c.l.b16 %v525
        %v816 = vunpack.c.h.b16 %v525
        %v817 = vunpack.c.l.b16 %v526
        %v818 = vunpack.c.h.b16 %v526
        %v819 = vunpack.c.l.b16 %v527
        %v820 = vunpack.c.h.b16 %v527
        %v821 = vunpack.c.l.b16 %v528
        %v822 = vunpack.c.h.b16 %v528
        %v823 = vunpack.c.l.b16 %v529
        %v824 = vunpack.c.h.b16 %v529
        %v825 = vunpack.c.l.b16 %v530
        %v826 = vunpack.c.h.b16 %v530
        %v827 = vunpack.c.l.b16 %v531
        %v828 = vunpack.c.h.b16 %v531
        %v829 = vunpack.c.l.b16 %v532
        %v830 = vunpack.c.h.b16 %v532
        %v831 = vunpack.c.l.b16 %v533
        %v832 = vunpack.c.h.b16 %v533
        %v833 = vunpack.c.l.b16 %v534
        %v834 = vunpack.c.h.b16 %v534
        %v835 = vunpack.c.l.b16 %v535
        %v836 = vunpack.c.h.b16 %v535
        %v837 = vunpack.c.l.b16 %v536
        %v838 = vunpack.c.h.b16 %v536
        %v839 = vunpack.c.l.b16 %v537
        %v840 = vunpack.c.h.b16 %v537
        %v841 = vunpack.c.l.b16 %v538
        %v842 = vunpack.c.h.b16 %v538
        %v843 = vunpack.c.l.b16 %v539
        %v844 = vunpack.c.h.b16 %v539
        %v845 = vunpack.c.l.b16 %v540
        %v846 = vunpack.c.h.b16 %v540
        %v847 = vunpack.c.l.b16 %v541
        %v848 = vunpack.c.h.b16 %v541
        %v849 = vunpack.c.l.b16 %v542
        %v850 = vunpack.c.h.b16 %v542
        %v851 = vunpack.c.l.b16 %v543
        %v852 = vunpack.c.h.b16 %v543
        %v853 = vunpack.c.l.b16 %v544
        %v854 = vunpack.c.h.b16 %v544
        %v855 = vunpack.c.l.b16 %v545
        %v856 = vunpack.c.h.b16 %v545
        %v857 = vunpack.c.l.b16 %v546
        %v858 = vunpack.c.h.b16 %v546
        %v859 = vunpack.c.l.b16 %v547
        %v860 = vunpack.c.h.b16 %v547
        %v861 = vunpack.c.l.b16 %v548
        %v862 = vunpack.c.h.b16 %v548
        %v863 = vunpack.c.l.b16 %v549
        %v864 = vunpack.c.h.b16 %v549
        %v865 = vunpack.c.l.b16 %v550
        %v866 = vunpack.c.h.b16 %v550
        %v867 = vunpack.c.l.b16 %v551
        %v868 = vunpack.c.h.b16 %v551
        %v869 = vunpack.c.l.b16 %v552
        %v870 = vunpack.c.h.b16 %v552
        %v871 = vunpack.c.l.b16 %v553
        %v872 = vunpack.c.h.b16 %v553
        %v873 = vunpack.c.l.b16 %v554
        %v874 = vunpack.c.h.b16 %v554
        %v875 = vunpack.c.l.b16 %v555
        %v876 = vunpack.c.h.b16 %v555
        %v877 = vunpack.c.l.b16 %v556
        %v878 = vunpack.c.h.b16 %v556
        %v879 = vunpack.c.l.b16 %v557
        %v880 = vunpack.c.h.b16 %v557
        %v881 = vunpack.c.l.b16 %v558
        %v882 = vunpack.c.h.b16 %v558
        %v883 = vunpack.c.l.b16 %v559
        %v884 = vunpack.c.h.b16 %v559
        %v885 = vunpack.c.l.b16 %v560
        %v886 = vunpack.c.h.b16 %v560
        %v887 = vunpack.c.l.b16 %v561
        %v888 = vunpack.c.h.b16 %v561
        %v889 = vunpack.c.l.b16 %v562
        %v890 = vunpack.c.h.b16 %v562
        %v891 = vunpack.c.l.b16 %v563
        %v892 = vunpack.c.h.b16 %v563
        %v893 = vunpack.c.l.b16 %v564
        %v894 = vunpack.c.h.b16 %v564
        %v895 = vunpack.c.l.b16 %v565
        %v896 = vunpack.c.h.b16 %v565
        %v897 = vunpack.c.l.b16 %v566
        %v898 = vunpack.c.h.b16 %v566
        %v899 = vunpack.c.l.b16 %v567
        %v900 = vunpack.c.h.b16 %v567
        %v901 = vunpack.c.l.b16 %v568
        %v902 = vunpack.c.h.b16 %v568
        %v903 = vunpack.c.l.b16 %v569
        %v904 = vunpack.c.h.b16 %v569
        %v905 = vunpack.c.l.b16 %v570
        %v906 = vunpack.c.h.b16 %v570
        %v907 = vunpack.c.l.b16 %v571
        %v908 = vunpack.c.h.b16 %v571
        %v909 = vunpack.c.l.b16 %v572
        %v910 = vunpack.c.h.b16 %v572
        %v911 = vunpack.c.l.b16 %v573
        %v912 = vunpack.c.h.b16 %v573
        %v913 = vunpack.c.l.b16 %v574
        %v914 = vunpack.c.h.b16 %v574
        %v915 = vunpack.c.l.b16 %v575
        %v916 = vunpack.c.h.b16 %v575
        %v917 = vunpack.c.l.b16 %v576
        %v918 = vunpack.c.h.b16 %v576
        %v919 = vunpack.c.l.b16 %v577
        %v920 = vunpack.c.h.b16 %v577
        %v921 = vunpack.c.l.b16 %v578
        %v922 = vunpack.c.h.b16 %v578
        %v923 = vunpack.c.l.b16 %v579
        %v924 = vunpack.c.h.b16 %v579
        %v925 = vunpack.c.l.b16 %v580
        %v926 = vunpack.c.h.b16 %v580
        %v927 = vunpack.c.l.b16 %v581
        %v928 = vunpack.c.h.b16 %v581
        %v929 = vunpack.c.l.b16 %v582
        %v930 = vunpack.c.h.b16 %v582
        %v931 = vunpack.c.l.b16 %v583
        %v932 = vunpack.c.h.b16 %v583
        %v933 = vunpack.c.l.b16 %v584
        %v934 = vunpack.c.h.b16 %v584
        %v935 = vunpack.c.l.b16 %v585
        %v936 = vunpack.c.h.b16 %v585
        %v937 = vunpack.c.l.b16 %v586
        %v938 = vunpack.c.h.b16 %v586
        %v939 = vunpack.c.l.b16 %v587
        %v940 = vunpack.c.h.b16 %v587
        %v941 = vunpack.c.l.b16 %v588
        %v942 = vunpack.c.h.b16 %v588
        %v943 = vunpack.c.l.b16 %v589
        %v944 = vunpack.c.h.b16 %v589
        %v945 = vunpack.c.l.b16 %v590
        %v946 = vunpack.c.h.b16 %v590
        %v947 = vunpack.c.l.b16 %v591
        %v948 = vunpack.c.h.b16 %v591
        %v949 = vunpack.c.l.b16 %v592
        %v950 = vunpack.c.h.b16 %v592
        %v951 = vunpack.c.l.b16 %v593
        %v952 = vunpack.c.h.b16 %v593
        %v953 = vunpack.c.l.b16 %v594
        %v954 = vunpack.c.h.b16 %v594
        %v955 = vunpack.c.l.b16 %v595
        %v956 = vunpack.c.h.b16 %v595
        %v957 = vunpack.c.l.b16 %v596
        %v958 = vunpack.c.h.b16 %v596
        %v959 = vunpack.c.l.b16 %v597
        %v960 = vunpack.c.h.b16 %v597
        %v961 = vunpack.c.l.b16 %v598
        %v962 = vunpack.c.h.b16 %v598
        %v963 = vunpack.c.l.b16 %v599
        %v964 = vunpack.c.h.b16 %v599
        %v965 = vunpack.c.l.b16 %v600
        %v966 = vunpack.c.h.b16 %v600
        %v967 = vunpack.c.l.b16 %v601
        %v968 = vunpack.c.h.b16 %v601
        %v969 = vunpack.c.l.b16 %v602
        %v970 = vunpack.c.h.b16 %v602
        %v971 = vunpack.c.l.b16 %v603
        %v972 = vunpack.c.h.b16 %v603
        %v973 = vunpack.c.l.b16 %v604
        %v974 = vunpack.c.h.b16 %v604
        %v975 = vunpack.c.l.b16 %v605
        %v976 = vunpack.c.h.b16 %v605
        %v977 = vunpack.c.l.b16 %v606
        %v978 = vunpack.c.h.b16 %v606
        %v979 = vunpack.c.l.b16 %v607
        %v980 = vunpack.c.h.b16 %v607
        %v981 = vunpack.c.l.b16 %v608
        %v982 = vunpack.c.h.b16 %v608
        %v983 = vunpack.c.l.b16 %v609
        %v984 = vunpack.c.h.b16 %v609
        %v985 = vunpack.c.l.b16 %v610
        %v986 = vunpack.c.h.b16 %v610
        %v987 = vunpack.c.l.b16 %v611
        %v988 = vunpack.c.h.b16 %v611
        %v989 = vunpack.c.l.b16 %v612
        %v990 = vunpack.c.h.b16 %v612
        %v991 = vunpack.c.l.b16 %v613
        %v992 = vunpack.c.h.b16 %v613
        %v993 = vunpack.c.l.b16 %v614
        %v994 = vunpack.c.h.b16 %v614
        %v995 = vunpack.c.l.b16 %v615
        %v996 = vunpack.c.h.b16 %v615
        %v997 = vunpack.c.l.b16 %v616
        %v998 = vunpack.c.h.b16 %v616
        %v999 = vunpack.c.l.b16 %v617
        %v1000 = vunpack.c.h.b16 %v617
        %v1001 = vunpack.c.l.b16 %v618
        %v1002 = vunpack.c.h.b16 %v618
        %v1003 = vpack.c.b16 %v751, %v747
        %v1004 = vpack.c.b16 %v752, %v748
        %v1005 = vpack.c.b16 %v753, %v749
        %v1006 = vpack.c.b16 %v754, %v750
        %v1007 = vpack.c.b16 %v759, %v755
        %v1008 = vpack.c.b16 %v760, %v756
        %v1009 = vpack.c.b16 %v761, %v757
        %v1010 = vpack.c.b16 %v762, %v758
        %v1011 = vpack.c.b16 %v767, %v763
        %v1012 = vpack.c.b16 %v768, %v764
        %v1013 = vpack.c.b16 %v769, %v765
        %v1014 = vpack.c.b16 %v770, %v766
        %v1015 = vpack.c.b16 %v775, %v771
        %v1016 = vpack.c.b16 %v776, %v772
        %v1017 = vpack.c.b16 %v777, %v773
        %v1018 = vpack.c.b16 %v778, %v774
        %v1019 = vpack.c.b16 %v783, %v779
        %v1020 = vpack.c.b16 %v784, %v780
        %v1021 = vpack.c.b16 %v785, %v781
        %v1022 = vpack.c.b16 %v786, %v782
        %v1023 = vpack.c.b16 %v791, %v787
        %v1024 = vpack.c.b16 %v792, %v788
        %v1025 = vpack.c.b16 %v793, %v789
        %v1026 = vpack.c.b16 %v794, %v790
        %v1027 = vpack.c.b16 %v799, %v795
        %v1028 = vpack.c.b16 %v800, %v796
        %v1029 = vpack.c.b16 %v801, %v797
        %v1030 = vpack.c.b16 %v802, %v798
        %v1031 = vpack.c.b16 %v807, %v803
        %v1032 = vpack.c.b16 %v808, %v804
        %v1033 = vpack.c.b16 %v809, %v805
        %v1034 = vpack.c.b16 %v810, %v806
        %v1035 = vpack.c.b16 %v815, %v811
        %v1036 = vpack.c.b16 %v816, %v812
        %v1037 = vpack.c.b16 %v817, %v813
        %v1038 = vpack.c.b16 %v818, %v814
        %v1039 = vpack.c.b16 %v823, %v819
        %v1040 = vpack.c.b16 %v824, %v820
        %v1041 = vpack.c.b16 %v825, %v821
        %v1042 = vpack.c.b16 %v826, %v822
        %v1043 = vpack.c.b16 %v831, %v827
        %v1044 = vpack.c.b16 %v832, %v828
        %v1045 = vpack.c.b16 %v833, %v829
        %v1046 = vpack.c.b16 %v834, %v830
        %v1047 = vpack.c.b16 %v839, %v835
        %v1048 = vpack.c.b16 %v840, %v836
        %v1049 = vpack.c.b16 %v841, %v837
        %v1050 = vpack.c.b16 %v842, %v838
        %v1051 = vpack.c.b16 %v847, %v843
        %v1052 = vpack.c.b16 %v848, %v844
        %v1053 = vpack.c.b16 %v849, %v845
        %v1054 = vpack.c.b16 %v850, %v846
        %v1055 = vpack.c.b16 %v855, %v851
        %v1056 = vpack.c.b16 %v856, %v852
        %v1057 = vpack.c.b16 %v857, %v853
        %v1058 = vpack.c.b16 %v858, %v854
        %v1059 = vpack.c.b16 %v863, %v859
        %v1060 = vpack.c.b16 %v864, %v860
        %v1061 = vpack.c.b16 %v865, %v861
        %v1062 = vpack.c.b16 %v866, %v862
        %v1063 = vpack.c.b16 %v871, %v867
        %v1064 = vpack.c.b16 %v872, %v868
        %v1065 = vpack.c.b16 %v873, %v869
        %v1066 = vpack.c.b16 %v874, %v870
        %v1067 = vpack.c.b16 %v879, %v875
        %v1068 = vpack.c.b16 %v880, %v876
        %v1069 = vpack.c.b16 %v881, %v877
        %v1070 = vpack.c.b16 %v882, %v878
        %v1071 = vpack.c.b16 %v887, %v883
        %v1072 = vpack.c.b16 %v888, %v884
        %v1073 = vpack.c.b16 %v889, %v885
        %v1074 = vpack.c.b16 %v890, %v886
        %v1075 = vpack.c.b16 %v895, %v891
        %v1076 = vpack.c.b16 %v896, %v892
        %v1077 = vpack.c.b16 %v897, %v893
        %v1078 = vpack.c.b16 %v898, %v894
        %v1079 = vpack.c.b16 %v903, %v899
        %v1080 = vpack.c.b16 %v904, %v900
        %v1081 = vpack.c.b16 %v905, %v901
        %v1082 = vpack.c.b16 %v906, %v902
        %v1083 = vpack.c.b16 %v911, %v907
        %v1084 = vpack.c.b16 %v912, %v908
        %v1085 = vpack.c.b16 %v913, %v909
        %v1086 = vpack.c.b16 %v914, %v910
        %v1087 = vpack.c.b16 %v919, %v915
        %v1088 = vpack.c.b16 %v920, %v916
        %v1089 = vpack.c.b16 %v921, %v917
        %v1090 = vpack.c.b16 %v922, %v918
        %v1091 = vpack.c.b16 %v927, %v923
        %v1092 = vpack.c.b16 %v928, %v924
        %v1093 = vpack.c.b16 %v929, %v925
        %v1094 = vpack.c.b16 %v930, %v926
        %v1095 = vpack.c.b16 %v935, %v931
        %v1096 = vpack.c.b16 %v936, %v932
        %v1097 = vpack.c.b16 %v937, %v933
        %v1098 = vpack.c.b16 %v938, %v934
        %v1099 = vpack.c.b16 %v943, %v939
        %v1100 = vpack.c.b16 %v944, %v940
        %v1101 = vpack.c.b16 %v945, %v941
        %v1102 = vpack.c.b16 %v946, %v942
        %v1103 = vpack.c.b16 %v951, %v947
        %v1104 = vpack.c.b16 %v952, %v948
        %v1105 = vpack.c.b16 %v953, %v949
        %v1106 = vpack.c.b16 %v954, %v950
        %v1107 = vpack.c.b16 %v959, %v955
        %v1108 = vpack.c.b16 %v960, %v956
        %v1109 = vpack.c.b16 %v961, %v957
        %v1110 = vpack.c.b16 %v962, %v958
        %v1111 = vpack.c.b16 %v967, %v963
        %v1112 = vpack.c.b16 %v968, %v964
        %v1113 = vpack.c.b16 %v969, %v965
        %v1114 = vpack.c.b16 %v970, %v966
        %v1115 = vpack.c.b16 %v975, %v971
        %v1116 = vpack.c.b16 %v976, %v972
        %v1117 = vpack.c.b16 %v977, %v973
        %v1118 = vpack.c.b16 %v978, %v974
        %v1119 = vpack.c.b16 %v983, %v979
        %v1120 = vpack.c.b16 %v984, %v980
        %v1121 = vpack.c.b16 %v985, %v981
        %v1122 = vpack.c.b16 %v986, %v982
        %v1123 = vpack.c.b16 %v991, %v987
        %v1124 = vpack.c.b16 %v992, %v988
        %v1125 = vpack.c.b16 %v993, %v989
        %v1126 = vpack.c.b16 %v994, %v990
        %v1127 = vpack.c.b16 %v999, %v995
        %v1128 = vpack.c.b16 %v1000, %v996
        %v1129 = vpack.c.b16 %v1001, %v997
        %v1130 = vpack.c.b16 %v1002, %v998
        %1259 = vmatprep.subr.bf16.mxu0 %v442
        %1260 = vmatpush1.bf16.msra.mxu0 %v441
        %1261 = vmatprep.subr.bf16.mxu0 %v440
        %1262 = vmatpush1.bf16.msra.mxu0 %v439
        %1263 = vmatprep.subr.bf16.mxu0 %v438
        %1264 = vmatpush1.bf16.msra.mxu0 %v437
        %1265 = vmatprep.subr.bf16.mxu0 %v436
        %1266 = vmatpush1.bf16.msra.mxu0 %v435
        %1267 = vmatprep.subr.bf16.mxu0 %v434
        %1268 = vmatpush1.bf16.msra.mxu0 %v433
        %1269 = vmatprep.subr.bf16.mxu0 %v432
        %1270 = vmatpush1.bf16.msra.mxu0 %v431
        %1271 = vmatprep.subr.bf16.mxu0 %v430
        %1272 = vmatpush1.bf16.msra.mxu0 %v429
        %1273 = vmatprep.subr.bf16.mxu0 %v428
        %1274 = vmatpush1.bf16.msra.mxu0 %v427
        %1275 = vmatprep.subr.bf16.mxu0 %v458
        %1276 = vmatpush2.bf16.msra.mxu0 %v457
        %1277 = vmatprep.subr.bf16.mxu0 %v456
        %1278 = vmatpush2.bf16.msra.mxu0 %v455
        %1279 = vmatprep.subr.bf16.mxu0 %v454
        %1280 = vmatpush2.bf16.msra.mxu0 %v453
        %1281 = vmatprep.subr.bf16.mxu0 %v452
        %1282 = vmatpush2.bf16.msra.mxu0 %v451
        %1283 = vmatprep.subr.bf16.mxu0 %v450
        %1284 = vmatpush2.bf16.msra.mxu0 %v449
        %1285 = vmatprep.subr.bf16.mxu0 %v448
        %1286 = vmatpush2.bf16.msra.mxu0 %v447
        %1287 = vmatprep.subr.bf16.mxu0 %v446
        %1288 = vmatpush2.bf16.msra.mxu0 %v445
        %1289 = vmatprep.subr.bf16.mxu0 %v444
        %1290 = vmatpush2.bf16.msra.mxu0 %v443
        %1291 = vmatprep.mubr.bf16.mxu0 %v1004
        %1292 = vmatmul.mubr.bf16.gmra.mxu0 %v1003
        %v1293 = vpop.f32.mrf.mxu0
        %v1294 = vadd.f32 0.0, %v1293
        %v1295 = vpop.f32.mrf.mxu0
        %v1296 = vadd.f32 0.0, %v1295
        %v1297 = vpop.f32.mrf.mxu0
        %v1298 = vadd.f32 0.0, %v1297
        %v1299 = vpop.f32.mrf.mxu0
        %v1300 = vadd.f32 0.0, %v1299
        %1301 = vmatprep.mubr.bf16.mxu0 %v1008
        %1302 = vmatmul.mubr.bf16.gmra.mxu0 %v1007
        %v1303 = vpop.f32.mrf.mxu0
        %v1304 = vadd.f32 0.0, %v1303
        %v1305 = vpop.f32.mrf.mxu0
        %v1306 = vadd.f32 0.0, %v1305
        %v1307 = vpop.f32.mrf.mxu0
        %v1308 = vadd.f32 0.0, %v1307
        %v1309 = vpop.f32.mrf.mxu0
        %v1310 = vadd.f32 0.0, %v1309
        %1311 = vmatprep.mubr.bf16.mxu0 %v1012
        %1312 = vmatmul.mubr.bf16.gmra.mxu0 %v1011
        %v1313 = vpop.f32.mrf.mxu0
        %v1314 = vadd.f32 0.0, %v1313
        %v1315 = vpop.f32.mrf.mxu0
        %v1316 = vadd.f32 0.0, %v1315
        %v1317 = vpop.f32.mrf.mxu0
        %v1318 = vadd.f32 0.0, %v1317
        %v1319 = vpop.f32.mrf.mxu0
        %v1320 = vadd.f32 0.0, %v1319
        %1321 = vmatprep.mubr.bf16.mxu0 %v1016
        %1322 = vmatmul.mubr.bf16.gmra.mxu0 %v1015
        %v1323 = vpop.f32.mrf.mxu0
        %v1324 = vadd.f32 0.0, %v1323
        %v1325 = vpop.f32.mrf.mxu0
        %v1326 = vadd.f32 0.0, %v1325
        %v1327 = vpop.f32.mrf.mxu0
        %v1328 = vadd.f32 0.0, %v1327
        %v1329 = vpop.f32.mrf.mxu0
        %v1330 = vadd.f32 0.0, %v1329
        %1331 = vmatprep.mubr.bf16.mxu0 %v1020
        %1332 = vmatmul.mubr.bf16.gmra.mxu0 %v1019
        %v1333 = vpop.f32.mrf.mxu0
        %v1334 = vadd.f32 0.0, %v1333
        %v1335 = vpop.f32.mrf.mxu0
        %v1336 = vadd.f32 0.0, %v1335
        %v1337 = vpop.f32.mrf.mxu0
        %v1338 = vadd.f32 0.0, %v1337
        %v1339 = vpop.f32.mrf.mxu0
        %v1340 = vadd.f32 0.0, %v1339
        %1341 = vmatprep.mubr.bf16.mxu0 %v1024
        %1342 = vmatmul.mubr.bf16.gmra.mxu0 %v1023
        %v1343 = vpop.f32.mrf.mxu0
        %v1344 = vadd.f32 0.0, %v1343
        %v1345 = vpop.f32.mrf.mxu0
        %v1346 = vadd.f32 0.0, %v1345
        %v1347 = vpop.f32.mrf.mxu0
        %v1348 = vadd.f32 0.0, %v1347
        %v1349 = vpop.f32.mrf.mxu0
        %v1350 = vadd.f32 0.0, %v1349
        %1351 = vmatprep.mubr.bf16.mxu0 %v1028
        %1352 = vmatmul.mubr.bf16.gmra.mxu0 %v1027
        %v1353 = vpop.f32.mrf.mxu0
        %v1354 = vadd.f32 0.0, %v1353
        %v1355 = vpop.f32.mrf.mxu0
        %v1356 = vadd.f32 0.0, %v1355
        %v1357 = vpop.f32.mrf.mxu0
        %v1358 = vadd.f32 0.0, %v1357
        %v1359 = vpop.f32.mrf.mxu0
        %v1360 = vadd.f32 0.0, %v1359
        %1361 = vmatprep.mubr.bf16.mxu0 %v1032
        %1362 = vmatmul.mubr.bf16.gmra.mxu0 %v1031
        %v1363 = vpop.f32.mrf.mxu0
        %v1364 = vadd.f32 0.0, %v1363
        %v1365 = vpop.f32.mrf.mxu0
        %v1366 = vadd.f32 0.0, %v1365
        %v1367 = vpop.f32.mrf.mxu0
        %v1368 = vadd.f32 0.0, %v1367
        %v1369 = vpop.f32.mrf.mxu0
        %v1370 = vadd.f32 0.0, %v1369
        %1371 = vmatprep.mubr.bf16.mxu0 %v1036
        %1372 = vmatmul.mubr.bf16.gmra.mxu0 %v1035
        %v1373 = vpop.f32.mrf.mxu0
        %v1374 = vadd.f32 0.0, %v1373
        %v1375 = vpop.f32.mrf.mxu0
        %v1376 = vadd.f32 0.0, %v1375
        %v1377 = vpop.f32.mrf.mxu0
        %v1378 = vadd.f32 0.0, %v1377
        %v1379 = vpop.f32.mrf.mxu0
        %v1380 = vadd.f32 0.0, %v1379
        %1381 = vmatprep.mubr.bf16.mxu0 %v1040
        %1382 = vmatmul.mubr.bf16.gmra.mxu0 %v1039
        %v1383 = vpop.f32.mrf.mxu0
        %v1384 = vadd.f32 0.0, %v1383
        %v1385 = vpop.f32.mrf.mxu0
        %v1386 = vadd.f32 0.0, %v1385
        %v1387 = vpop.f32.mrf.mxu0
        %v1388 = vadd.f32 0.0, %v1387
        %v1389 = vpop.f32.mrf.mxu0
        %v1390 = vadd.f32 0.0, %v1389
        %1391 = vmatprep.mubr.bf16.mxu0 %v1044
        %1392 = vmatmul.mubr.bf16.gmra.mxu0 %v1043
        %v1393 = vpop.f32.mrf.mxu0
        %v1394 = vadd.f32 0.0, %v1393
        %v1395 = vpop.f32.mrf.mxu0
        %v1396 = vadd.f32 0.0, %v1395
        %v1397 = vpop.f32.mrf.mxu0
        %v1398 = vadd.f32 0.0, %v1397
        %v1399 = vpop.f32.mrf.mxu0
        %v1400 = vadd.f32 0.0, %v1399
        %1401 = vmatprep.mubr.bf16.mxu0 %v1048
        %1402 = vmatmul.mubr.bf16.gmra.mxu0 %v1047
        %v1403 = vpop.f32.mrf.mxu0
        %v1404 = vadd.f32 0.0, %v1403
        %v1405 = vpop.f32.mrf.mxu0
        %v1406 = vadd.f32 0.0, %v1405
        %v1407 = vpop.f32.mrf.mxu0
        %v1408 = vadd.f32 0.0, %v1407
        %v1409 = vpop.f32.mrf.mxu0
        %v1410 = vadd.f32 0.0, %v1409
        %1411 = vmatprep.mubr.bf16.mxu0 %v1052
        %1412 = vmatmul.mubr.bf16.gmra.mxu0 %v1051
        %v1413 = vpop.f32.mrf.mxu0
        %v1414 = vadd.f32 0.0, %v1413
        %v1415 = vpop.f32.mrf.mxu0
        %v1416 = vadd.f32 0.0, %v1415
        %v1417 = vpop.f32.mrf.mxu0
        %v1418 = vadd.f32 0.0, %v1417
        %v1419 = vpop.f32.mrf.mxu0
        %v1420 = vadd.f32 0.0, %v1419
        %1421 = vmatprep.mubr.bf16.mxu0 %v1056
        %1422 = vmatmul.mubr.bf16.gmra.mxu0 %v1055
        %v1423 = vpop.f32.mrf.mxu0
        %v1424 = vadd.f32 0.0, %v1423
        %v1425 = vpop.f32.mrf.mxu0
        %v1426 = vadd.f32 0.0, %v1425
        %v1427 = vpop.f32.mrf.mxu0
        %v1428 = vadd.f32 0.0, %v1427
        %v1429 = vpop.f32.mrf.mxu0
        %v1430 = vadd.f32 0.0, %v1429
        %1431 = vmatprep.mubr.bf16.mxu0 %v1060
        %1432 = vmatmul.mubr.bf16.gmra.mxu0 %v1059
        %v1433 = vpop.f32.mrf.mxu0
        %v1434 = vadd.f32 0.0, %v1433
        %v1435 = vpop.f32.mrf.mxu0
        %v1436 = vadd.f32 0.0, %v1435
        %v1437 = vpop.f32.mrf.mxu0
        %v1438 = vadd.f32 0.0, %v1437
        %v1439 = vpop.f32.mrf.mxu0
        %v1440 = vadd.f32 0.0, %v1439
        %1441 = vmatprep.mubr.bf16.mxu0 %v1064
        %1442 = vmatmul.mubr.bf16.gmra.mxu0 %v1063
        %v1443 = vpop.f32.mrf.mxu0
        %v1444 = vadd.f32 0.0, %v1443
        %v1445 = vpop.f32.mrf.mxu0
        %v1446 = vadd.f32 0.0, %v1445
        %v1447 = vpop.f32.mrf.mxu0
        %v1448 = vadd.f32 0.0, %v1447
        %v1449 = vpop.f32.mrf.mxu0
        %v1450 = vadd.f32 0.0, %v1449
        %1451 = vmatprep.mubr.bf16.mxu0 %v1068
        %1452 = vmatmul.mubr.bf16.gmra.mxu0 %v1067
        %v1453 = vpop.f32.mrf.mxu0
        %v1454 = vadd.f32 0.0, %v1453
        %v1455 = vpop.f32.mrf.mxu0
        %v1456 = vadd.f32 0.0, %v1455
        %v1457 = vpop.f32.mrf.mxu0
        %v1458 = vadd.f32 0.0, %v1457
        %v1459 = vpop.f32.mrf.mxu0
        %v1460 = vadd.f32 0.0, %v1459
        %1461 = vmatprep.mubr.bf16.mxu0 %v1072
        %1462 = vmatmul.mubr.bf16.gmra.mxu0 %v1071
        %v1463 = vpop.f32.mrf.mxu0
        %v1464 = vadd.f32 0.0, %v1463
        %v1465 = vpop.f32.mrf.mxu0
        %v1466 = vadd.f32 0.0, %v1465
        %v1467 = vpop.f32.mrf.mxu0
        %v1468 = vadd.f32 0.0, %v1467
        %v1469 = vpop.f32.mrf.mxu0
        %v1470 = vadd.f32 0.0, %v1469
        %1471 = vmatprep.mubr.bf16.mxu0 %v1076
        %1472 = vmatmul.mubr.bf16.gmra.mxu0 %v1075
        %v1473 = vpop.f32.mrf.mxu0
        %v1474 = vadd.f32 0.0, %v1473
        %v1475 = vpop.f32.mrf.mxu0
        %v1476 = vadd.f32 0.0, %v1475
        %v1477 = vpop.f32.mrf.mxu0
        %v1478 = vadd.f32 0.0, %v1477
        %v1479 = vpop.f32.mrf.mxu0
        %v1480 = vadd.f32 0.0, %v1479
        %1481 = vmatprep.mubr.bf16.mxu0 %v1080
        %1482 = vmatmul.mubr.bf16.gmra.mxu0 %v1079
        %v1483 = vpop.f32.mrf.mxu0
        %v1484 = vadd.f32 0.0, %v1483
        %v1485 = vpop.f32.mrf.mxu0
        %v1486 = vadd.f32 0.0, %v1485
        %v1487 = vpop.f32.mrf.mxu0
        %v1488 = vadd.f32 0.0, %v1487
        %v1489 = vpop.f32.mrf.mxu0
        %v1490 = vadd.f32 0.0, %v1489
        %1491 = vmatprep.mubr.bf16.mxu0 %v1084
        %1492 = vmatmul.mubr.bf16.gmra.mxu0 %v1083
        %v1493 = vpop.f32.mrf.mxu0
        %v1494 = vadd.f32 0.0, %v1493
        %v1495 = vpop.f32.mrf.mxu0
        %v1496 = vadd.f32 0.0, %v1495
        %v1497 = vpop.f32.mrf.mxu0
        %v1498 = vadd.f32 0.0, %v1497
        %v1499 = vpop.f32.mrf.mxu0
        %v1500 = vadd.f32 0.0, %v1499
        %1501 = vmatprep.mubr.bf16.mxu0 %v1088
        %1502 = vmatmul.mubr.bf16.gmra.mxu0 %v1087
        %v1503 = vpop.f32.mrf.mxu0
        %v1504 = vadd.f32 0.0, %v1503
        %v1505 = vpop.f32.mrf.mxu0
        %v1506 = vadd.f32 0.0, %v1505
        %v1507 = vpop.f32.mrf.mxu0
        %v1508 = vadd.f32 0.0, %v1507
        %v1509 = vpop.f32.mrf.mxu0
        %v1510 = vadd.f32 0.0, %v1509
        %1511 = vmatprep.mubr.bf16.mxu0 %v1092
        %1512 = vmatmul.mubr.bf16.gmra.mxu0 %v1091
        %v1513 = vpop.f32.mrf.mxu0
        %v1514 = vadd.f32 0.0, %v1513
        %v1515 = vpop.f32.mrf.mxu0
        %v1516 = vadd.f32 0.0, %v1515
        %v1517 = vpop.f32.mrf.mxu0
        %v1518 = vadd.f32 0.0, %v1517
        %v1519 = vpop.f32.mrf.mxu0
        %v1520 = vadd.f32 0.0, %v1519
        %1521 = vmatprep.mubr.bf16.mxu0 %v1096
        %1522 = vmatmul.mubr.bf16.gmra.mxu0 %v1095
        %v1523 = vpop.f32.mrf.mxu0
        %v1524 = vadd.f32 0.0, %v1523
        %v1525 = vpop.f32.mrf.mxu0
        %v1526 = vadd.f32 0.0, %v1525
        %v1527 = vpop.f32.mrf.mxu0
        %v1528 = vadd.f32 0.0, %v1527
        %v1529 = vpop.f32.mrf.mxu0
        %v1530 = vadd.f32 0.0, %v1529
        %1531 = vmatprep.mubr.bf16.mxu0 %v1100
        %1532 = vmatmul.mubr.bf16.gmra.mxu0 %v1099
        %v1533 = vpop.f32.mrf.mxu0
        %v1534 = vadd.f32 0.0, %v1533
        %v1535 = vpop.f32.mrf.mxu0
        %v1536 = vadd.f32 0.0, %v1535
        %v1537 = vpop.f32.mrf.mxu0
        %v1538 = vadd.f32 0.0, %v1537
        %v1539 = vpop.f32.mrf.mxu0
        %v1540 = vadd.f32 0.0, %v1539
        %1541 = vmatprep.mubr.bf16.mxu0 %v1104
        %1542 = vmatmul.mubr.bf16.gmra.mxu0 %v1103
        %v1543 = vpop.f32.mrf.mxu0
        %v1544 = vadd.f32 0.0, %v1543
        %v1545 = vpop.f32.mrf.mxu0
        %v1546 = vadd.f32 0.0, %v1545
        %v1547 = vpop.f32.mrf.mxu0
        %v1548 = vadd.f32 0.0, %v1547
        %v1549 = vpop.f32.mrf.mxu0
        %v1550 = vadd.f32 0.0, %v1549
        %1551 = vmatprep.mubr.bf16.mxu0 %v1108
        %1552 = vmatmul.mubr.bf16.gmra.mxu0 %v1107
        %v1553 = vpop.f32.mrf.mxu0
        %v1554 = vadd.f32 0.0, %v1553
        %v1555 = vpop.f32.mrf.mxu0
        %v1556 = vadd.f32 0.0, %v1555
        %v1557 = vpop.f32.mrf.mxu0
        %v1558 = vadd.f32 0.0, %v1557
        %v1559 = vpop.f32.mrf.mxu0
        %v1560 = vadd.f32 0.0, %v1559
        %1561 = vmatprep.mubr.bf16.mxu0 %v1112
        %1562 = vmatmul.mubr.bf16.gmra.mxu0 %v1111
        %v1563 = vpop.f32.mrf.mxu0
        %v1564 = vadd.f32 0.0, %v1563
        %v1565 = vpop.f32.mrf.mxu0
        %v1566 = vadd.f32 0.0, %v1565
        %v1567 = vpop.f32.mrf.mxu0
        %v1568 = vadd.f32 0.0, %v1567
        %v1569 = vpop.f32.mrf.mxu0
        %v1570 = vadd.f32 0.0, %v1569
        %1571 = vmatprep.mubr.bf16.mxu0 %v1116
        %1572 = vmatmul.mubr.bf16.gmra.mxu0 %v1115
        %v1573 = vpop.f32.mrf.mxu0
        %v1574 = vadd.f32 0.0, %v1573
        %v1575 = vpop.f32.mrf.mxu0
        %v1576 = vadd.f32 0.0, %v1575
        %v1577 = vpop.f32.mrf.mxu0
        %v1578 = vadd.f32 0.0, %v1577
        %v1579 = vpop.f32.mrf.mxu0
        %v1580 = vadd.f32 0.0, %v1579
        %1581 = vmatprep.mubr.bf16.mxu0 %v1120
        %1582 = vmatmul.mubr.bf16.gmra.mxu0 %v1119
        %v1583 = vpop.f32.mrf.mxu0
        %v1584 = vadd.f32 0.0, %v1583
        %v1585 = vpop.f32.mrf.mxu0
        %v1586 = vadd.f32 0.0, %v1585
        %v1587 = vpop.f32.mrf.mxu0
        %v1588 = vadd.f32 0.0, %v1587
        %v1589 = vpop.f32.mrf.mxu0
        %v1590 = vadd.f32 0.0, %v1589
        %1591 = vmatprep.mubr.bf16.mxu0 %v1124
        %1592 = vmatmul.mubr.bf16.gmra.mxu0 %v1123
        %v1593 = vpop.f32.mrf.mxu0
        %v1594 = vadd.f32 0.0, %v1593
        %v1595 = vpop.f32.mrf.mxu0
        %v1596 = vadd.f32 0.0, %v1595
        %v1597 = vpop.f32.mrf.mxu0
        %v1598 = vadd.f32 0.0, %v1597
        %v1599 = vpop.f32.mrf.mxu0
        %v1600 = vadd.f32 0.0, %v1599
        %1601 = vmatprep.mubr.bf16.mxu0 %v1128
        %1602 = vmatmul.mubr.bf16.gmra.mxu0 %v1127
        %v1603 = vpop.f32.mrf.mxu0
        %v1604 = vadd.f32 0.0, %v1603
        %v1605 = vpop.f32.mrf.mxu0
        %v1606 = vadd.f32 0.0, %v1605
        %v1607 = vpop.f32.mrf.mxu0
        %v1608 = vadd.f32 0.0, %v1607
        %v1609 = vpop.f32.mrf.mxu0
        %v1610 = vadd.f32 0.0, %v1609
        %1611 = vdwg.mxu0
        %1612 = vmatprep.subr.bf16.mxu0 %v474
        %1613 = vmatpush1.bf16.msra.mxu0 %v473
        %1614 = vmatprep.subr.bf16.mxu0 %v472
        %1615 = vmatpush1.bf16.msra.mxu0 %v471
        %1616 = vmatprep.subr.bf16.mxu0 %v470
        %1617 = vmatpush1.bf16.msra.mxu0 %v469
        %1618 = vmatprep.subr.bf16.mxu0 %v468
        %1619 = vmatpush1.bf16.msra.mxu0 %v467
        %1620 = vmatprep.subr.bf16.mxu0 %v466
        %1621 = vmatpush1.bf16.msra.mxu0 %v465
        %1622 = vmatprep.subr.bf16.mxu0 %v464
        %1623 = vmatpush1.bf16.msra.mxu0 %v463
        %1624 = vmatprep.subr.bf16.mxu0 %v462
        %1625 = vmatpush1.bf16.msra.mxu0 %v461
        %1626 = vmatprep.subr.bf16.mxu0 %v460
        %1627 = vmatpush1.bf16.msra.mxu0 %v459
        %1628 = vmatprep.subr.bf16.mxu0 %v490
        %1629 = vmatpush2.bf16.msra.mxu0 %v489
        %1630 = vmatprep.subr.bf16.mxu0 %v488
        %1631 = vmatpush2.bf16.msra.mxu0 %v487
        %1632 = vmatprep.subr.bf16.mxu0 %v486
        %1633 = vmatpush2.bf16.msra.mxu0 %v485
        %1634 = vmatprep.subr.bf16.mxu0 %v484
        %1635 = vmatpush2.bf16.msra.mxu0 %v483
        %1636 = vmatprep.subr.bf16.mxu0 %v482
        %1637 = vmatpush2.bf16.msra.mxu0 %v481
        %1638 = vmatprep.subr.bf16.mxu0 %v480
        %1639 = vmatpush2.bf16.msra.mxu0 %v479
        %1640 = vmatprep.subr.bf16.mxu0 %v478
        %1641 = vmatpush2.bf16.msra.mxu0 %v477
        %1642 = vmatprep.subr.bf16.mxu0 %v476
        %1643 = vmatpush2.bf16.msra.mxu0 %v475
        %1644 = vmatprep.mubr.bf16.mxu0 %v1006
        %1645 = vmatmul.mubr.bf16.gmra.mxu0 %v1005
        %v1646 = vpop.f32.mrf.mxu0
        %v1647 = vadd.f32 %v1294, %v1646
        %v1648 = vpop.f32.mrf.mxu0
        %v1649 = vadd.f32 %v1296, %v1648
        %v1650 = vpop.f32.mrf.mxu0
        %v1651 = vadd.f32 %v1298, %v1650
        %v1652 = vpop.f32.mrf.mxu0
        %v1653 = vadd.f32 %v1300, %v1652
        %1654 = vmatprep.mubr.bf16.mxu0 %v1010
        %1655 = vmatmul.mubr.bf16.gmra.mxu0 %v1009
        %v1656 = vpop.f32.mrf.mxu0
        %v1657 = vadd.f32 %v1304, %v1656
        %v1658 = vpop.f32.mrf.mxu0
        %v1659 = vadd.f32 %v1306, %v1658
        %v1660 = vpop.f32.mrf.mxu0
        %v1661 = vadd.f32 %v1308, %v1660
        %v1662 = vpop.f32.mrf.mxu0
        %v1663 = vadd.f32 %v1310, %v1662
        %1664 = vmatprep.mubr.bf16.mxu0 %v1014
        %1665 = vmatmul.mubr.bf16.gmra.mxu0 %v1013
        %v1666 = vpop.f32.mrf.mxu0
        %v1667 = vadd.f32 %v1314, %v1666
        %v1668 = vpop.f32.mrf.mxu0
        %v1669 = vadd.f32 %v1316, %v1668
        %v1670 = vpop.f32.mrf.mxu0
        %v1671 = vadd.f32 %v1318, %v1670
        %v1672 = vpop.f32.mrf.mxu0
        %v1673 = vadd.f32 %v1320, %v1672
        %1674 = vmatprep.mubr.bf16.mxu0 %v1018
        %1675 = vmatmul.mubr.bf16.gmra.mxu0 %v1017
        %v1676 = vpop.f32.mrf.mxu0
        %v1677 = vadd.f32 %v1324, %v1676
        %v1678 = vpop.f32.mrf.mxu0
        %v1679 = vadd.f32 %v1326, %v1678
        %v1680 = vpop.f32.mrf.mxu0
        %v1681 = vadd.f32 %v1328, %v1680
        %v1682 = vpop.f32.mrf.mxu0
        %v1683 = vadd.f32 %v1330, %v1682
        %1684 = vmatprep.mubr.bf16.mxu0 %v1022
        %1685 = vmatmul.mubr.bf16.gmra.mxu0 %v1021
        %v1686 = vpop.f32.mrf.mxu0
        %v1687 = vadd.f32 %v1334, %v1686
        %v1688 = vpop.f32.mrf.mxu0
        %v1689 = vadd.f32 %v1336, %v1688
        %v1690 = vpop.f32.mrf.mxu0
        %v1691 = vadd.f32 %v1338, %v1690
        %v1692 = vpop.f32.mrf.mxu0
        %v1693 = vadd.f32 %v1340, %v1692
        %1694 = vmatprep.mubr.bf16.mxu0 %v1026
        %1695 = vmatmul.mubr.bf16.gmra.mxu0 %v1025
        %v1696 = vpop.f32.mrf.mxu0
        %v1697 = vadd.f32 %v1344, %v1696
        %v1698 = vpop.f32.mrf.mxu0
        %v1699 = vadd.f32 %v1346, %v1698
        %v1700 = vpop.f32.mrf.mxu0
        %v1701 = vadd.f32 %v1348, %v1700
        %v1702 = vpop.f32.mrf.mxu0
        %v1703 = vadd.f32 %v1350, %v1702
        %1704 = vmatprep.mubr.bf16.mxu0 %v1030
        %1705 = vmatmul.mubr.bf16.gmra.mxu0 %v1029
        %v1706 = vpop.f32.mrf.mxu0
        %v1707 = vadd.f32 %v1354, %v1706
        %v1708 = vpop.f32.mrf.mxu0
        %v1709 = vadd.f32 %v1356, %v1708
        %v1710 = vpop.f32.mrf.mxu0
        %v1711 = vadd.f32 %v1358, %v1710
        %v1712 = vpop.f32.mrf.mxu0
        %v1713 = vadd.f32 %v1360, %v1712
        %1714 = vmatprep.mubr.bf16.mxu0 %v1034
        %1715 = vmatmul.mubr.bf16.gmra.mxu0 %v1033
        %v1716 = vpop.f32.mrf.mxu0
        %v1717 = vadd.f32 %v1364, %v1716
        %v1718 = vpop.f32.mrf.mxu0
        %v1719 = vadd.f32 %v1366, %v1718
        %v1720 = vpop.f32.mrf.mxu0
        %v1721 = vadd.f32 %v1368, %v1720
        %v1722 = vpop.f32.mrf.mxu0
        %v1723 = vadd.f32 %v1370, %v1722
        %1724 = vmatprep.mubr.bf16.mxu0 %v1038
        %1725 = vmatmul.mubr.bf16.gmra.mxu0 %v1037
        %v1726 = vpop.f32.mrf.mxu0
        %v1727 = vadd.f32 %v1374, %v1726
        %v1728 = vpop.f32.mrf.mxu0
        %v1729 = vadd.f32 %v1376, %v1728
        %v1730 = vpop.f32.mrf.mxu0
        %v1731 = vadd.f32 %v1378, %v1730
        %v1732 = vpop.f32.mrf.mxu0
        %v1733 = vadd.f32 %v1380, %v1732
        %1734 = vmatprep.mubr.bf16.mxu0 %v1042
        %1735 = vmatmul.mubr.bf16.gmra.mxu0 %v1041
        %v1736 = vpop.f32.mrf.mxu0
        %v1737 = vadd.f32 %v1384, %v1736
        %v1738 = vpop.f32.mrf.mxu0
        %v1739 = vadd.f32 %v1386, %v1738
        %v1740 = vpop.f32.mrf.mxu0
        %v1741 = vadd.f32 %v1388, %v1740
        %v1742 = vpop.f32.mrf.mxu0
        %v1743 = vadd.f32 %v1390, %v1742
        %1744 = vmatprep.mubr.bf16.mxu0 %v1046
        %1745 = vmatmul.mubr.bf16.gmra.mxu0 %v1045
        %v1746 = vpop.f32.mrf.mxu0
        %v1747 = vadd.f32 %v1394, %v1746
        %v1748 = vpop.f32.mrf.mxu0
        %v1749 = vadd.f32 %v1396, %v1748
        %v1750 = vpop.f32.mrf.mxu0
        %v1751 = vadd.f32 %v1398, %v1750
        %v1752 = vpop.f32.mrf.mxu0
        %v1753 = vadd.f32 %v1400, %v1752
        %1754 = vmatprep.mubr.bf16.mxu0 %v1050
        %1755 = vmatmul.mubr.bf16.gmra.mxu0 %v1049
        %v1756 = vpop.f32.mrf.mxu0
        %v1757 = vadd.f32 %v1404, %v1756
        %v1758 = vpop.f32.mrf.mxu0
        %v1759 = vadd.f32 %v1406, %v1758
        %v1760 = vpop.f32.mrf.mxu0
        %v1761 = vadd.f32 %v1408, %v1760
        %v1762 = vpop.f32.mrf.mxu0
        %v1763 = vadd.f32 %v1410, %v1762
        %1764 = vmatprep.mubr.bf16.mxu0 %v1054
        %1765 = vmatmul.mubr.bf16.gmra.mxu0 %v1053
        %v1766 = vpop.f32.mrf.mxu0
        %v1767 = vadd.f32 %v1414, %v1766
        %v1768 = vpop.f32.mrf.mxu0
        %v1769 = vadd.f32 %v1416, %v1768
        %v1770 = vpop.f32.mrf.mxu0
        %v1771 = vadd.f32 %v1418, %v1770
        %v1772 = vpop.f32.mrf.mxu0
        %v1773 = vadd.f32 %v1420, %v1772
        %1774 = vmatprep.mubr.bf16.mxu0 %v1058
        %1775 = vmatmul.mubr.bf16.gmra.mxu0 %v1057
        %v1776 = vpop.f32.mrf.mxu0
        %v1777 = vadd.f32 %v1424, %v1776
        %v1778 = vpop.f32.mrf.mxu0
        %v1779 = vadd.f32 %v1426, %v1778
        %v1780 = vpop.f32.mrf.mxu0
        %v1781 = vadd.f32 %v1428, %v1780
        %v1782 = vpop.f32.mrf.mxu0
        %v1783 = vadd.f32 %v1430, %v1782
        %1784 = vmatprep.mubr.bf16.mxu0 %v1062
        %1785 = vmatmul.mubr.bf16.gmra.mxu0 %v1061
        %v1786 = vpop.f32.mrf.mxu0
        %v1787 = vadd.f32 %v1434, %v1786
        %v1788 = vpop.f32.mrf.mxu0
        %v1789 = vadd.f32 %v1436, %v1788
        %v1790 = vpop.f32.mrf.mxu0
        %v1791 = vadd.f32 %v1438, %v1790
        %v1792 = vpop.f32.mrf.mxu0
        %v1793 = vadd.f32 %v1440, %v1792
        %1794 = vmatprep.mubr.bf16.mxu0 %v1066
        %1795 = vmatmul.mubr.bf16.gmra.mxu0 %v1065
        %v1796 = vpop.f32.mrf.mxu0
        %v1797 = vadd.f32 %v1444, %v1796
        %v1798 = vpop.f32.mrf.mxu0
        %v1799 = vadd.f32 %v1446, %v1798
        %v1800 = vpop.f32.mrf.mxu0
        %v1801 = vadd.f32 %v1448, %v1800
        %v1802 = vpop.f32.mrf.mxu0
        %v1803 = vadd.f32 %v1450, %v1802
        %1804 = vmatprep.mubr.bf16.mxu0 %v1070
        %1805 = vmatmul.mubr.bf16.gmra.mxu0 %v1069
        %v1806 = vpop.f32.mrf.mxu0
        %v1807 = vadd.f32 %v1454, %v1806
        %v1808 = vpop.f32.mrf.mxu0
        %v1809 = vadd.f32 %v1456, %v1808
        %v1810 = vpop.f32.mrf.mxu0
        %v1811 = vadd.f32 %v1458, %v1810
        %v1812 = vpop.f32.mrf.mxu0
        %v1813 = vadd.f32 %v1460, %v1812
        %1814 = vmatprep.mubr.bf16.mxu0 %v1074
        %1815 = vmatmul.mubr.bf16.gmra.mxu0 %v1073
        %v1816 = vpop.f32.mrf.mxu0
        %v1817 = vadd.f32 %v1464, %v1816
        %v1818 = vpop.f32.mrf.mxu0
        %v1819 = vadd.f32 %v1466, %v1818
        %v1820 = vpop.f32.mrf.mxu0
        %v1821 = vadd.f32 %v1468, %v1820
        %v1822 = vpop.f32.mrf.mxu0
        %v1823 = vadd.f32 %v1470, %v1822
        %1824 = vmatprep.mubr.bf16.mxu0 %v1078
        %1825 = vmatmul.mubr.bf16.gmra.mxu0 %v1077
        %v1826 = vpop.f32.mrf.mxu0
        %v1827 = vadd.f32 %v1474, %v1826
        %v1828 = vpop.f32.mrf.mxu0
        %v1829 = vadd.f32 %v1476, %v1828
        %v1830 = vpop.f32.mrf.mxu0
        %v1831 = vadd.f32 %v1478, %v1830
        %v1832 = vpop.f32.mrf.mxu0
        %v1833 = vadd.f32 %v1480, %v1832
        %1834 = vmatprep.mubr.bf16.mxu0 %v1082
        %1835 = vmatmul.mubr.bf16.gmra.mxu0 %v1081
        %v1836 = vpop.f32.mrf.mxu0
        %v1837 = vadd.f32 %v1484, %v1836
        %v1838 = vpop.f32.mrf.mxu0
        %v1839 = vadd.f32 %v1486, %v1838
        %v1840 = vpop.f32.mrf.mxu0
        %v1841 = vadd.f32 %v1488, %v1840
        %v1842 = vpop.f32.mrf.mxu0
        %v1843 = vadd.f32 %v1490, %v1842
        %1844 = vmatprep.mubr.bf16.mxu0 %v1086
        %1845 = vmatmul.mubr.bf16.gmra.mxu0 %v1085
        %v1846 = vpop.f32.mrf.mxu0
        %v1847 = vadd.f32 %v1494, %v1846
        %v1848 = vpop.f32.mrf.mxu0
        %v1849 = vadd.f32 %v1496, %v1848
        %v1850 = vpop.f32.mrf.mxu0
        %v1851 = vadd.f32 %v1498, %v1850
        %v1852 = vpop.f32.mrf.mxu0
        %v1853 = vadd.f32 %v1500, %v1852
        %1854 = vmatprep.mubr.bf16.mxu0 %v1090
        %1855 = vmatmul.mubr.bf16.gmra.mxu0 %v1089
        %v1856 = vpop.f32.mrf.mxu0
        %v1857 = vadd.f32 %v1504, %v1856
        %v1858 = vpop.f32.mrf.mxu0
        %v1859 = vadd.f32 %v1506, %v1858
        %v1860 = vpop.f32.mrf.mxu0
        %v1861 = vadd.f32 %v1508, %v1860
        %v1862 = vpop.f32.mrf.mxu0
        %v1863 = vadd.f32 %v1510, %v1862
        %1864 = vmatprep.mubr.bf16.mxu0 %v1094
        %1865 = vmatmul.mubr.bf16.gmra.mxu0 %v1093
        %v1866 = vpop.f32.mrf.mxu0
        %v1867 = vadd.f32 %v1514, %v1866
        %v1868 = vpop.f32.mrf.mxu0
        %v1869 = vadd.f32 %v1516, %v1868
        %v1870 = vpop.f32.mrf.mxu0
        %v1871 = vadd.f32 %v1518, %v1870
        %v1872 = vpop.f32.mrf.mxu0
        %v1873 = vadd.f32 %v1520, %v1872
        %1874 = vmatprep.mubr.bf16.mxu0 %v1098
        %1875 = vmatmul.mubr.bf16.gmra.mxu0 %v1097
        %v1876 = vpop.f32.mrf.mxu0
        %v1877 = vadd.f32 %v1524, %v1876
        %v1878 = vpop.f32.mrf.mxu0
        %v1879 = vadd.f32 %v1526, %v1878
        %v1880 = vpop.f32.mrf.mxu0
        %v1881 = vadd.f32 %v1528, %v1880
        %v1882 = vpop.f32.mrf.mxu0
        %v1883 = vadd.f32 %v1530, %v1882
        %1884 = vmatprep.mubr.bf16.mxu0 %v1102
        %1885 = vmatmul.mubr.bf16.gmra.mxu0 %v1101
        %v1886 = vpop.f32.mrf.mxu0
        %v1887 = vadd.f32 %v1534, %v1886
        %v1888 = vpop.f32.mrf.mxu0
        %v1889 = vadd.f32 %v1536, %v1888
        %v1890 = vpop.f32.mrf.mxu0
        %v1891 = vadd.f32 %v1538, %v1890
        %v1892 = vpop.f32.mrf.mxu0
        %v1893 = vadd.f32 %v1540, %v1892
        %1894 = vmatprep.mubr.bf16.mxu0 %v1106
        %1895 = vmatmul.mubr.bf16.gmra.mxu0 %v1105
        %v1896 = vpop.f32.mrf.mxu0
        %v1897 = vadd.f32 %v1544, %v1896
        %v1898 = vpop.f32.mrf.mxu0
        %v1899 = vadd.f32 %v1546, %v1898
        %v1900 = vpop.f32.mrf.mxu0
        %v1901 = vadd.f32 %v1548, %v1900
        %v1902 = vpop.f32.mrf.mxu0
        %v1903 = vadd.f32 %v1550, %v1902
        %1904 = vmatprep.mubr.bf16.mxu0 %v1110
        %1905 = vmatmul.mubr.bf16.gmra.mxu0 %v1109
        %v1906 = vpop.f32.mrf.mxu0
        %v1907 = vadd.f32 %v1554, %v1906
        %v1908 = vpop.f32.mrf.mxu0
        %v1909 = vadd.f32 %v1556, %v1908
        %v1910 = vpop.f32.mrf.mxu0
        %v1911 = vadd.f32 %v1558, %v1910
        %v1912 = vpop.f32.mrf.mxu0
        %v1913 = vadd.f32 %v1560, %v1912
        %1914 = vmatprep.mubr.bf16.mxu0 %v1114
        %1915 = vmatmul.mubr.bf16.gmra.mxu0 %v1113
        %v1916 = vpop.f32.mrf.mxu0
        %v1917 = vadd.f32 %v1564, %v1916
        %v1918 = vpop.f32.mrf.mxu0
        %v1919 = vadd.f32 %v1566, %v1918
        %v1920 = vpop.f32.mrf.mxu0
        %v1921 = vadd.f32 %v1568, %v1920
        %v1922 = vpop.f32.mrf.mxu0
        %v1923 = vadd.f32 %v1570, %v1922
        %1924 = vmatprep.mubr.bf16.mxu0 %v1118
        %1925 = vmatmul.mubr.bf16.gmra.mxu0 %v1117
        %v1926 = vpop.f32.mrf.mxu0
        %v1927 = vadd.f32 %v1574, %v1926
        %v1928 = vpop.f32.mrf.mxu0
        %v1929 = vadd.f32 %v1576, %v1928
        %v1930 = vpop.f32.mrf.mxu0
        %v1931 = vadd.f32 %v1578, %v1930
        %v1932 = vpop.f32.mrf.mxu0
        %v1933 = vadd.f32 %v1580, %v1932
        %1934 = vmatprep.mubr.bf16.mxu0 %v1122
        %1935 = vmatmul.mubr.bf16.gmra.mxu0 %v1121
        %v1936 = vpop.f32.mrf.mxu0
        %v1937 = vadd.f32 %v1584, %v1936
        %v1938 = vpop.f32.mrf.mxu0
        %v1939 = vadd.f32 %v1586, %v1938
        %v1940 = vpop.f32.mrf.mxu0
        %v1941 = vadd.f32 %v1588, %v1940
        %v1942 = vpop.f32.mrf.mxu0
        %v1943 = vadd.f32 %v1590, %v1942
        %1944 = vmatprep.mubr.bf16.mxu0 %v1126
        %1945 = vmatmul.mubr.bf16.gmra.mxu0 %v1125
        %v1946 = vpop.f32.mrf.mxu0
        %v1947 = vadd.f32 %v1594, %v1946
        %v1948 = vpop.f32.mrf.mxu0
        %v1949 = vadd.f32 %v1596, %v1948
        %v1950 = vpop.f32.mrf.mxu0
        %v1951 = vadd.f32 %v1598, %v1950
        %v1952 = vpop.f32.mrf.mxu0
        %v1953 = vadd.f32 %v1600, %v1952
        %1954 = vmatprep.mubr.bf16.mxu0 %v1130
        %1955 = vmatmul.mubr.bf16.gmra.mxu0 %v1129
        %v1956 = vpop.f32.mrf.mxu0
        %v1957 = vadd.f32 %v1604, %v1956
        %v1958 = vpop.f32.mrf.mxu0
        %v1959 = vadd.f32 %v1606, %v1958
        %v1960 = vpop.f32.mrf.mxu0
        %v1961 = vadd.f32 %v1608, %v1960
        %v1962 = vpop.f32.mrf.mxu0
        %v1963 = vadd.f32 %v1610, %v1962
        %1964 = vdwg.mxu0
        %v1965 = vmax.f32 %v1647, 0.0
        %v1966 = vmax.f32 %v1649, 0.0
        %v1967 = vmax.f32 %v1651, 0.0
        %v1968 = vmax.f32 %v1653, 0.0
        %v1969 = vmax.f32 %v1657, 0.0
        %v1970 = vmax.f32 %v1659, 0.0
        %v1971 = vmax.f32 %v1661, 0.0
        %v1972 = vmax.f32 %v1663, 0.0
        %v1973 = vmax.f32 %v1667, 0.0
        %v1974 = vmax.f32 %v1669, 0.0
        %v1975 = vmax.f32 %v1671, 0.0
        %v1976 = vmax.f32 %v1673, 0.0
        %v1977 = vmax.f32 %v1677, 0.0
        %v1978 = vmax.f32 %v1679, 0.0
        %v1979 = vmax.f32 %v1681, 0.0
        %v1980 = vmax.f32 %v1683, 0.0
        %v1981 = vmax.f32 %v1687, 0.0
        %v1982 = vmax.f32 %v1689, 0.0
        %v1983 = vmax.f32 %v1691, 0.0
        %v1984 = vmax.f32 %v1693, 0.0
        %v1985 = vmax.f32 %v1697, 0.0
        %v1986 = vmax.f32 %v1699, 0.0
        %v1987 = vmax.f32 %v1701, 0.0
        %v1988 = vmax.f32 %v1703, 0.0
        %v1989 = vmax.f32 %v1707, 0.0
        %v1990 = vmax.f32 %v1709, 0.0
        %v1991 = vmax.f32 %v1711, 0.0
        %v1992 = vmax.f32 %v1713, 0.0
        %v1993 = vmax.f32 %v1717, 0.0
        %v1994 = vmax.f32 %v1719, 0.0
        %v1995 = vmax.f32 %v1721, 0.0
        %v1996 = vmax.f32 %v1723, 0.0
        %v1997 = vmax.f32 %v1727, 0.0
        %v1998 = vmax.f32 %v1729, 0.0
        %v1999 = vmax.f32 %v1731, 0.0
        %v2000 = vmax.f32 %v1733, 0.0
        %v2001 = vmax.f32 %v1737, 0.0
        %v2002 = vmax.f32 %v1739, 0.0
        %v2003 = vmax.f32 %v1741, 0.0
        %v2004 = vmax.f32 %v1743, 0.0
        %v2005 = vmax.f32 %v1747, 0.0
        %v2006 = vmax.f32 %v1749, 0.0
        %v2007 = vmax.f32 %v1751, 0.0
        %v2008 = vmax.f32 %v1753, 0.0
        %v2009 = vmax.f32 %v1757, 0.0
        %v2010 = vmax.f32 %v1759, 0.0
        %v2011 = vmax.f32 %v1761, 0.0
        %v2012 = vmax.f32 %v1763, 0.0
        %v2013 = vmax.f32 %v1767, 0.0
        %v2014 = vmax.f32 %v1769, 0.0
        %v2015 = vmax.f32 %v1771, 0.0
        %v2016 = vmax.f32 %v1773, 0.0
        %v2017 = vmax.f32 %v1777, 0.0
        %v2018 = vmax.f32 %v1779, 0.0
        %v2019 = vmax.f32 %v1781, 0.0
        %v2020 = vmax.f32 %v1783, 0.0
        %v2021 = vmax.f32 %v1787, 0.0
        %v2022 = vmax.f32 %v1789, 0.0
        %v2023 = vmax.f32 %v1791, 0.0
        %v2024 = vmax.f32 %v1793, 0.0
        %v2025 = vmax.f32 %v1797, 0.0
        %v2026 = vmax.f32 %v1799, 0.0
        %v2027 = vmax.f32 %v1801, 0.0
        %v2028 = vmax.f32 %v1803, 0.0
        %v2029 = vmax.f32 %v1807, 0.0
        %v2030 = vmax.f32 %v1809, 0.0
        %v2031 = vmax.f32 %v1811, 0.0
        %v2032 = vmax.f32 %v1813, 0.0
        %v2033 = vmax.f32 %v1817, 0.0
        %v2034 = vmax.f32 %v1819, 0.0
        %v2035 = vmax.f32 %v1821, 0.0
        %v2036 = vmax.f32 %v1823, 0.0
        %v2037 = vmax.f32 %v1827, 0.0
        %v2038 = vmax.f32 %v1829, 0.0
        %v2039 = vmax.f32 %v1831, 0.0
        %v2040 = vmax.f32 %v1833, 0.0
        %v2041 = vmax.f32 %v1837, 0.0
        %v2042 = vmax.f32 %v1839, 0.0
        %v2043 = vmax.f32 %v1841, 0.0
        %v2044 = vmax.f32 %v1843, 0.0
        %v2045 = vmax.f32 %v1847, 0.0
        %v2046 = vmax.f32 %v1849, 0.0
        %v2047 = vmax.f32 %v1851, 0.0
        %v2048 = vmax.f32 %v1853, 0.0
        %v2049 = vmax.f32 %v1857, 0.0
        %v2050 = vmax.f32 %v1859, 0.0
        %v2051 = vmax.f32 %v1861, 0.0
        %v2052 = vmax.f32 %v1863, 0.0
        %v2053 = vmax.f32 %v1867, 0.0
        %v2054 = vmax.f32 %v1869, 0.0
        %v2055 = vmax.f32 %v1871, 0.0
        %v2056 = vmax.f32 %v1873, 0.0
        %v2057 = vmax.f32 %v1877, 0.0
        %v2058 = vmax.f32 %v1879, 0.0
        %v2059 = vmax.f32 %v1881, 0.0
        %v2060 = vmax.f32 %v1883, 0.0
        %v2061 = vmax.f32 %v1887, 0.0
        %v2062 = vmax.f32 %v1889, 0.0
        %v2063 = vmax.f32 %v1891, 0.0
        %v2064 = vmax.f32 %v1893, 0.0
        %v2065 = vmax.f32 %v1897, 0.0
        %v2066 = vmax.f32 %v1899, 0.0
        %v2067 = vmax.f32 %v1901, 0.0
        %v2068 = vmax.f32 %v1903, 0.0
        %v2069 = vmax.f32 %v1907, 0.0
        %v2070 = vmax.f32 %v1909, 0.0
        %v2071 = vmax.f32 %v1911, 0.0
        %v2072 = vmax.f32 %v1913, 0.0
        %v2073 = vmax.f32 %v1917, 0.0
        %v2074 = vmax.f32 %v1919, 0.0
        %v2075 = vmax.f32 %v1921, 0.0
        %v2076 = vmax.f32 %v1923, 0.0
        %v2077 = vmax.f32 %v1927, 0.0
        %v2078 = vmax.f32 %v1929, 0.0
        %v2079 = vmax.f32 %v1931, 0.0
        %v2080 = vmax.f32 %v1933, 0.0
        %v2081 = vmax.f32 %v1937, 0.0
        %v2082 = vmax.f32 %v1939, 0.0
        %v2083 = vmax.f32 %v1941, 0.0
        %v2084 = vmax.f32 %v1943, 0.0
        %v2085 = vmax.f32 %v1947, 0.0
        %v2086 = vmax.f32 %v1949, 0.0
        %v2087 = vmax.f32 %v1951, 0.0
        %v2088 = vmax.f32 %v1953, 0.0
        %v2089 = vmax.f32 %v1957, 0.0
        %v2090 = vmax.f32 %v1959, 0.0
        %v2091 = vmax.f32 %v1961, 0.0
        %v2092 = vmax.f32 %v1963, 0.0
        %v2093 = vpack.c.bf16 %v1967, %v1965
        %v2094 = vpack.c.bf16 %v1968, %v1966
        %v2095 = vpack.c.bf16 %v1971, %v1969
        %v2096 = vpack.c.bf16 %v1972, %v1970
        %v2097 = vpack.c.bf16 %v1975, %v1973
        %v2098 = vpack.c.bf16 %v1976, %v1974
        %v2099 = vpack.c.bf16 %v1979, %v1977
        %v2100 = vpack.c.bf16 %v1980, %v1978
        %v2101 = vpack.c.bf16 %v1983, %v1981
        %v2102 = vpack.c.bf16 %v1984, %v1982
        %v2103 = vpack.c.bf16 %v1987, %v1985
        %v2104 = vpack.c.bf16 %v1988, %v1986
        %v2105 = vpack.c.bf16 %v1991, %v1989
        %v2106 = vpack.c.bf16 %v1992, %v1990
        %v2107 = vpack.c.bf16 %v1995, %v1993
        %v2108 = vpack.c.bf16 %v1996, %v1994
        %v2109 = vpack.c.bf16 %v1999, %v1997
        %v2110 = vpack.c.bf16 %v2000, %v1998
        %v2111 = vpack.c.bf16 %v2003, %v2001
        %v2112 = vpack.c.bf16 %v2004, %v2002
        %v2113 = vpack.c.bf16 %v2007, %v2005
        %v2114 = vpack.c.bf16 %v2008, %v2006
        %v2115 = vpack.c.bf16 %v2011, %v2009
        %v2116 = vpack.c.bf16 %v2012, %v2010
        %v2117 = vpack.c.bf16 %v2015, %v2013
        %v2118 = vpack.c.bf16 %v2016, %v2014
        %v2119 = vpack.c.bf16 %v2019, %v2017
        %v2120 = vpack.c.bf16 %v2020, %v2018
        %v2121 = vpack.c.bf16 %v2023, %v2021
        %v2122 = vpack.c.bf16 %v2024, %v2022
        %v2123 = vpack.c.bf16 %v2027, %v2025
        %v2124 = vpack.c.bf16 %v2028, %v2026
        %v2125 = vpack.c.bf16 %v2031, %v2029
        %v2126 = vpack.c.bf16 %v2032, %v2030
        %v2127 = vpack.c.bf16 %v2035, %v2033
        %v2128 = vpack.c.bf16 %v2036, %v2034
        %v2129 = vpack.c.bf16 %v2039, %v2037
        %v2130 = vpack.c.bf16 %v2040, %v2038
        %v2131 = vpack.c.bf16 %v2043, %v2041
        %v2132 = vpack.c.bf16 %v2044, %v2042
        %v2133 = vpack.c.bf16 %v2047, %v2045
        %v2134 = vpack.c.bf16 %v2048, %v2046
        %v2135 = vpack.c.bf16 %v2051, %v2049
        %v2136 = vpack.c.bf16 %v2052, %v2050
        %v2137 = vpack.c.bf16 %v2055, %v2053
        %v2138 = vpack.c.bf16 %v2056, %v2054
        %v2139 = vpack.c.bf16 %v2059, %v2057
        %v2140 = vpack.c.bf16 %v2060, %v2058
        %v2141 = vpack.c.bf16 %v2063, %v2061
        %v2142 = vpack.c.bf16 %v2064, %v2062
        %v2143 = vpack.c.bf16 %v2067, %v2065
        %v2144 = vpack.c.bf16 %v2068, %v2066
        %v2145 = vpack.c.bf16 %v2071, %v2069
        %v2146 = vpack.c.bf16 %v2072, %v2070
        %v2147 = vpack.c.bf16 %v2075, %v2073
        %v2148 = vpack.c.bf16 %v2076, %v2074
        %v2149 = vpack.c.bf16 %v2079, %v2077
        %v2150 = vpack.c.bf16 %v2080, %v2078
        %v2151 = vpack.c.bf16 %v2083, %v2081
        %v2152 = vpack.c.bf16 %v2084, %v2082
        %v2153 = vpack.c.bf16 %v2087, %v2085
        %v2154 = vpack.c.bf16 %v2088, %v2086
        %v2155 = vpack.c.bf16 %v2091, %v2089
        %v2156 = vpack.c.bf16 %v2092, %v2090
        %v2157 = vld [vmem:[#allocation9] sm:$0xff]
        %v2158 = vld [vmem:[#allocation9 + $0x8] sm:$0xff]
        %v2159 = vld [vmem:[#allocation9 + $0x10] sm:$0xff]
        %v2160 = vld [vmem:[#allocation9 + $0x18] sm:$0xff]
        %v2161 = vld [vmem:[#allocation9 + $0x20] sm:$0xff]
        %v2162 = vld [vmem:[#allocation9 + $0x28] sm:$0xff]
        %v2163 = vld [vmem:[#allocation9 + $0x30] sm:$0xff]
        %v2164 = vld [vmem:[#allocation9 + $0x38] sm:$0xff]
        %v2165 = vld [vmem:[#allocation9 + $0x40] sm:$0xff]
        %v2166 = vld [vmem:[#allocation9 + $0x48] sm:$0xff]
        %v2167 = vld [vmem:[#allocation9 + $0x50] sm:$0xff]
        %v2168 = vld [vmem:[#allocation9 + $0x58] sm:$0xff]
        %v2169 = vld [vmem:[#allocation9 + $0x60] sm:$0xff]
        %v2170 = vld [vmem:[#allocation9 + $0x68] sm:$0xff]
        %v2171 = vld [vmem:[#allocation9 + $0x70] sm:$0xff]
        %v2172 = vld [vmem:[#allocation9 + $0x78] sm:$0xff]
        %v2173 = vld [vmem:[#allocation9 + $0x80] sm:$0xff]
        %v2174 = vld [vmem:[#allocation9 + $0x88] sm:$0xff]
        %v2175 = vld [vmem:[#allocation9 + $0x90] sm:$0xff]
        %v2176 = vld [vmem:[#allocation9 + $0x98] sm:$0xff]
        %v2177 = vld [vmem:[#allocation9 + $0xa0] sm:$0xff]
        %v2178 = vld [vmem:[#allocation9 + $0xa8] sm:$0xff]
        %v2179 = vld [vmem:[#allocation9 + $0xb0] sm:$0xff]
        %v2180 = vld [vmem:[#allocation9 + $0xb8] sm:$0xff]
        %v2181 = vld [vmem:[#allocation9 + $0xc0] sm:$0xff]
        %v2182 = vld [vmem:[#allocation9 + $0xc8] sm:$0xff]
        %v2183 = vld [vmem:[#allocation9 + $0xd0] sm:$0xff]
        %v2184 = vld [vmem:[#allocation9 + $0xd8] sm:$0xff]
        %v2185 = vld [vmem:[#allocation9 + $0xe0] sm:$0xff]
        %v2186 = vld [vmem:[#allocation9 + $0xe8] sm:$0xff]
        %v2187 = vld [vmem:[#allocation9 + $0xf0] sm:$0xff]
        %v2188 = vld [vmem:[#allocation9 + $0xf8] sm:$0xff]
        %v2189 = vld [vmem:[#allocation9 + $0x100] sm:$0xff]
        %v2190 = vld [vmem:[#allocation9 + $0x108] sm:$0xff]
        %v2191 = vld [vmem:[#allocation9 + $0x110] sm:$0xff]
        %v2192 = vld [vmem:[#allocation9 + $0x118] sm:$0xff]
        %v2193 = vld [vmem:[#allocation9 + $0x120] sm:$0xff]
        %v2194 = vld [vmem:[#allocation9 + $0x128] sm:$0xff]
        %v2195 = vld [vmem:[#allocation9 + $0x130] sm:$0xff]
        %v2196 = vld [vmem:[#allocation9 + $0x138] sm:$0xff]
        %v2197 = vld [vmem:[#allocation9 + $0x140] sm:$0xff]
        %v2198 = vld [vmem:[#allocation9 + $0x148] sm:$0xff]
        %v2199 = vld [vmem:[#allocation9 + $0x150] sm:$0xff]
        %v2200 = vld [vmem:[#allocation9 + $0x158] sm:$0xff]
        %v2201 = vld [vmem:[#allocation9 + $0x160] sm:$0xff]
        %v2202 = vld [vmem:[#allocation9 + $0x168] sm:$0xff]
        %v2203 = vld [vmem:[#allocation9 + $0x170] sm:$0xff]
        %v2204 = vld [vmem:[#allocation9 + $0x178] sm:$0xff]
        %v2205 = vld [vmem:[#allocation9 + $0x180] sm:$0xff]
        %v2206 = vld [vmem:[#allocation9 + $0x188] sm:$0xff]
        %v2207 = vld [vmem:[#allocation9 + $0x190] sm:$0xff]
        %v2208 = vld [vmem:[#allocation9 + $0x198] sm:$0xff]
        %v2209 = vld [vmem:[#allocation9 + $0x1a0] sm:$0xff]
        %v2210 = vld [vmem:[#allocation9 + $0x1a8] sm:$0xff]
        %v2211 = vld [vmem:[#allocation9 + $0x1b0] sm:$0xff]
        %v2212 = vld [vmem:[#allocation9 + $0x1b8] sm:$0xff]
        %v2213 = vld [vmem:[#allocation9 + $0x1c0] sm:$0xff]
        %v2214 = vld [vmem:[#allocation9 + $0x1c8] sm:$0xff]
        %v2215 = vld [vmem:[#allocation9 + $0x1d0] sm:$0xff]
        %v2216 = vld [vmem:[#allocation9 + $0x1d8] sm:$0xff]
        %v2217 = vld [vmem:[#allocation9 + $0x1e0] sm:$0xff]
        %v2218 = vld [vmem:[#allocation9 + $0x1e8] sm:$0xff]
        %v2219 = vld [vmem:[#allocation9 + $0x1f0] sm:$0xff]
        %v2220 = vld [vmem:[#allocation9 + $0x1f8] sm:$0xff]
        %v2285 = vunpack.c.l.b16 %v2157
        %v2286 = vunpack.c.h.b16 %v2157
        %v2287 = vunpack.c.l.b16 %v2158
        %v2288 = vunpack.c.h.b16 %v2158
        %v2289 = vunpack.c.l.b16 %v2159
        %v2290 = vunpack.c.h.b16 %v2159
        %v2291 = vunpack.c.l.b16 %v2160
        %v2292 = vunpack.c.h.b16 %v2160
        %v2293 = vunpack.c.l.b16 %v2161
        %v2294 = vunpack.c.h.b16 %v2161
        %v2295 = vunpack.c.l.b16 %v2162
        %v2296 = vunpack.c.h.b16 %v2162
        %v2297 = vunpack.c.l.b16 %v2163
        %v2298 = vunpack.c.h.b16 %v2163
        %v2299 = vunpack.c.l.b16 %v2164
        %v2300 = vunpack.c.h.b16 %v2164
        %v2301 = vunpack.c.l.b16 %v2165
        %v2302 = vunpack.c.h.b16 %v2165
        %v2303 = vunpack.c.l.b16 %v2166
        %v2304 = vunpack.c.h.b16 %v2166
        %v2305 = vunpack.c.l.b16 %v2167
        %v2306 = vunpack.c.h.b16 %v2167
        %v2307 = vunpack.c.l.b16 %v2168
        %v2308 = vunpack.c.h.b16 %v2168
        %v2309 = vunpack.c.l.b16 %v2169
        %v2310 = vunpack.c.h.b16 %v2169
        %v2311 = vunpack.c.l.b16 %v2170
        %v2312 = vunpack.c.h.b16 %v2170
        %v2313 = vunpack.c.l.b16 %v2171
        %v2314 = vunpack.c.h.b16 %v2171
        %v2315 = vunpack.c.l.b16 %v2172
        %v2316 = vunpack.c.h.b16 %v2172
        %v2317 = vunpack.c.l.b16 %v2173
        %v2318 = vunpack.c.h.b16 %v2173
        %v2319 = vunpack.c.l.b16 %v2174
        %v2320 = vunpack.c.h.b16 %v2174
        %v2321 = vunpack.c.l.b16 %v2175
        %v2322 = vunpack.c.h.b16 %v2175
        %v2323 = vunpack.c.l.b16 %v2176
        %v2324 = vunpack.c.h.b16 %v2176
        %v2325 = vunpack.c.l.b16 %v2177
        %v2326 = vunpack.c.h.b16 %v2177
        %v2327 = vunpack.c.l.b16 %v2178
        %v2328 = vunpack.c.h.b16 %v2178
        %v2329 = vunpack.c.l.b16 %v2179
        %v2330 = vunpack.c.h.b16 %v2179
        %v2331 = vunpack.c.l.b16 %v2180
        %v2332 = vunpack.c.h.b16 %v2180
        %v2333 = vunpack.c.l.b16 %v2181
        %v2334 = vunpack.c.h.b16 %v2181
        %v2335 = vunpack.c.l.b16 %v2182
        %v2336 = vunpack.c.h.b16 %v2182
        %v2337 = vunpack.c.l.b16 %v2183
        %v2338 = vunpack.c.h.b16 %v2183
        %v2339 = vunpack.c.l.b16 %v2184
        %v2340 = vunpack.c.h.b16 %v2184
        %v2341 = vunpack.c.l.b16 %v2185
        %v2342 = vunpack.c.h.b16 %v2185
        %v2343 = vunpack.c.l.b16 %v2186
        %v2344 = vunpack.c.h.b16 %v2186
        %v2345 = vunpack.c.l.b16 %v2187
        %v2346 = vunpack.c.h.b16 %v2187
        %v2347 = vunpack.c.l.b16 %v2188
        %v2348 = vunpack.c.h.b16 %v2188
        %v2349 = vunpack.c.l.b16 %v2189
        %v2350 = vunpack.c.h.b16 %v2189
        %v2351 = vunpack.c.l.b16 %v2190
        %v2352 = vunpack.c.h.b16 %v2190
        %v2353 = vunpack.c.l.b16 %v2191
        %v2354 = vunpack.c.h.b16 %v2191
        %v2355 = vunpack.c.l.b16 %v2192
        %v2356 = vunpack.c.h.b16 %v2192
        %v2357 = vunpack.c.l.b16 %v2193
        %v2358 = vunpack.c.h.b16 %v2193
        %v2359 = vunpack.c.l.b16 %v2194
        %v2360 = vunpack.c.h.b16 %v2194
        %v2361 = vunpack.c.l.b16 %v2195
        %v2362 = vunpack.c.h.b16 %v2195
        %v2363 = vunpack.c.l.b16 %v2196
        %v2364 = vunpack.c.h.b16 %v2196
        %v2365 = vunpack.c.l.b16 %v2197
        %v2366 = vunpack.c.h.b16 %v2197
        %v2367 = vunpack.c.l.b16 %v2198
        %v2368 = vunpack.c.h.b16 %v2198
        %v2369 = vunpack.c.l.b16 %v2199
        %v2370 = vunpack.c.h.b16 %v2199
        %v2371 = vunpack.c.l.b16 %v2200
        %v2372 = vunpack.c.h.b16 %v2200
        %v2373 = vunpack.c.l.b16 %v2201
        %v2374 = vunpack.c.h.b16 %v2201
        %v2375 = vunpack.c.l.b16 %v2202
        %v2376 = vunpack.c.h.b16 %v2202
        %v2377 = vunpack.c.l.b16 %v2203
        %v2378 = vunpack.c.h.b16 %v2203
        %v2379 = vunpack.c.l.b16 %v2204
        %v2380 = vunpack.c.h.b16 %v2204
        %v2381 = vunpack.c.l.b16 %v2205
        %v2382 = vunpack.c.h.b16 %v2205
        %v2383 = vunpack.c.l.b16 %v2206
        %v2384 = vunpack.c.h.b16 %v2206
        %v2385 = vunpack.c.l.b16 %v2207
        %v2386 = vunpack.c.h.b16 %v2207
        %v2387 = vunpack.c.l.b16 %v2208
        %v2388 = vunpack.c.h.b16 %v2208
        %v2389 = vunpack.c.l.b16 %v2209
        %v2390 = vunpack.c.h.b16 %v2209
        %v2391 = vunpack.c.l.b16 %v2210
        %v2392 = vunpack.c.h.b16 %v2210
        %v2393 = vunpack.c.l.b16 %v2211
        %v2394 = vunpack.c.h.b16 %v2211
        %v2395 = vunpack.c.l.b16 %v2212
        %v2396 = vunpack.c.h.b16 %v2212
        %v2397 = vunpack.c.l.b16 %v2213
        %v2398 = vunpack.c.h.b16 %v2213
        %v2399 = vunpack.c.l.b16 %v2214
        %v2400 = vunpack.c.h.b16 %v2214
        %v2401 = vunpack.c.l.b16 %v2215
        %v2402 = vunpack.c.h.b16 %v2215
        %v2403 = vunpack.c.l.b16 %v2216
        %v2404 = vunpack.c.h.b16 %v2216
        %v2405 = vunpack.c.l.b16 %v2217
        %v2406 = vunpack.c.h.b16 %v2217
        %v2407 = vunpack.c.l.b16 %v2218
        %v2408 = vunpack.c.h.b16 %v2218
        %v2409 = vunpack.c.l.b16 %v2219
        %v2410 = vunpack.c.h.b16 %v2219
        %v2411 = vunpack.c.l.b16 %v2220
        %v2412 = vunpack.c.h.b16 %v2220
        %v2413 = vpack.c.b16 %v2289, %v2285
        %v2414 = vpack.c.b16 %v2290, %v2286
        %v2415 = vpack.c.b16 %v2291, %v2287
        %v2416 = vpack.c.b16 %v2292, %v2288
        %v2417 = vpack.c.b16 %v2297, %v2293
        %v2418 = vpack.c.b16 %v2298, %v2294
        %v2419 = vpack.c.b16 %v2299, %v2295
        %v2420 = vpack.c.b16 %v2300, %v2296
        %v2421 = vpack.c.b16 %v2305, %v2301
        %v2422 = vpack.c.b16 %v2306, %v2302
        %v2423 = vpack.c.b16 %v2307, %v2303
        %v2424 = vpack.c.b16 %v2308, %v2304
        %v2425 = vpack.c.b16 %v2313, %v2309
        %v2426 = vpack.c.b16 %v2314, %v2310
        %v2427 = vpack.c.b16 %v2315, %v2311
        %v2428 = vpack.c.b16 %v2316, %v2312
        %v2429 = vpack.c.b16 %v2321, %v2317
        %v2430 = vpack.c.b16 %v2322, %v2318
        %v2431 = vpack.c.b16 %v2323, %v2319
        %v2432 = vpack.c.b16 %v2324, %v2320
        %v2433 = vpack.c.b16 %v2329, %v2325
        %v2434 = vpack.c.b16 %v2330, %v2326
        %v2435 = vpack.c.b16 %v2331, %v2327
        %v2436 = vpack.c.b16 %v2332, %v2328
        %v2437 = vpack.c.b16 %v2337, %v2333
        %v2438 = vpack.c.b16 %v2338, %v2334
        %v2439 = vpack.c.b16 %v2339, %v2335
        %v2440 = vpack.c.b16 %v2340, %v2336
        %v2441 = vpack.c.b16 %v2345, %v2341
        %v2442 = vpack.c.b16 %v2346, %v2342
        %v2443 = vpack.c.b16 %v2347, %v2343
        %v2444 = vpack.c.b16 %v2348, %v2344
        %v2445 = vpack.c.b16 %v2353, %v2349
        %v2446 = vpack.c.b16 %v2354, %v2350
        %v2447 = vpack.c.b16 %v2355, %v2351
        %v2448 = vpack.c.b16 %v2356, %v2352
        %v2449 = vpack.c.b16 %v2361, %v2357
        %v2450 = vpack.c.b16 %v2362, %v2358
        %v2451 = vpack.c.b16 %v2363, %v2359
        %v2452 = vpack.c.b16 %v2364, %v2360
        %v2453 = vpack.c.b16 %v2369, %v2365
        %v2454 = vpack.c.b16 %v2370, %v2366
        %v2455 = vpack.c.b16 %v2371, %v2367
        %v2456 = vpack.c.b16 %v2372, %v2368
        %v2457 = vpack.c.b16 %v2377, %v2373
        %v2458 = vpack.c.b16 %v2378, %v2374
        %v2459 = vpack.c.b16 %v2379, %v2375
        %v2460 = vpack.c.b16 %v2380, %v2376
        %v2461 = vpack.c.b16 %v2385, %v2381
        %v2462 = vpack.c.b16 %v2386, %v2382
        %v2463 = vpack.c.b16 %v2387, %v2383
        %v2464 = vpack.c.b16 %v2388, %v2384
        %v2465 = vpack.c.b16 %v2393, %v2389
        %v2466 = vpack.c.b16 %v2394, %v2390
        %v2467 = vpack.c.b16 %v2395, %v2391
        %v2468 = vpack.c.b16 %v2396, %v2392
        %v2469 = vpack.c.b16 %v2401, %v2397
        %v2470 = vpack.c.b16 %v2402, %v2398
        %v2471 = vpack.c.b16 %v2403, %v2399
        %v2472 = vpack.c.b16 %v2404, %v2400
        %v2473 = vpack.c.b16 %v2409, %v2405
        %v2474 = vpack.c.b16 %v2410, %v2406
        %v2475 = vpack.c.b16 %v2411, %v2407
        %v2476 = vpack.c.b16 %v2412, %v2408
        %2541 = vmatprep.subr.bf16.mxu0 %v2108
        %2542 = vmatpush1.bf16.msra.mxu0 %v2107
        %2543 = vmatprep.subr.bf16.mxu0 %v2106
        %2544 = vmatpush1.bf16.msra.mxu0 %v2105
        %2545 = vmatprep.subr.bf16.mxu0 %v2104
        %2546 = vmatpush1.bf16.msra.mxu0 %v2103
        %2547 = vmatprep.subr.bf16.mxu0 %v2102
        %2548 = vmatpush1.bf16.msra.mxu0 %v2101
        %2549 = vmatprep.subr.bf16.mxu0 %v2100
        %2550 = vmatpush1.bf16.msra.mxu0 %v2099
        %2551 = vmatprep.subr.bf16.mxu0 %v2098
        %2552 = vmatpush1.bf16.msra.mxu0 %v2097
        %2553 = vmatprep.subr.bf16.mxu0 %v2096
        %2554 = vmatpush1.bf16.msra.mxu0 %v2095
        %2555 = vmatprep.subr.bf16.mxu0 %v2094
        %2556 = vmatpush1.bf16.msra.mxu0 %v2093
        %2557 = vmatprep.subr.bf16.mxu0 %v2124
        %2558 = vmatpush2.bf16.msra.mxu0 %v2123
        %2559 = vmatprep.subr.bf16.mxu0 %v2122
        %2560 = vmatpush2.bf16.msra.mxu0 %v2121
        %2561 = vmatprep.subr.bf16.mxu0 %v2120
        %2562 = vmatpush2.bf16.msra.mxu0 %v2119
        %2563 = vmatprep.subr.bf16.mxu0 %v2118
        %2564 = vmatpush2.bf16.msra.mxu0 %v2117
        %2565 = vmatprep.subr.bf16.mxu0 %v2116
        %2566 = vmatpush2.bf16.msra.mxu0 %v2115
        %2567 = vmatprep.subr.bf16.mxu0 %v2114
        %2568 = vmatpush2.bf16.msra.mxu0 %v2113
        %2569 = vmatprep.subr.bf16.mxu0 %v2112
        %2570 = vmatpush2.bf16.msra.mxu0 %v2111
        %2571 = vmatprep.subr.bf16.mxu0 %v2110
        %2572 = vmatpush2.bf16.msra.mxu0 %v2109
        %2573 = vmatprep.mubr.bf16.mxu0 %v2414
        %2574 = vmatmul.mubr.bf16.gmra.mxu0 %v2413
        %v2575 = vpop.f32.mrf.mxu0
        %v2576 = vadd.f32 0.0, %v2575
        %v2577 = vpop.f32.mrf.mxu0
        %v2578 = vadd.f32 0.0, %v2577
        %v2579 = vpop.f32.mrf.mxu0
        %v2580 = vadd.f32 0.0, %v2579
        %v2581 = vpop.f32.mrf.mxu0
        %v2582 = vadd.f32 0.0, %v2581
        %2583 = vmatprep.mubr.bf16.mxu0 %v2418
        %2584 = vmatmul.mubr.bf16.gmra.mxu0 %v2417
        %v2585 = vpop.f32.mrf.mxu0
        %v2586 = vadd.f32 0.0, %v2585
        %v2587 = vpop.f32.mrf.mxu0
        %v2588 = vadd.f32 0.0, %v2587
        %v2589 = vpop.f32.mrf.mxu0
        %v2590 = vadd.f32 0.0, %v2589
        %v2591 = vpop.f32.mrf.mxu0
        %v2592 = vadd.f32 0.0, %v2591
        %2593 = vmatprep.mubr.bf16.mxu0 %v2422
        %2594 = vmatmul.mubr.bf16.gmra.mxu0 %v2421
        %v2595 = vpop.f32.mrf.mxu0
        %v2596 = vadd.f32 0.0, %v2595
        %v2597 = vpop.f32.mrf.mxu0
        %v2598 = vadd.f32 0.0, %v2597
        %v2599 = vpop.f32.mrf.mxu0
        %v2600 = vadd.f32 0.0, %v2599
        %v2601 = vpop.f32.mrf.mxu0
        %v2602 = vadd.f32 0.0, %v2601
        %2603 = vmatprep.mubr.bf16.mxu0 %v2426
        %2604 = vmatmul.mubr.bf16.gmra.mxu0 %v2425
        %v2605 = vpop.f32.mrf.mxu0
        %v2606 = vadd.f32 0.0, %v2605
        %v2607 = vpop.f32.mrf.mxu0
        %v2608 = vadd.f32 0.0, %v2607
        %v2609 = vpop.f32.mrf.mxu0
        %v2610 = vadd.f32 0.0, %v2609
        %v2611 = vpop.f32.mrf.mxu0
        %v2612 = vadd.f32 0.0, %v2611
        %2613 = vmatprep.mubr.bf16.mxu0 %v2430
        %2614 = vmatmul.mubr.bf16.gmra.mxu0 %v2429
        %v2615 = vpop.f32.mrf.mxu0
        %v2616 = vadd.f32 0.0, %v2615
        %v2617 = vpop.f32.mrf.mxu0
        %v2618 = vadd.f32 0.0, %v2617
        %v2619 = vpop.f32.mrf.mxu0
        %v2620 = vadd.f32 0.0, %v2619
        %v2621 = vpop.f32.mrf.mxu0
        %v2622 = vadd.f32 0.0, %v2621
        %2623 = vmatprep.mubr.bf16.mxu0 %v2434
        %2624 = vmatmul.mubr.bf16.gmra.mxu0 %v2433
        %v2625 = vpop.f32.mrf.mxu0
        %v2626 = vadd.f32 0.0, %v2625
        %v2627 = vpop.f32.mrf.mxu0
        %v2628 = vadd.f32 0.0, %v2627
        %v2629 = vpop.f32.mrf.mxu0
        %v2630 = vadd.f32 0.0, %v2629
        %v2631 = vpop.f32.mrf.mxu0
        %v2632 = vadd.f32 0.0, %v2631
        %2633 = vmatprep.mubr.bf16.mxu0 %v2438
        %2634 = vmatmul.mubr.bf16.gmra.mxu0 %v2437
        %v2635 = vpop.f32.mrf.mxu0
        %v2636 = vadd.f32 0.0, %v2635
        %v2637 = vpop.f32.mrf.mxu0
        %v2638 = vadd.f32 0.0, %v2637
        %v2639 = vpop.f32.mrf.mxu0
        %v2640 = vadd.f32 0.0, %v2639
        %v2641 = vpop.f32.mrf.mxu0
        %v2642 = vadd.f32 0.0, %v2641
        %2643 = vmatprep.mubr.bf16.mxu0 %v2442
        %2644 = vmatmul.mubr.bf16.gmra.mxu0 %v2441
        %v2645 = vpop.f32.mrf.mxu0
        %v2646 = vadd.f32 0.0, %v2645
        %v2647 = vpop.f32.mrf.mxu0
        %v2648 = vadd.f32 0.0, %v2647
        %v2649 = vpop.f32.mrf.mxu0
        %v2650 = vadd.f32 0.0, %v2649
        %v2651 = vpop.f32.mrf.mxu0
        %v2652 = vadd.f32 0.0, %v2651
        %2653 = vmatprep.mubr.bf16.mxu0 %v2446
        %2654 = vmatmul.mubr.bf16.gmra.mxu0 %v2445
        %v2655 = vpop.f32.mrf.mxu0
        %v2656 = vadd.f32 0.0, %v2655
        %v2657 = vpop.f32.mrf.mxu0
        %v2658 = vadd.f32 0.0, %v2657
        %v2659 = vpop.f32.mrf.mxu0
        %v2660 = vadd.f32 0.0, %v2659
        %v2661 = vpop.f32.mrf.mxu0
        %v2662 = vadd.f32 0.0, %v2661
        %2663 = vmatprep.mubr.bf16.mxu0 %v2450
        %2664 = vmatmul.mubr.bf16.gmra.mxu0 %v2449
        %v2665 = vpop.f32.mrf.mxu0
        %v2666 = vadd.f32 0.0, %v2665
        %v2667 = vpop.f32.mrf.mxu0
        %v2668 = vadd.f32 0.0, %v2667
        %v2669 = vpop.f32.mrf.mxu0
        %v2670 = vadd.f32 0.0, %v2669
        %v2671 = vpop.f32.mrf.mxu0
        %v2672 = vadd.f32 0.0, %v2671
        %2673 = vmatprep.mubr.bf16.mxu0 %v2454
        %2674 = vmatmul.mubr.bf16.gmra.mxu0 %v2453
        %v2675 = vpop.f32.mrf.mxu0
        %v2676 = vadd.f32 0.0, %v2675
        %v2677 = vpop.f32.mrf.mxu0
        %v2678 = vadd.f32 0.0, %v2677
        %v2679 = vpop.f32.mrf.mxu0
        %v2680 = vadd.f32 0.0, %v2679
        %v2681 = vpop.f32.mrf.mxu0
        %v2682 = vadd.f32 0.0, %v2681
        %2683 = vmatprep.mubr.bf16.mxu0 %v2458
        %2684 = vmatmul.mubr.bf16.gmra.mxu0 %v2457
        %v2685 = vpop.f32.mrf.mxu0
        %v2686 = vadd.f32 0.0, %v2685
        %v2687 = vpop.f32.mrf.mxu0
        %v2688 = vadd.f32 0.0, %v2687
        %v2689 = vpop.f32.mrf.mxu0
        %v2690 = vadd.f32 0.0, %v2689
        %v2691 = vpop.f32.mrf.mxu0
        %v2692 = vadd.f32 0.0, %v2691
        %2693 = vmatprep.mubr.bf16.mxu0 %v2462
        %2694 = vmatmul.mubr.bf16.gmra.mxu0 %v2461
        %v2695 = vpop.f32.mrf.mxu0
        %v2696 = vadd.f32 0.0, %v2695
        %v2697 = vpop.f32.mrf.mxu0
        %v2698 = vadd.f32 0.0, %v2697
        %v2699 = vpop.f32.mrf.mxu0
        %v2700 = vadd.f32 0.0, %v2699
        %v2701 = vpop.f32.mrf.mxu0
        %v2702 = vadd.f32 0.0, %v2701
        %2703 = vmatprep.mubr.bf16.mxu0 %v2466
        %2704 = vmatmul.mubr.bf16.gmra.mxu0 %v2465
        %v2705 = vpop.f32.mrf.mxu0
        %v2706 = vadd.f32 0.0, %v2705
        %v2707 = vpop.f32.mrf.mxu0
        %v2708 = vadd.f32 0.0, %v2707
        %v2709 = vpop.f32.mrf.mxu0
        %v2710 = vadd.f32 0.0, %v2709
        %v2711 = vpop.f32.mrf.mxu0
        %v2712 = vadd.f32 0.0, %v2711
        %2713 = vmatprep.mubr.bf16.mxu0 %v2470
        %2714 = vmatmul.mubr.bf16.gmra.mxu0 %v2469
        %v2715 = vpop.f32.mrf.mxu0
        %v2716 = vadd.f32 0.0, %v2715
        %v2717 = vpop.f32.mrf.mxu0
        %v2718 = vadd.f32 0.0, %v2717
        %v2719 = vpop.f32.mrf.mxu0
        %v2720 = vadd.f32 0.0, %v2719
        %v2721 = vpop.f32.mrf.mxu0
        %v2722 = vadd.f32 0.0, %v2721
        %2723 = vmatprep.mubr.bf16.mxu0 %v2474
        %2724 = vmatmul.mubr.bf16.gmra.mxu0 %v2473
        %v2725 = vpop.f32.mrf.mxu0
        %v2726 = vadd.f32 0.0, %v2725
        %v2727 = vpop.f32.mrf.mxu0
        %v2728 = vadd.f32 0.0, %v2727
        %v2729 = vpop.f32.mrf.mxu0
        %v2730 = vadd.f32 0.0, %v2729
        %v2731 = vpop.f32.mrf.mxu0
        %v2732 = vadd.f32 0.0, %v2731
        %2733 = vdwg.mxu0
        %2734 = vmatprep.subr.bf16.mxu0 %v2140
        %2735 = vmatpush1.bf16.msra.mxu0 %v2139
        %2736 = vmatprep.subr.bf16.mxu0 %v2138
        %2737 = vmatpush1.bf16.msra.mxu0 %v2137
        %2738 = vmatprep.subr.bf16.mxu0 %v2136
        %2739 = vmatpush1.bf16.msra.mxu0 %v2135
        %2740 = vmatprep.subr.bf16.mxu0 %v2134
        %2741 = vmatpush1.bf16.msra.mxu0 %v2133
        %2742 = vmatprep.subr.bf16.mxu0 %v2132
        %2743 = vmatpush1.bf16.msra.mxu0 %v2131
        %2744 = vmatprep.subr.bf16.mxu0 %v2130
        %2745 = vmatpush1.bf16.msra.mxu0 %v2129
        %2746 = vmatprep.subr.bf16.mxu0 %v2128
        %2747 = vmatpush1.bf16.msra.mxu0 %v2127
        %2748 = vmatprep.subr.bf16.mxu0 %v2126
        %2749 = vmatpush1.bf16.msra.mxu0 %v2125
        %2750 = vmatprep.subr.bf16.mxu0 %v2156
        %2751 = vmatpush2.bf16.msra.mxu0 %v2155
        %2752 = vmatprep.subr.bf16.mxu0 %v2154
        %2753 = vmatpush2.bf16.msra.mxu0 %v2153
        %2754 = vmatprep.subr.bf16.mxu0 %v2152
        %2755 = vmatpush2.bf16.msra.mxu0 %v2151
        %2756 = vmatprep.subr.bf16.mxu0 %v2150
        %2757 = vmatpush2.bf16.msra.mxu0 %v2149
        %2758 = vmatprep.subr.bf16.mxu0 %v2148
        %2759 = vmatpush2.bf16.msra.mxu0 %v2147
        %2760 = vmatprep.subr.bf16.mxu0 %v2146
        %2761 = vmatpush2.bf16.msra.mxu0 %v2145
        %2762 = vmatprep.subr.bf16.mxu0 %v2144
        %2763 = vmatpush2.bf16.msra.mxu0 %v2143
        %2764 = vmatprep.subr.bf16.mxu0 %v2142
        %2765 = vmatpush2.bf16.msra.mxu0 %v2141
        %2766 = vmatprep.mubr.bf16.mxu0 %v2416
        %2767 = vmatmul.mubr.bf16.gmra.mxu0 %v2415
        %v2768 = vpop.f32.mrf.mxu0
        %v2769 = vadd.f32 %v2576, %v2768
        %v2770 = vpop.f32.mrf.mxu0
        %v2771 = vadd.f32 %v2578, %v2770
        %v2772 = vpop.f32.mrf.mxu0
        %v2773 = vadd.f32 %v2580, %v2772
        %v2774 = vpop.f32.mrf.mxu0
        %v2775 = vadd.f32 %v2582, %v2774
        %2776 = vmatprep.mubr.bf16.mxu0 %v2420
        %2777 = vmatmul.mubr.bf16.gmra.mxu0 %v2419
        %v2778 = vpop.f32.mrf.mxu0
        %v2779 = vadd.f32 %v2586, %v2778
        %v2780 = vpop.f32.mrf.mxu0
        %v2781 = vadd.f32 %v2588, %v2780
        %v2782 = vpop.f32.mrf.mxu0
        %v2783 = vadd.f32 %v2590, %v2782
        %v2784 = vpop.f32.mrf.mxu0
        %v2785 = vadd.f32 %v2592, %v2784
        %2786 = vmatprep.mubr.bf16.mxu0 %v2424
        %2787 = vmatmul.mubr.bf16.gmra.mxu0 %v2423
        %v2788 = vpop.f32.mrf.mxu0
        %v2789 = vadd.f32 %v2596, %v2788
        %v2790 = vpop.f32.mrf.mxu0
        %v2791 = vadd.f32 %v2598, %v2790
        %v2792 = vpop.f32.mrf.mxu0
        %v2793 = vadd.f32 %v2600, %v2792
        %v2794 = vpop.f32.mrf.mxu0
        %v2795 = vadd.f32 %v2602, %v2794
        %2796 = vmatprep.mubr.bf16.mxu0 %v2428
        %2797 = vmatmul.mubr.bf16.gmra.mxu0 %v2427
        %v2798 = vpop.f32.mrf.mxu0
        %v2799 = vadd.f32 %v2606, %v2798
        %v2800 = vpop.f32.mrf.mxu0
        %v2801 = vadd.f32 %v2608, %v2800
        %v2802 = vpop.f32.mrf.mxu0
        %v2803 = vadd.f32 %v2610, %v2802
        %v2804 = vpop.f32.mrf.mxu0
        %v2805 = vadd.f32 %v2612, %v2804
        %2806 = vmatprep.mubr.bf16.mxu0 %v2432
        %2807 = vmatmul.mubr.bf16.gmra.mxu0 %v2431
        %v2808 = vpop.f32.mrf.mxu0
        %v2809 = vadd.f32 %v2616, %v2808
        %v2810 = vpop.f32.mrf.mxu0
        %v2811 = vadd.f32 %v2618, %v2810
        %v2812 = vpop.f32.mrf.mxu0
        %v2813 = vadd.f32 %v2620, %v2812
        %v2814 = vpop.f32.mrf.mxu0
        %v2815 = vadd.f32 %v2622, %v2814
        %2816 = vmatprep.mubr.bf16.mxu0 %v2436
        %2817 = vmatmul.mubr.bf16.gmra.mxu0 %v2435
        %v2818 = vpop.f32.mrf.mxu0
        %v2819 = vadd.f32 %v2626, %v2818
        %v2820 = vpop.f32.mrf.mxu0
        %v2821 = vadd.f32 %v2628, %v2820
        %v2822 = vpop.f32.mrf.mxu0
        %v2823 = vadd.f32 %v2630, %v2822
        %v2824 = vpop.f32.mrf.mxu0
        %v2825 = vadd.f32 %v2632, %v2824
        %2826 = vmatprep.mubr.bf16.mxu0 %v2440
        %2827 = vmatmul.mubr.bf16.gmra.mxu0 %v2439
        %v2828 = vpop.f32.mrf.mxu0
        %v2829 = vadd.f32 %v2636, %v2828
        %v2830 = vpop.f32.mrf.mxu0
        %v2831 = vadd.f32 %v2638, %v2830
        %v2832 = vpop.f32.mrf.mxu0
        %v2833 = vadd.f32 %v2640, %v2832
        %v2834 = vpop.f32.mrf.mxu0
        %v2835 = vadd.f32 %v2642, %v2834
        %2836 = vmatprep.mubr.bf16.mxu0 %v2444
        %2837 = vmatmul.mubr.bf16.gmra.mxu0 %v2443
        %v2838 = vpop.f32.mrf.mxu0
        %v2839 = vadd.f32 %v2646, %v2838
        %v2840 = vpop.f32.mrf.mxu0
        %v2841 = vadd.f32 %v2648, %v2840
        %v2842 = vpop.f32.mrf.mxu0
        %v2843 = vadd.f32 %v2650, %v2842
        %v2844 = vpop.f32.mrf.mxu0
        %v2845 = vadd.f32 %v2652, %v2844
        %2846 = vmatprep.mubr.bf16.mxu0 %v2448
        %2847 = vmatmul.mubr.bf16.gmra.mxu0 %v2447
        %v2848 = vpop.f32.mrf.mxu0
        %v2849 = vadd.f32 %v2656, %v2848
        %v2850 = vpop.f32.mrf.mxu0
        %v2851 = vadd.f32 %v2658, %v2850
        %v2852 = vpop.f32.mrf.mxu0
        %v2853 = vadd.f32 %v2660, %v2852
        %v2854 = vpop.f32.mrf.mxu0
        %v2855 = vadd.f32 %v2662, %v2854
        %2856 = vmatprep.mubr.bf16.mxu0 %v2452
        %2857 = vmatmul.mubr.bf16.gmra.mxu0 %v2451
        %v2858 = vpop.f32.mrf.mxu0
        %v2859 = vadd.f32 %v2666, %v2858
        %v2860 = vpop.f32.mrf.mxu0
        %v2861 = vadd.f32 %v2668, %v2860
        %v2862 = vpop.f32.mrf.mxu0
        %v2863 = vadd.f32 %v2670, %v2862
        %v2864 = vpop.f32.mrf.mxu0
        %v2865 = vadd.f32 %v2672, %v2864
        %2866 = vmatprep.mubr.bf16.mxu0 %v2456
        %2867 = vmatmul.mubr.bf16.gmra.mxu0 %v2455
        %v2868 = vpop.f32.mrf.mxu0
        %v2869 = vadd.f32 %v2676, %v2868
        %v2870 = vpop.f32.mrf.mxu0
        %v2871 = vadd.f32 %v2678, %v2870
        %v2872 = vpop.f32.mrf.mxu0
        %v2873 = vadd.f32 %v2680, %v2872
        %v2874 = vpop.f32.mrf.mxu0
        %v2875 = vadd.f32 %v2682, %v2874
        %2876 = vmatprep.mubr.bf16.mxu0 %v2460
        %2877 = vmatmul.mubr.bf16.gmra.mxu0 %v2459
        %v2878 = vpop.f32.mrf.mxu0
        %v2879 = vadd.f32 %v2686, %v2878
        %v2880 = vpop.f32.mrf.mxu0
        %v2881 = vadd.f32 %v2688, %v2880
        %v2882 = vpop.f32.mrf.mxu0
        %v2883 = vadd.f32 %v2690, %v2882
        %v2884 = vpop.f32.mrf.mxu0
        %v2885 = vadd.f32 %v2692, %v2884
        %2886 = vmatprep.mubr.bf16.mxu0 %v2464
        %2887 = vmatmul.mubr.bf16.gmra.mxu0 %v2463
        %v2888 = vpop.f32.mrf.mxu0
        %v2889 = vadd.f32 %v2696, %v2888
        %v2890 = vpop.f32.mrf.mxu0
        %v2891 = vadd.f32 %v2698, %v2890
        %v2892 = vpop.f32.mrf.mxu0
        %v2893 = vadd.f32 %v2700, %v2892
        %v2894 = vpop.f32.mrf.mxu0
        %v2895 = vadd.f32 %v2702, %v2894
        %2896 = vmatprep.mubr.bf16.mxu0 %v2468
        %2897 = vmatmul.mubr.bf16.gmra.mxu0 %v2467
        %v2898 = vpop.f32.mrf.mxu0
        %v2899 = vadd.f32 %v2706, %v2898
        %v2900 = vpop.f32.mrf.mxu0
        %v2901 = vadd.f32 %v2708, %v2900
        %v2902 = vpop.f32.mrf.mxu0
        %v2903 = vadd.f32 %v2710, %v2902
        %v2904 = vpop.f32.mrf.mxu0
        %v2905 = vadd.f32 %v2712, %v2904
        %2906 = vmatprep.mubr.bf16.mxu0 %v2472
        %2907 = vmatmul.mubr.bf16.gmra.mxu0 %v2471
        %v2908 = vpop.f32.mrf.mxu0
        %v2909 = vadd.f32 %v2716, %v2908
        %v2910 = vpop.f32.mrf.mxu0
        %v2911 = vadd.f32 %v2718, %v2910
        %v2912 = vpop.f32.mrf.mxu0
        %v2913 = vadd.f32 %v2720, %v2912
        %v2914 = vpop.f32.mrf.mxu0
        %v2915 = vadd.f32 %v2722, %v2914
        %2916 = vmatprep.mubr.bf16.mxu0 %v2476
        %2917 = vmatmul.mubr.bf16.gmra.mxu0 %v2475
        %v2918 = vpop.f32.mrf.mxu0
        %v2919 = vadd.f32 %v2726, %v2918
        %v2920 = vpop.f32.mrf.mxu0
        %v2921 = vadd.f32 %v2728, %v2920
        %v2922 = vpop.f32.mrf.mxu0
        %v2923 = vadd.f32 %v2730, %v2922
        %v2924 = vpop.f32.mrf.mxu0
        %v2925 = vadd.f32 %v2732, %v2924
        %2926 = vdwg.mxu0
        %v2927 = vmax.f32 %v2769, 0.0
        %v2928 = vmax.f32 %v2771, 0.0
        %v2929 = vmax.f32 %v2773, 0.0
        %v2930 = vmax.f32 %v2775, 0.0
        %v2931 = vmax.f32 %v2779, 0.0
        %v2932 = vmax.f32 %v2781, 0.0
        %v2933 = vmax.f32 %v2783, 0.0
        %v2934 = vmax.f32 %v2785, 0.0
        %v2935 = vmax.f32 %v2789, 0.0
        %v2936 = vmax.f32 %v2791, 0.0
        %v2937 = vmax.f32 %v2793, 0.0
        %v2938 = vmax.f32 %v2795, 0.0
        %v2939 = vmax.f32 %v2799, 0.0
        %v2940 = vmax.f32 %v2801, 0.0
        %v2941 = vmax.f32 %v2803, 0.0
        %v2942 = vmax.f32 %v2805, 0.0
        %v2943 = vmax.f32 %v2809, 0.0
        %v2944 = vmax.f32 %v2811, 0.0
        %v2945 = vmax.f32 %v2813, 0.0
        %v2946 = vmax.f32 %v2815, 0.0
        %v2947 = vmax.f32 %v2819, 0.0
        %v2948 = vmax.f32 %v2821, 0.0
        %v2949 = vmax.f32 %v2823, 0.0
        %v2950 = vmax.f32 %v2825, 0.0
        %v2951 = vmax.f32 %v2829, 0.0
        %v2952 = vmax.f32 %v2831, 0.0
        %v2953 = vmax.f32 %v2833, 0.0
        %v2954 = vmax.f32 %v2835, 0.0
        %v2955 = vmax.f32 %v2839, 0.0
        %v2956 = vmax.f32 %v2841, 0.0
        %v2957 = vmax.f32 %v2843, 0.0
        %v2958 = vmax.f32 %v2845, 0.0
        %v2959 = vmax.f32 %v2849, 0.0
        %v2960 = vmax.f32 %v2851, 0.0
        %v2961 = vmax.f32 %v2853, 0.0
        %v2962 = vmax.f32 %v2855, 0.0
        %v2963 = vmax.f32 %v2859, 0.0
        %v2964 = vmax.f32 %v2861, 0.0
        %v2965 = vmax.f32 %v2863, 0.0
        %v2966 = vmax.f32 %v2865, 0.0
        %v2967 = vmax.f32 %v2869, 0.0
        %v2968 = vmax.f32 %v2871, 0.0
        %v2969 = vmax.f32 %v2873, 0.0
        %v2970 = vmax.f32 %v2875, 0.0
        %v2971 = vmax.f32 %v2879, 0.0
        %v2972 = vmax.f32 %v2881, 0.0
        %v2973 = vmax.f32 %v2883, 0.0
        %v2974 = vmax.f32 %v2885, 0.0
        %v2975 = vmax.f32 %v2889, 0.0
        %v2976 = vmax.f32 %v2891, 0.0
        %v2977 = vmax.f32 %v2893, 0.0
        %v2978 = vmax.f32 %v2895, 0.0
        %v2979 = vmax.f32 %v2899, 0.0
        %v2980 = vmax.f32 %v2901, 0.0
        %v2981 = vmax.f32 %v2903, 0.0
        %v2982 = vmax.f32 %v2905, 0.0
        %v2983 = vmax.f32 %v2909, 0.0
        %v2984 = vmax.f32 %v2911, 0.0
        %v2985 = vmax.f32 %v2913, 0.0
        %v2986 = vmax.f32 %v2915, 0.0
        %v2987 = vmax.f32 %v2919, 0.0
        %v2988 = vmax.f32 %v2921, 0.0
        %v2989 = vmax.f32 %v2923, 0.0
        %v2990 = vmax.f32 %v2925, 0.0
        %v2991 = vld [vmem:[#allocation2] sm:$0xff]
        %v2992 = vld [vmem:[#allocation2 + $0x8] sm:$0xff]
        %v2993 = vld [vmem:[#allocation2 + $0x10] sm:$0xff]
        %v2994 = vld [vmem:[#allocation2 + $0x18] sm:$0xff]
        %v2995 = vld [vmem:[#allocation2 + $0x20] sm:$0xff]
        %v2996 = vld [vmem:[#allocation2 + $0x28] sm:$0xff]
        %v2997 = vld [vmem:[#allocation2 + $0x30] sm:$0xff]
        %v2998 = vld [vmem:[#allocation2 + $0x38] sm:$0xff]
        %v2999 = vld [vmem:[#allocation2 + $0x40] sm:$0xff]
        %v3000 = vld [vmem:[#allocation2 + $0x48] sm:$0xff]
        %v3001 = vld [vmem:[#allocation2 + $0x50] sm:$0xff]
        %v3002 = vld [vmem:[#allocation2 + $0x58] sm:$0xff]
        %v3003 = vld [vmem:[#allocation2 + $0x60] sm:$0xff]
        %v3004 = vld [vmem:[#allocation2 + $0x68] sm:$0xff]
        %v3005 = vld [vmem:[#allocation2 + $0x70] sm:$0xff]
        %v3006 = vld [vmem:[#allocation2 + $0x78] sm:$0xff]
        %v3007 = vld [vmem:[#allocation2 + $0x80] sm:$0xff]
        %v3008 = vld [vmem:[#allocation2 + $0x88] sm:$0xff]
        %v3009 = vld [vmem:[#allocation2 + $0x90] sm:$0xff]
        %v3010 = vld [vmem:[#allocation2 + $0x98] sm:$0xff]
        %v3011 = vld [vmem:[#allocation2 + $0xa0] sm:$0xff]
        %v3012 = vld [vmem:[#allocation2 + $0xa8] sm:$0xff]
        %v3013 = vld [vmem:[#allocation2 + $0xb0] sm:$0xff]
        %v3014 = vld [vmem:[#allocation2 + $0xb8] sm:$0xff]
        %v3015 = vld [vmem:[#allocation2 + $0xc0] sm:$0xff]
        %v3016 = vld [vmem:[#allocation2 + $0xc8] sm:$0xff]
        %v3017 = vld [vmem:[#allocation2 + $0xd0] sm:$0xff]
        %v3018 = vld [vmem:[#allocation2 + $0xd8] sm:$0xff]
        %v3019 = vld [vmem:[#allocation2 + $0xe0] sm:$0xff]
        %v3020 = vld [vmem:[#allocation2 + $0xe8] sm:$0xff]
        %v3021 = vld [vmem:[#allocation2 + $0xf0] sm:$0xff]
        %v3022 = vld [vmem:[#allocation2 + $0xf8] sm:$0xff]
        %v3023 = vadd.f32 %v2927, %v2928
        %3024 = vadd.xlane.f32.xlu0 %v3023
        %v3025 = vpop.xlane.xlu0 %3024
        %v3026 = vadd.f32 %v2929, %v2930
        %3027 = vadd.xlane.f32.xlu0 %v3026
        %v3028 = vpop.xlane.xlu0 %3027
        %v3029 = vadd.f32 %v2931, %v2932
        %3030 = vadd.xlane.f32.xlu0 %v3029
        %v3031 = vpop.xlane.xlu0 %3030
        %v3032 = vadd.f32 %v2933, %v2934
        %3033 = vadd.xlane.f32.xlu0 %v3032
        %v3034 = vpop.xlane.xlu0 %3033
        %v3035 = vadd.f32 %v2935, %v2936
        %3036 = vadd.xlane.f32.xlu0 %v3035
        %v3037 = vpop.xlane.xlu0 %3036
        %v3038 = vadd.f32 %v2937, %v2938
        %3039 = vadd.xlane.f32.xlu0 %v3038
        %v3040 = vpop.xlane.xlu0 %3039
        %v3041 = vadd.f32 %v2939, %v2940
        %3042 = vadd.xlane.f32.xlu0 %v3041
        %v3043 = vpop.xlane.xlu0 %3042
        %v3044 = vadd.f32 %v2941, %v2942
        %3045 = vadd.xlane.f32.xlu0 %v3044
        %v3046 = vpop.xlane.xlu0 %3045
        %v3047 = vadd.f32 %v2943, %v2944
        %3048 = vadd.xlane.f32.xlu0 %v3047
        %v3049 = vpop.xlane.xlu0 %3048
        %v3050 = vadd.f32 %v2945, %v2946
        %3051 = vadd.xlane.f32.xlu0 %v3050
        %v3052 = vpop.xlane.xlu0 %3051
        %v3053 = vadd.f32 %v2947, %v2948
        %3054 = vadd.xlane.f32.xlu0 %v3053
        %v3055 = vpop.xlane.xlu0 %3054
        %v3056 = vadd.f32 %v2949, %v2950
        %3057 = vadd.xlane.f32.xlu0 %v3056
        %v3058 = vpop.xlane.xlu0 %3057
        %v3059 = vadd.f32 %v2951, %v2952
        %3060 = vadd.xlane.f32.xlu0 %v3059
        %v3061 = vpop.xlane.xlu0 %3060
        %v3062 = vadd.f32 %v2953, %v2954
        %3063 = vadd.xlane.f32.xlu0 %v3062
        %v3064 = vpop.xlane.xlu0 %3063
        %v3065 = vadd.f32 %v2955, %v2956
        %3066 = vadd.xlane.f32.xlu0 %v3065
        %v3067 = vpop.xlane.xlu0 %3066
        %v3068 = vadd.f32 %v2957, %v2958
        %3069 = vadd.xlane.f32.xlu0 %v3068
        %v3070 = vpop.xlane.xlu0 %3069
        %v3071 = vadd.f32 %v2959, %v2960
        %3072 = vadd.xlane.f32.xlu0 %v3071
        %v3073 = vpop.xlane.xlu0 %3072
        %v3074 = vadd.f32 %v2961, %v2962
        %3075 = vadd.xlane.f32.xlu0 %v3074
        %v3076 = vpop.xlane.xlu0 %3075
        %v3077 = vadd.f32 %v2963, %v2964
        %3078 = vadd.xlane.f32.xlu0 %v3077
        %v3079 = vpop.xlane.xlu0 %3078
        %v3080 = vadd.f32 %v2965, %v2966
        %3081 = vadd.xlane.f32.xlu0 %v3080
        %v3082 = vpop.xlane.xlu0 %3081
        %v3083 = vadd.f32 %v2967, %v2968
        %3084 = vadd.xlane.f32.xlu0 %v3083
        %v3085 = vpop.xlane.xlu0 %3084
        %v3086 = vadd.f32 %v2969, %v2970
        %3087 = vadd.xlane.f32.xlu0 %v3086
        %v3088 = vpop.xlane.xlu0 %3087
        %v3089 = vadd.f32 %v2971, %v2972
        %3090 = vadd.xlane.f32.xlu0 %v3089
        %v3091 = vpop.xlane.xlu0 %3090
        %v3092 = vadd.f32 %v2973, %v2974
        %3093 = vadd.xlane.f32.xlu0 %v3092
        %v3094 = vpop.xlane.xlu0 %3093
        %v3095 = vadd.f32 %v2975, %v2976
        %3096 = vadd.xlane.f32.xlu0 %v3095
        %v3097 = vpop.xlane.xlu0 %3096
        %v3098 = vadd.f32 %v2977, %v2978
        %3099 = vadd.xlane.f32.xlu0 %v3098
        %v3100 = vpop.xlane.xlu0 %3099
        %v3101 = vadd.f32 %v2979, %v2980
        %3102 = vadd.xlane.f32.xlu0 %v3101
        %v3103 = vpop.xlane.xlu0 %3102
        %v3104 = vadd.f32 %v2981, %v2982
        %3105 = vadd.xlane.f32.xlu0 %v3104
        %v3106 = vpop.xlane.xlu0 %3105
        %v3107 = vadd.f32 %v2983, %v2984
        %3108 = vadd.xlane.f32.xlu0 %v3107
        %v3109 = vpop.xlane.xlu0 %3108
        %v3110 = vadd.f32 %v2985, %v2986
        %3111 = vadd.xlane.f32.xlu0 %v3110
        %v3112 = vpop.xlane.xlu0 %3111
        %v3113 = vadd.f32 %v2987, %v2988
        %3114 = vadd.xlane.f32.xlu0 %v3113
        %v3115 = vpop.xlane.xlu0 %3114
        %v3116 = vadd.f32 %v2989, %v2990
        %3117 = vadd.xlane.f32.xlu0 %v3116
        %v3118 = vpop.xlane.xlu0 %3117
        %v3119 = vadd.f32 %v2991, %v3025
        %v3120 = vadd.f32 %v2992, %v3028
        %v3121 = vadd.f32 %v2993, %v3031
        %v3122 = vadd.f32 %v2994, %v3034
        %v3123 = vadd.f32 %v2995, %v3037
        %v3124 = vadd.f32 %v2996, %v3040
        %v3125 = vadd.f32 %v2997, %v3043
        %v3126 = vadd.f32 %v2998, %v3046
        %v3127 = vadd.f32 %v2999, %v3049
        %v3128 = vadd.f32 %v3000, %v3052
        %v3129 = vadd.f32 %v3001, %v3055
        %v3130 = vadd.f32 %v3002, %v3058
        %v3131 = vadd.f32 %v3003, %v3061
        %v3132 = vadd.f32 %v3004, %v3064
        %v3133 = vadd.f32 %v3005, %v3067
        %v3134 = vadd.f32 %v3006, %v3070
        %v3135 = vadd.f32 %v3007, %v3073
        %v3136 = vadd.f32 %v3008, %v3076
        %v3137 = vadd.f32 %v3009, %v3079
        %v3138 = vadd.f32 %v3010, %v3082
        %v3139 = vadd.f32 %v3011, %v3085
        %v3140 = vadd.f32 %v3012, %v3088
        %v3141 = vadd.f32 %v3013, %v3091
        %v3142 = vadd.f32 %v3014, %v3094
        %v3143 = vadd.f32 %v3015, %v3097
        %v3144 = vadd.f32 %v3016, %v3100
        %v3145 = vadd.f32 %v3017, %v3103
        %v3146 = vadd.f32 %v3018, %v3106
        %v3147 = vadd.f32 %v3019, %v3109
        %v3148 = vadd.f32 %v3020, %v3112
        %v3149 = vadd.f32 %v3021, %v3115
        %v3150 = vadd.f32 %v3022, %v3118
        %vm3151 = vcmask 7168
        %3152 = vst.msk [vmem:[#allocation2] sm:$0xff] %vm3151, %v3119
        %3153 = vst.msk [vmem:[#allocation2 + $0x8] sm:$0xff] %vm3151, %v3120
        %3154 = vst.msk [vmem:[#allocation2 + $0x10] sm:$0xff] %vm3151, %v3121
        %3155 = vst.msk [vmem:[#allocation2 + $0x18] sm:$0xff] %vm3151, %v3122
        %3156 = vst.msk [vmem:[#allocation2 + $0x20] sm:$0xff] %vm3151, %v3123
        %3157 = vst.msk [vmem:[#allocation2 + $0x28] sm:$0xff] %vm3151, %v3124
        %3158 = vst.msk [vmem:[#allocation2 + $0x30] sm:$0xff] %vm3151, %v3125
        %3159 = vst.msk [vmem:[#allocation2 + $0x38] sm:$0xff] %vm3151, %v3126
        %3160 = vst.msk [vmem:[#allocation2 + $0x40] sm:$0xff] %vm3151, %v3127
        %3161 = vst.msk [vmem:[#allocation2 + $0x48] sm:$0xff] %vm3151, %v3128
        %3162 = vst.msk [vmem:[#allocation2 + $0x50] sm:$0xff] %vm3151, %v3129
        %3163 = vst.msk [vmem:[#allocation2 + $0x58] sm:$0xff] %vm3151, %v3130
        %3164 = vst.msk [vmem:[#allocation2 + $0x60] sm:$0xff] %vm3151, %v3131
        %3165 = vst.msk [vmem:[#allocation2 + $0x68] sm:$0xff] %vm3151, %v3132
        %3166 = vst.msk [vmem:[#allocation2 + $0x70] sm:$0xff] %vm3151, %v3133
        %3167 = vst.msk [vmem:[#allocation2 + $0x78] sm:$0xff] %vm3151, %v3134
        %3168 = vst.msk [vmem:[#allocation2 + $0x80] sm:$0xff] %vm3151, %v3135
        %3169 = vst.msk [vmem:[#allocation2 + $0x88] sm:$0xff] %vm3151, %v3136
        %3170 = vst.msk [vmem:[#allocation2 + $0x90] sm:$0xff] %vm3151, %v3137
        %3171 = vst.msk [vmem:[#allocation2 + $0x98] sm:$0xff] %vm3151, %v3138
        %3172 = vst.msk [vmem:[#allocation2 + $0xa0] sm:$0xff] %vm3151, %v3139
        %3173 = vst.msk [vmem:[#allocation2 + $0xa8] sm:$0xff] %vm3151, %v3140
        %3174 = vst.msk [vmem:[#allocation2 + $0xb0] sm:$0xff] %vm3151, %v3141
        %3175 = vst.msk [vmem:[#allocation2 + $0xb8] sm:$0xff] %vm3151, %v3142
        %3176 = vst.msk [vmem:[#allocation2 + $0xc0] sm:$0xff] %vm3151, %v3143
        %3177 = vst.msk [vmem:[#allocation2 + $0xc8] sm:$0xff] %vm3151, %v3144
        %3178 = vst.msk [vmem:[#allocation2 + $0xd0] sm:$0xff] %vm3151, %v3145
        %3179 = vst.msk [vmem:[#allocation2 + $0xd8] sm:$0xff] %vm3151, %v3146
        %3180 = vst.msk [vmem:[#allocation2 + $0xe0] sm:$0xff] %vm3151, %v3147
        %3181 = vst.msk [vmem:[#allocation2 + $0xe8] sm:$0xff] %vm3151, %v3148
        %3182 = vst.msk [vmem:[#allocation2 + $0xf0] sm:$0xff] %vm3151, %v3149
        %3183 = vst.msk [vmem:[#allocation2 + $0xf8] sm:$0xff] %vm3151, %v3150
        // Predicated region
        $region53: #{tpu_custom_call.1} parent=35 // pred_check
          %p3184 = pneg %p262
        $region54: #{tpu_custom_call.1} parent=35 // pred_check_branch
          %3186 = sbr.rel (%p3184) target = $region56
        $region55: #{tpu_custom_call.1} parent=35 // pred_region
          %v3187 = vld [vmem:[#allocation2] sm:$0xff]
          %v3188 = vld [vmem:[#allocation2 + $0x8] sm:$0xff]
          %v3189 = vld [vmem:[#allocation2 + $0x10] sm:$0xff]
          %v3190 = vld [vmem:[#allocation2 + $0x18] sm:$0xff]
          %v3191 = vld [vmem:[#allocation2 + $0x20] sm:$0xff]
          %v3192 = vld [vmem:[#allocation2 + $0x28] sm:$0xff]
          %v3193 = vld [vmem:[#allocation2 + $0x30] sm:$0xff]
          %v3194 = vld [vmem:[#allocation2 + $0x38] sm:$0xff]
          %v3195 = vld [vmem:[#allocation2 + $0x40] sm:$0xff]
          %v3196 = vld [vmem:[#allocation2 + $0x48] sm:$0xff]
          %v3197 = vld [vmem:[#allocation2 + $0x50] sm:$0xff]
          %v3198 = vld [vmem:[#allocation2 + $0x58] sm:$0xff]
          %v3199 = vld [vmem:[#allocation2 + $0x60] sm:$0xff]
          %v3200 = vld [vmem:[#allocation2 + $0x68] sm:$0xff]
          %v3201 = vld [vmem:[#allocation2 + $0x70] sm:$0xff]
          %v3202 = vld [vmem:[#allocation2 + $0x78] sm:$0xff]
          %v3203 = vld [vmem:[#allocation2 + $0x80] sm:$0xff]
          %v3204 = vld [vmem:[#allocation2 + $0x88] sm:$0xff]
          %v3205 = vld [vmem:[#allocation2 + $0x90] sm:$0xff]
          %v3206 = vld [vmem:[#allocation2 + $0x98] sm:$0xff]
          %v3207 = vld [vmem:[#allocation2 + $0xa0] sm:$0xff]
          %v3208 = vld [vmem:[#allocation2 + $0xa8] sm:$0xff]
          %v3209 = vld [vmem:[#allocation2 + $0xb0] sm:$0xff]
          %v3210 = vld [vmem:[#allocation2 + $0xb8] sm:$0xff]
          %v3211 = vld [vmem:[#allocation2 + $0xc0] sm:$0xff]
          %v3212 = vld [vmem:[#allocation2 + $0xc8] sm:$0xff]
          %v3213 = vld [vmem:[#allocation2 + $0xd0] sm:$0xff]
          %v3214 = vld [vmem:[#allocation2 + $0xd8] sm:$0xff]
          %v3215 = vld [vmem:[#allocation2 + $0xe0] sm:$0xff]
          %v3216 = vld [vmem:[#allocation2 + $0xe8] sm:$0xff]
          %v3217 = vld [vmem:[#allocation2 + $0xf0] sm:$0xff]
          %v3218 = vld [vmem:[#allocation2 + $0xf8] sm:$0xff]
          %v3219 = vmul.f32 %v3187, 0.00390625
          %v3220 = vmul.f32 %v3188, 0.00390625
          %v3221 = vmul.f32 %v3189, 0.00390625
          %v3222 = vmul.f32 %v3190, 0.00390625
          %v3223 = vmul.f32 %v3191, 0.00390625
          %v3224 = vmul.f32 %v3192, 0.00390625
          %v3225 = vmul.f32 %v3193, 0.00390625
          %v3226 = vmul.f32 %v3194, 0.00390625
          %v3227 = vmul.f32 %v3195, 0.00390625
          %v3228 = vmul.f32 %v3196, 0.00390625
          %v3229 = vmul.f32 %v3197, 0.00390625
          %v3230 = vmul.f32 %v3198, 0.00390625
          %v3231 = vmul.f32 %v3199, 0.00390625
          %v3232 = vmul.f32 %v3200, 0.00390625
          %v3233 = vmul.f32 %v3201, 0.00390625
          %v3234 = vmul.f32 %v3202, 0.00390625
          %v3235 = vmul.f32 %v3203, 0.00390625
          %v3236 = vmul.f32 %v3204, 0.00390625
          %v3237 = vmul.f32 %v3205, 0.00390625
          %v3238 = vmul.f32 %v3206, 0.00390625
          %v3239 = vmul.f32 %v3207, 0.00390625
          %v3240 = vmul.f32 %v3208, 0.00390625
          %v3241 = vmul.f32 %v3209, 0.00390625
          %v3242 = vmul.f32 %v3210, 0.00390625
          %v3243 = vmul.f32 %v3211, 0.00390625
          %v3244 = vmul.f32 %v3212, 0.00390625
          %v3245 = vmul.f32 %v3213, 0.00390625
          %v3246 = vmul.f32 %v3214, 0.00390625
          %v3247 = vmul.f32 %v3215, 0.00390625
          %v3248 = vmul.f32 %v3216, 0.00390625
          %v3249 = vmul.f32 %v3217, 0.00390625
          %v3250 = vmul.f32 %v3218, 0.00390625
          %v3251 = vld [vmem:[%s4] sm:$0xff]
          %v3252 = vld [vmem:[%s4 + $0x8] sm:$0xff]
          %v3253 = vld [vmem:[%s4 + $0x10] sm:$0xff]
          %v3254 = vld [vmem:[%s4 + $0x18] sm:$0xff]
          %v3255 = vld [vmem:[%s4 + $0x20] sm:$0xff]
          %v3256 = vld [vmem:[%s4 + $0x28] sm:$0xff]
          %v3257 = vld [vmem:[%s4 + $0x30] sm:$0xff]
          %v3258 = vld [vmem:[%s4 + $0x38] sm:$0xff]
          %v3259 = vld [vmem:[%s4 + $0x40] sm:$0xff]
          %v3260 = vld [vmem:[%s4 + $0x48] sm:$0xff]
          %v3261 = vld [vmem:[%s4 + $0x50] sm:$0xff]
          %v3262 = vld [vmem:[%s4 + $0x58] sm:$0xff]
          %v3263 = vld [vmem:[%s4 + $0x60] sm:$0xff]
          %v3264 = vld [vmem:[%s4 + $0x68] sm:$0xff]
          %v3265 = vld [vmem:[%s4 + $0x70] sm:$0xff]
          %v3266 = vld [vmem:[%s4 + $0x78] sm:$0xff]
          %v3267 = vld [vmem:[%s4 + $0x80] sm:$0xff]
          %v3268 = vld [vmem:[%s4 + $0x88] sm:$0xff]
          %v3269 = vld [vmem:[%s4 + $0x90] sm:$0xff]
          %v3270 = vld [vmem:[%s4 + $0x98] sm:$0xff]
          %v3271 = vld [vmem:[%s4 + $0xa0] sm:$0xff]
          %v3272 = vld [vmem:[%s4 + $0xa8] sm:$0xff]
          %v3273 = vld [vmem:[%s4 + $0xb0] sm:$0xff]
          %v3274 = vld [vmem:[%s4 + $0xb8] sm:$0xff]
          %v3275 = vld [vmem:[%s4 + $0xc0] sm:$0xff]
          %v3276 = vld [vmem:[%s4 + $0xc8] sm:$0xff]
          %v3277 = vld [vmem:[%s4 + $0xd0] sm:$0xff]
          %v3278 = vld [vmem:[%s4 + $0xd8] sm:$0xff]
          %v3279 = vld [vmem:[%s4 + $0xe0] sm:$0xff]
          %v3280 = vld [vmem:[%s4 + $0xe8] sm:$0xff]
          %v3281 = vld [vmem:[%s4 + $0xf0] sm:$0xff]
          %v3282 = vld [vmem:[%s4 + $0xf8] sm:$0xff]
          %v3283 = vmul.f32 %v3251, %v3219
          %v3284 = vmul.f32 %v3252, %v3220
          %v3285 = vmul.f32 %v3253, %v3221
          %v3286 = vmul.f32 %v3254, %v3222
          %v3287 = vmul.f32 %v3255, %v3223
          %v3288 = vmul.f32 %v3256, %v3224
          %v3289 = vmul.f32 %v3257, %v3225
          %v3290 = vmul.f32 %v3258, %v3226
          %v3291 = vmul.f32 %v3259, %v3227
          %v3292 = vmul.f32 %v3260, %v3228
          %v3293 = vmul.f32 %v3261, %v3229
          %v3294 = vmul.f32 %v3262, %v3230
          %v3295 = vmul.f32 %v3263, %v3231
          %v3296 = vmul.f32 %v3264, %v3232
          %v3297 = vmul.f32 %v3265, %v3233
          %v3298 = vmul.f32 %v3266, %v3234
          %v3299 = vmul.f32 %v3267, %v3235
          %v3300 = vmul.f32 %v3268, %v3236
          %v3301 = vmul.f32 %v3269, %v3237
          %v3302 = vmul.f32 %v3270, %v3238
          %v3303 = vmul.f32 %v3271, %v3239
          %v3304 = vmul.f32 %v3272, %v3240
          %v3305 = vmul.f32 %v3273, %v3241
          %v3306 = vmul.f32 %v3274, %v3242
          %v3307 = vmul.f32 %v3275, %v3243
          %v3308 = vmul.f32 %v3276, %v3244
          %v3309 = vmul.f32 %v3277, %v3245
          %v3310 = vmul.f32 %v3278, %v3246
          %v3311 = vmul.f32 %v3279, %v3247
          %v3312 = vmul.f32 %v3280, %v3248
          %v3313 = vmul.f32 %v3281, %v3249
          %v3314 = vmul.f32 %v3282, %v3250
          %v3315 = vsel %vm3151, %v3283, 0.0
          %v3316 = vsel %vm3151, %v3284, 0.0
          %v3317 = vadd.f32 %v3315, %v3316
          %v3318 = vsel %vm3151, %v3285, 0.0
          %v3319 = vadd.f32 %v3317, %v3318
          %v3320 = vsel %vm3151, %v3286, 0.0
          %v3321 = vadd.f32 %v3319, %v3320
          %v3322 = vsel %vm3151, %v3287, 0.0
          %v3323 = vadd.f32 %v3321, %v3322
          %v3324 = vsel %vm3151, %v3288, 0.0
          %v3325 = vadd.f32 %v3323, %v3324
          %v3326 = vsel %vm3151, %v3289, 0.0
          %v3327 = vadd.f32 %v3325, %v3326
          %v3328 = vsel %vm3151, %v3290, 0.0
          %v3329 = vadd.f32 %v3327, %v3328
          %v3330 = vsel %vm3151, %v3291, 0.0
          %v3331 = vadd.f32 %v3329, %v3330
          %v3332 = vsel %vm3151, %v3292, 0.0
          %v3333 = vadd.f32 %v3331, %v3332
          %v3334 = vsel %vm3151, %v3293, 0.0
          %v3335 = vadd.f32 %v3333, %v3334
          %v3336 = vsel %vm3151, %v3294, 0.0
          %v3337 = vadd.f32 %v3335, %v3336
          %v3338 = vsel %vm3151, %v3295, 0.0
          %v3339 = vadd.f32 %v3337, %v3338
          %v3340 = vsel %vm3151, %v3296, 0.0
          %v3341 = vadd.f32 %v3339, %v3340
          %v3342 = vsel %vm3151, %v3297, 0.0
          %v3343 = vadd.f32 %v3341, %v3342
          %v3344 = vsel %vm3151, %v3298, 0.0
          %v3345 = vadd.f32 %v3343, %v3344
          %v3346 = vsel %vm3151, %v3299, 0.0
          %v3347 = vadd.f32 %v3345, %v3346
          %v3348 = vsel %vm3151, %v3300, 0.0
          %v3349 = vadd.f32 %v3347, %v3348
          %v3350 = vsel %vm3151, %v3301, 0.0
          %v3351 = vadd.f32 %v3349, %v3350
          %v3352 = vsel %vm3151, %v3302, 0.0
          %v3353 = vadd.f32 %v3351, %v3352
          %v3354 = vsel %vm3151, %v3303, 0.0
          %v3355 = vadd.f32 %v3353, %v3354
          %v3356 = vsel %vm3151, %v3304, 0.0
          %v3357 = vadd.f32 %v3355, %v3356
          %v3358 = vsel %vm3151, %v3305, 0.0
          %v3359 = vadd.f32 %v3357, %v3358
          %v3360 = vsel %vm3151, %v3306, 0.0
          %v3361 = vadd.f32 %v3359, %v3360
          %v3362 = vsel %vm3151, %v3307, 0.0
          %v3363 = vadd.f32 %v3361, %v3362
          %v3364 = vsel %vm3151, %v3308, 0.0
          %v3365 = vadd.f32 %v3363, %v3364
          %v3366 = vsel %vm3151, %v3309, 0.0
          %v3367 = vadd.f32 %v3365, %v3366
          %v3368 = vsel %vm3151, %v3310, 0.0
          %v3369 = vadd.f32 %v3367, %v3368
          %v3370 = vsel %vm3151, %v3311, 0.0
          %v3371 = vadd.f32 %v3369, %v3370
          %v3372 = vsel %vm3151, %v3312, 0.0
          %v3373 = vadd.f32 %v3371, %v3372
          %v3374 = vsel %vm3151, %v3313, 0.0
          %v3375 = vadd.f32 %v3373, %v3374
          %v3376 = vsel %vm3151, %v3314, 0.0
          %v3377 = vadd.f32 %v3375, %v3376
          %3378 = vadd.xlane.f32.xlu0 %v3377
          %v3379 = vpop.xlane.xlu0 %3378
          %v3380 = vrot.slane %v3379, 4
          %v3381 = vadd.f32 %v3379, %v3380
          %v3382 = vrot.slane %v3381, 2
          %v3383 = vadd.f32 %v3381, %v3382
          %v3384 = vrot.slane %v3383, 1
          %v3385 = vadd.f32 %v3383, %v3384
          %s3386 = vtos %v3385
          %v3387 = vstv %s3386
          %s3388 = sld [smem:[#allocation4]]
          %s3389 = scvt.s32.f32 %s3388
          %v3390 = vxor.u32 %v3387, 2147483648
          %v3391 = vmul.f32 %v3390, 1.442695
          %v3392 = vpow.pop %v3391
          %v3393 = vadd.f32 %v3392, 1.0
          %v3394 = vrcp.pop %v3393
          %v3395 = vmul.f32 1.0, %v3394
          %v3396 = vmax.f32 %v3387, 0.0
          %v3397 = vstv %s3389
          %v3398 = vmul.f32 %v3387, %v3397
          %v3399 = vsub.f32 %v3396, %v3398
          %v3400 = vand.u32 2147483647, %v3387
          %v3401 = vsub.f32 0.0, %v3400
          %v3402 = vmul.f32 %v3401, 1.442695
          %v3403 = vpow.pop %v3402
          %v3404 = vadd.f32 %v3403, 1.0
          %v3405 = vlog2.pop %v3404
          %v3406 = vmul.f32 %v3405, 0.6931472
          %v3407 = vmul.f32 -0.5, %v3403
          %v3408 = vadd.f32 %v3407, 1.0
          %v3409 = vmul.f32 %v3408, %v3403
          %v3410 = vand.u32 2147483647, %v3403
          %vm3411 = vcmp.lt.f32.partialorder %v3410, 0.0004427343
          %v3412 = vsel %vm3411, %v3409, %v3406
          %v3413 = vadd.f32 %v3399, %v3412
          %v3414 = vmul.f32 %v3395, %v3397
          %v3415 = vsub.f32 1.0, %v3395
          %s3416 = ssub.f32 1.0, %s3389
          %v3417 = vstv %s3416
          %v3418 = vmul.f32 %v3415, %v3417
          %v3419 = vadd.f32 %v3414, %v3418
          %s3420 = smul.f32 %s3389, 0.25
          %s3421 = smul.f32 %s3416, 0.75
          %s3422 = sadd.f32 %s3420, %s3421
          %v3423 = vsub.f32 1.0, %v3419
          %v3424 = vstv %s3422
          %v3425 = vmul.f32 %v3424, %v3413
          %v3426 = vmul.f32 %v3425, %v3423
          %v3427 = vmul.f32 %v3426, %v3423
          %vm3428 = vcmask 0
          %3429 = vst.msk [vmem:[%s261] sm:$0x1] %vm3428, %v3427
        $region56: #{tpu_custom_call.1} parent=35 // pred_fallthru
          _
        %p3430 = scmp.lt.s32.totalorder %s25, 1
        %s3431 = scalar_select %p3430, %s25, 1
        %s3432 = scalar_lea.vmem %s5, %s3431
        // Predicated region
        $region57: #{tpu_custom_call.1} parent=35 // pred_check
          %p3433 = pneg %p142
        $region58: #{tpu_custom_call.1} parent=35 // pred_check_branch
          %3435 = sbr.rel (%p3433) target = $region60
        $region59: #{tpu_custom_call.1} parent=35 // pred_region
          _
        $region60: #{tpu_custom_call.1} parent=35 // pred_fallthru
          _
      $region36: #{tpu_custom_call.1} parent=5 // pred_fallthru
        _
      %p3436 = scmp.le.s32.totalorder 2, %s16
      // Predicated region
      $region61: #{tpu_custom_call.1} parent=5 // pred_check
        %p3437 = pneg %p3436
      $region62: #{tpu_custom_call.1} parent=5 // pred_check_branch
        %3439 = sbr.rel (%p3437) target = $region64
      $region63: #{tpu_custom_call.1} parent=5 // pred_region
        %s3440 = ssub.s32 %s16, 2
        // Predicated region
        $region65: #{tpu_custom_call.1} parent=63 // pred_check
          %p3441 = pneg %p148
        $region66: #{tpu_custom_call.1} parent=63 // pred_check_branch
          %3443 = sbr.rel (%p3441) target = $region68
        $region67: #{tpu_custom_call.1} parent=63 // pred_region
          %p3444 = scmp.lt.s32.totalorder %s27, 1
          %s3445 = scalar_select %p3444, %s27, 1
          %s3446 = scalar_lea.vmem %s5, %s3445
        $region68: #{tpu_custom_call.1} parent=63 // pred_fallthru
          _
      $region64: #{tpu_custom_call.1} parent=5 // pred_fallthru
        _
    $region6: #{tpu_custom_call.1} parent=1 // loop_footer
      %s20 = sadd.s32 1, %s16
    $region7: #{tpu_custom_call.1} parent=1 // loop_footer_branch
      %15 = sbr.rel target = $region3
    $region8: #{tpu_custom_call.1} parent=1 // loop_exit
      _
    %3447 = vsyncpa [#allocation6], 1
    %s3448 = scalar_lea.sflag [#allocation6], 1
    %3449 = vsyncpa %s3448, 1
    %3450 = vsyncpa [#allocation8], 1

</llo_original>
